<compile_context>
chip_gen: v7x
topology: tpu7x:2x2x1
jax: 0.10.0
libtpu: 0.0.40
codegen_flags: <defaults>
</compile_context>

<pallas_src>
import jax
import jax.numpy as jnp
import numpy as np
from jax.experimental import pallas as pl
from jax.experimental.pallas import tpu as pltpu


def _round_up(x, m):
    return ((x + m - 1) // m) * m


# ----------------------------------------------------------------------------
# Fused Pallas kernel: all LSTM layers/directions + classification head
# ----------------------------------------------------------------------------
def make_fused_lstm_kernel(T, B_pad, H_pad, num_layers, num_dir, chunk_T, n_seq):
    """Kernel closed over static config.

    Ref order:
      inputs : x (T*B_pad, F) bf16,
               per (layer, dir): wih^T (in_pad, 4H_pad) bf16,
                                 whh^T (H_pad, 4H_pad) bf16, b (1, 4H_pad) f32,
               head: w1^T (H_pad, 128) bf16, b1 (1,128) f32,
                     w2^T (128, C_pad) bf16, b2 (1, C_pad) f32
      outputs: out (B_pad, C_pad), h_n (L*D, B_pad, H_pad), c_n (L*D, B_pad, H_pad)
      scratch: n_seq x seq (T, B_pad, D*H_pad) f32  -- ping-pong inter-layer seq
               xproj (chunk_T*B_pad, 4H_pad) f32     -- per-chunk input projection
    """
    n_lstm_refs = num_layers * num_dir * 3

    def kernel(*refs):
        x_ref = refs[0]
        lstm_refs = refs[1:1 + n_lstm_refs]
        w1_ref, b1_ref, w2_ref, b2_ref = refs[1 + n_lstm_refs:5 + n_lstm_refs]
        out_ref, hn_ref, cn_ref = refs[5 + n_lstm_refs:8 + n_lstm_refs]
        seq_refs = refs[8 + n_lstm_refs:8 + n_lstm_refs + n_seq]
        xproj_ref = refs[8 + n_lstm_refs + n_seq]

        # Static chunk schedule (shared by all layers/directions).
        chunks = [(s, min(chunk_T, T - s)) for s in range(0, T, chunk_T)]

        h_last = None
        widx = 0
        for l in range(num_layers):
            in_seq = None if l == 0 else seq_refs[(l - 1) % n_seq]
            out_seq = seq_refs[l % n_seq] if l < num_layers - 1 else None
            in_dim = None if l == 0 else num_dir * H_pad

            for d in range(num_dir):
                wih = lstm_refs[widx][...]        # (in_pad, 4H_pad) bf16
                whh = lstm_refs[widx + 1][...]    # (H_pad, 4H_pad) bf16
                bias = lstm_refs[widx + 2][...]   # (1, 4H_pad) f32
                widx += 3

                h = jnp.zeros((B_pad, H_pad), jnp.float32)
                c = jnp.zeros((B_pad, H_pad), jnp.float32)

                # Reverse direction walks chunks (and time within them) backwards.
                order = chunks if d == 0 else chunks[::-1]
                for (start, c_sz) in order:
                    rows = c_sz * B_pad

                    # Hoisted input projection for this time chunk: one bf16
                    # MXU matmul over c_sz*B_pad rows, outside the recurrence.
                    if l == 0:
                        chunk_in = x_ref[start * B_pad:(start + c_sz) * B_pad, :]
                    else:
                        chunk_in = in_seq[start:start + c_sz].reshape(
                            rows, in_dim).astype(jnp.bfloat16)
                    xproj_ref[0:rows, :] = (
                        jnp.dot(chunk_in, wih,
                                preferred_element_type=jnp.float32) + bias)

                    def step(i, carry):
                        h, c = carry
                        t_loc = i if d == 0 else (c_sz - 1 - i)
                        row = pl.multiple_of(t_loc * B_pad, B_pad)
                        g = xproj_ref[pl.ds(row, B_pad), :] + jnp.dot(
                            h.astype(jnp.bfloat16), whh,
                            preferred_element_type=jnp.float32)  # (B_pad, 4H_pad)
                        # Per-gate activations: 4*H_pad transcendental lanes
                        # per step (EUP on the serial path), gate order i,f,g,o.
                        if_s = jax.nn.sigmoid(g[:, 0:2 * H_pad])
                        g_t = jnp.tanh(g[:, 2 * H_pad:3 * H_pad])
                        o_s = jax.nn.sigmoid(g[:, 3 * H_pad:4 * H_pad])
                        c_new = (if_s[:, H_pad:2 * H_pad] * c
                                 + if_s[:, 0:H_pad] * g_t)
                        h_new = o_s * jnp.tanh(c_new)
                        if out_seq is not None:
                            # Tile-aligned full-slab store for the next layer.
                            out_seq[start + t_loc, :,
                                    d * H_pad:(d + 1) * H_pad] = h_new
                        return h_new, c_new

                    h, c = jax.lax.fori_loop(0, c_sz, step, (h, c),
                                             unroll=min(8, c_sz))

                sidx = l * num_dir + d
                hn_ref[sidx] = h
                cn_ref[sidx] = c
                h_last = h      # == h_n[-1] after the last (layer, dir)

        # Head: ReLU -> Linear(H,128) -> ReLU -> Linear(128,C) on h_n[-1].
        z = jnp.maximum(h_last, 0.0).astype(jnp.bfloat16)
        z = jnp.dot(z, w1_ref[...], preferred_element_type=jnp.float32) + b1_ref[...]
        z = jnp.maximum(z, 0.0).astype(jnp.bfloat16)
        out_ref[...] = (jnp.dot(z, w2_ref[...],
                                preferred_element_type=jnp.float32) + b2_ref[...])

    return kernel


# ----------------------------------------------------------------------------
# Wrapper: pack/pad params, call the fused kernel, slice padded outputs
# ----------------------------------------------------------------------------
def lstm_model_forward(x_btf, lstm_params, head_params, bidirectional):
    """Reproduces LSTM.forward (eval mode): returns (out, h_n, c_n)."""
    x_btf = jnp.asarray(x_btf, jnp.float32)
    B, T, F = x_btf.shape
    num_layers = len(lstm_params)
    num_dir = 2 if bidirectional else 1
    H = lstm_params[0][0][1].shape[1]            # w_hh: (4H, H)
    w1, b1, w2, b2 = head_params
    C = w2.shape[0]
    HEAD = w1.shape[0]                           # 128

    B_pad = _round_up(B, 8)
    H_pad = _round_up(H, 128)
    C_pad = _round_up(C, 128)
    chunk_T = min(T, 64)
    n_seq = min(2, max(num_layers - 1, 0))

    # Time-major, batch padded to a full sublane group, bf16 for the MXU.
    x_tbf = jnp.transpose(x_btf, (1, 0, 2))                        # (T, B, F)
    x_pad = jnp.zeros((T, B_pad, F), jnp.float32).at[:, :B, :].set(x_tbf)
    x2d = x_pad.reshape(T * B_pad, F).astype(jnp.bfloat16)

    inputs = [x2d]
    for l, layer_p in enumerate(lstm_params):
        for (w_ih, w_hh, b_ih, b_hh) in layer_p:
            w_ih = jnp.asarray(w_ih, jnp.float32)
            w_hh = jnp.asarray(w_hh, jnp.float32)
            b = jnp.asarray(b_ih, jnp.float32) + jnp.asarray(b_hh, jnp.float32)
            if l == 0:
                in_blocks = [(0, 0, F)]                 # (src_off, dst_off, size)
                in_dim_pad = F
            else:
                in_blocks = [(dd * H, dd * H_pad, H) for dd in range(num_dir)]
                in_dim_pad = num_dir * H_pad
            wiT, whT = w_ih.T, w_hh.T                   # (in, 4H), (H, 4H)
            wih_pad = jnp.zeros((in_dim_pad, 4 * H_pad), jnp.float32)
            whh_pad = jnp.zeros((H_pad, 4 * H_pad), jnp.float32)
            b_pad = jnp.zeros((1, 4 * H_pad), jnp.float32)
            for k in range(4):                          # gates i, f, g, o
                for (src, dst, size) in in_blocks:
                    wih_pad = wih_pad.at[dst:dst + size,
                                         k * H_pad:k * H_pad + H].set(
                        wiT[src:src + size, k * H:(k + 1) * H])
                whh_pad = whh_pad.at[:H, k * H_pad:k * H_pad + H].set(
                    whT[:, k * H:(k + 1) * H])
                b_pad = b_pad.at[0, k * H_pad:k * H_pad + H].set(
                    b[k * H:(k + 1) * H])
            inputs += [wih_pad.astype(jnp.bfloat16),
                       whh_pad.astype(jnp.bfloat16), b_pad]

    w1p = (jnp.zeros((H_pad, HEAD), jnp.float32)
           .at[:H, :].set(jnp.asarray(w1, jnp.float32).T)).astype(jnp.bfloat16)
    b1p = jnp.asarray(b1, jnp.float32).reshape(1, HEAD)
    w2p = (jnp.zeros((HEAD, C_pad), jnp.float32)
           .at[:, :C].set(jnp.asarray(w2, jnp.float32).T)).astype(jnp.bfloat16)
    b2p = jnp.zeros((1, C_pad), jnp.float32).at[0, :C].set(
        jnp.asarray(b2, jnp.float32))
    inputs += [w1p, b1p, w2p, b2p]
    # TODO(synk): inter-layer dropout (p=0.2) skipped — nn.LSTM dropout is a
    # no-op in eval mode; training-mode outputs will not match.

    kernel = make_fused_lstm_kernel(T, B_pad, H_pad, num_layers, num_dir,
                                    chunk_T, n_seq)

    scratch = [pltpu.VMEM((T, B_pad, num_dir * H_pad), jnp.float32)
               for _ in range(n_seq)]
    scratch += [pltpu.VMEM((chunk_T * B_pad, 4 * H_pad), jnp.float32)]

    out_p, hn_p, cn_p = pl.pallas_call(
        kernel,
        out_shape=(
            jax.ShapeDtypeStruct((B_pad, C_pad), jnp.float32),
            jax.ShapeDtypeStruct((num_layers * num_dir, B_pad, H_pad), jnp.float32),
            jax.ShapeDtypeStruct((num_layers * num_dir, B_pad, H_pad), jnp.float32),
        ),
        scratch_shapes=scratch,
        compiler_params=pltpu.CompilerParams(vmem_limit_bytes=64 * 1024 * 1024),
    )(*inputs)

    return out_p[:B, :C], hn_p[:, :B, :H], cn_p[:, :B, :H]


# ----------------------------------------------------------------------------
# Pure-JAX f32 reference (same math as nn.LSTM + head, eval mode)
# ----------------------------------------------------------------------------
def reference_forward(x_btf, lstm_params, head_params, bidirectional):
    x = jnp.asarray(x_btf, jnp.float32)
    B, T, F = x.shape
    H = lstm_params[0][0][1].shape[1]
    layer_in = jnp.transpose(x, (1, 0, 2))       # (T, B, F)
    hs_n, cs_n = [], []
    for layer_p in lstm_params:
        dir_outs = []
        for d, (w_ih, w_hh, b_ih, b_hh) in enumerate(layer_p):
            w_ih = jnp.asarray(w_ih, jnp.float32)
            w_hh = jnp.asarray(w_hh, jnp.float32)
            b = jnp.asarray(b_ih, jnp.float32) + jnp.asarray(b_hh, jnp.float32)
            h = jnp.zeros((B, H), jnp.float32)
            c = jnp.zeros((B, H), jnp.float32)
            outs = [None] * T
            t_order = range(T) if d == 0 else range(T - 1, -1, -1)
            for t in t_order:
                g = layer_in[t] @ w_ih.T + h @ w_hh.T + b
                i_g = jax.nn.sigmoid(g[:, 0:H])
                f_g = jax.nn.sigmoid(g[:, H:2 * H])
                g_g = jnp.tanh(g[:, 2 * H:3 * H])
                o_g = jax.nn.sigmoid(g[:, 3 * H:4 * H])
                c = f_g * c + i_g * g_g
                h = o_g * jnp.tanh(c)
                outs[t] = h
            dir_outs.append(jnp.stack(outs, axis=0))
            hs_n.append(h)
            cs_n.append(c)
        layer_in = jnp.concatenate(dir_outs, axis=-1)
    h_n = jnp.stack(hs_n, axis=0)
    c_n = jnp.stack(cs_n, axis=0)
    w1, b1, w2, b2 = head_params
    z = jnp.maximum(h_n[-1], 0.0)
    z = z @ jnp.asarray(w1, jnp.float32).T + jnp.asarray(b1, jnp.float32)
    z = jnp.maximum(z, 0.0)
    out = z @ jnp.asarray(w2, jnp.float32).T + jnp.asarray(b2, jnp.float32)
    return out, h_n, c_n


# ----------------------------------------------------------------------------
# Deterministic parameter initialization (PyTorch-style uniform init)
# ----------------------------------------------------------------------------
def init_params(key, n_features, num_classes, hidden_dim, n_layers, bidirectional):
    num_dir = 2 if bidirectional else 1
    bound = 1.0 / np.sqrt(hidden_dim)

    lstm_params = []
    for layer in range(n_layers):
        in_dim = n_features if layer == 0 else hidden_dim * num_dir
        dir_params = []
        for _d in range(num_dir):
            key, k1, k2, k3, k4 = jax.random.split(key, 5)
            w_ih = jax.random.uniform(k1, (4 * hidden_dim, in_dim),
                                      minval=-bound, maxval=bound)
            w_hh = jax.random.uniform(k2, (4 * hidden_dim, hidden_dim),
                                      minval=-bound, maxval=bound)
            b_ih = jax.random.uniform(k3, (4 * hidden_dim,),
                                      minval=-bound, maxval=bound)
            b_hh = jax.random.uniform(k4, (4 * hidden_dim,),
                                      minval=-bound, maxval=bound)
            dir_params.append((w_ih, w_hh, b_ih, b_hh))
        lstm_params.append(dir_params)

    key, k1, k2, k3, k4 = jax.random.split(key, 5)
    b1_bound = 1.0 / np.sqrt(hidden_dim)
    b2_bound = 1.0 / np.sqrt(128)
    w1 = jax.random.uniform(k1, (128, hidden_dim), minval=-b1_bound, maxval=b1_bound)
    b1 = jax.random.uniform(k2, (128,), minval=-b1_bound, maxval=b1_bound)
    w2 = jax.random.uniform(k3, (num_classes, 128), minval=-b2_bound, maxval=b2_bound)
    b2 = jax.random.uniform(k4, (num_classes,), minval=-b2_bound, maxval=b2_bound)
    head_params = (w1, b1, w2, b2)

    return lstm_params, head_params, key


# ----------------------------------------------------------------------------
if __name__ == "__main__":
    B, T = 2, 8
    n_features = 16
    hidden_dim = 32
    num_classes = 10
    n_layers = 2

    key = jax.random.PRNGKey(0)
    for bidirectional in (False, True):
        lstm_params, head_params, key = init_params(
            key, n_features, num_classes, hidden_dim, n_layers, bidirectional)
        key, xk = jax.random.split(key)
        x = jax.random.normal(xk, (B, T, n_features), dtype=jnp.float32)

        out, h_n, c_n = lstm_model_forward(x, lstm_params, head_params, bidirectional)
        jax.block_until_ready((out, h_n, c_n))

        num_dir = 2 if bidirectional else 1
        assert out.shape == (B, num_classes)
        assert h_n.shape == (n_layers * num_dir, B, hidden_dim)
        assert c_n.shape == (n_layers * num_dir, B, hidden_dim)
        assert jnp.all(jnp.isfinite(out))
        assert jnp.all(jnp.isfinite(h_n))
        assert jnp.all(jnp.isfinite(c_n))

        # Loose-tolerance check vs. f32 reference (kernel matmuls are bf16).
        ref_out, ref_hn, ref_cn = reference_forward(
            x, lstm_params, head_params, bidirectional)
        assert jnp.allclose(out, ref_out, atol=1e-1, rtol=1e-1)
        assert jnp.allclose(h_n, ref_hn, atol=1e-1, rtol=1e-1)
        assert jnp.allclose(c_n, ref_cn, atol=1e-1, rtol=1e-1)

    print("KERNEL_OK")
</pallas_src>

<mosaic_0001>
module attributes {stable_mosaic.version = 11 : i64} {
  func.func @kernel(%arg0: memref<64x16xbf16, #tpu.memory_space<vmem>>, %arg1: memref<16x512xbf16, #tpu.memory_space<vmem>>, %arg2: memref<128x512xbf16, #tpu.memory_space<vmem>>, %arg3: memref<1x512xf32, #tpu.memory_space<vmem>>, %arg4: memref<128x512xbf16, #tpu.memory_space<vmem>>, %arg5: memref<128x512xbf16, #tpu.memory_space<vmem>>, %arg6: memref<1x512xf32, #tpu.memory_space<vmem>>, %arg7: memref<128x128xbf16, #tpu.memory_space<vmem>>, %arg8: memref<1x128xf32, #tpu.memory_space<vmem>>, %arg9: memref<128x128xbf16, #tpu.memory_space<vmem>>, %arg10: memref<1x128xf32, #tpu.memory_space<vmem>>, %arg11: memref<8x128xf32, #tpu.memory_space<vmem>>, %arg12: memref<2x8x128xf32, #tpu.memory_space<vmem>>, %arg13: memref<2x8x128xf32, #tpu.memory_space<vmem>>, %arg14: memref<8x8x128xf32, #tpu.memory_space<vmem>>, %arg15: memref<64x512xf32, #tpu.memory_space<vmem>>) attributes {dimension_semantics = [], scalar_prefetch = 0 : i64, scratch_operands = 2 : i64, tpu.core_type = #tpu.core_type<tc>} {
    %c0 = arith.constant 0 : index
    %c0_0 = arith.constant 0 : index
    %0 = vector.load %arg1[%c0, %c0_0] : memref<16x512xbf16, #tpu.memory_space<vmem>>, vector<16x512xbf16>
    %c0_1 = arith.constant 0 : index
    %c0_2 = arith.constant 0 : index
    %1 = vector.load %arg2[%c0_1, %c0_2] : memref<128x512xbf16, #tpu.memory_space<vmem>>, vector<128x512xbf16>
    %c0_3 = arith.constant 0 : index
    %c0_4 = arith.constant 0 : index
    %2 = vector.load %arg3[%c0_3, %c0_4] : memref<1x512xf32, #tpu.memory_space<vmem>>, vector<1x512xf32>
    %cst = arith.constant 0.000000e+00 : f32
    %3 = vector.broadcast %cst : f32 to vector<8x128xf32>
    %cst_5 = arith.constant 0.000000e+00 : f32
    %4 = vector.broadcast %cst_5 : f32 to vector<8x128xf32>
    %c0_6 = arith.constant 0 : index
    %c0_7 = arith.constant 0 : index
    %5 = vector.load %arg0[%c0_6, %c0_7] : memref<64x16xbf16, #tpu.memory_space<vmem>>, vector<64x16xbf16>
    %cst_8 = arith.constant dense<0.000000e+00> : vector<64x512xf32>
    %6 = tpu.matmul %5, %0, %cst_8 {dimension_numbers = #tpu.dot_dimension_numbers<[1], [0], [0], [1], [0, 0, 1, 1], [], []>} : vector<64x16xbf16>, vector<16x512xbf16>, vector<64x512xf32> -> vector<64x512xf32>
    %7 = vector.broadcast %2 : vector<1x512xf32> to vector<64x512xf32>
    %8 = arith.addf %6, %7 : vector<64x512xf32>
    %c0_9 = arith.constant 0 : index
    %c0_10 = arith.constant 0 : index
    %9 = vector.load %arg15[%c0_9, %c0_10] : memref<64x512xf32, #tpu.memory_space<vmem>>, vector<64x512xf32>
    tpu.vector_store %arg15[%c0_9, %c0_10], %8 {strides = array<i32>} : memref<64x512xf32, #tpu.memory_space<vmem>>, vector<64x512xf32>,
    %c0_i32 = arith.constant 0 : i32
    %c8_i32 = arith.constant 8 : i32
    %10 = arith.muli %c0_i32, %c8_i32 : i32
    %11 = tpu.assume_multiple %10, 8 : i32
    %12 = arith.index_cast %11 : i32 to index
    %c0_11 = arith.constant 0 : index
    %13 = vector.load %arg15[%12, %c0_11] : memref<64x512xf32, #tpu.memory_space<vmem>>, vector<8x512xf32>
    %14 = arith.truncf %3 : vector<8x128xf32> to vector<8x128xbf16>
    %cst_12 = arith.constant dense<0.000000e+00> : vector<8x512xf32>
    %15 = tpu.matmul %14, %1, %cst_12 {dimension_numbers = #tpu.dot_dimension_numbers<[1], [0], [0], [1], [0, 0, 1, 1], [], []>} : vector<8x128xbf16>, vector<128x512xbf16>, vector<8x512xf32> -> vector<8x512xf32>
    %16 = arith.addf %13, %15 : vector<8x512xf32>
    %17 = vector.extract_strided_slice %16 {offsets = [0, 0], sizes = [8, 256], strides = [1, 1]} : vector<8x512xf32> to vector<8x256xf32>
    %18 = arith.negf %17 : vector<8x256xf32>
    %19 = math.exp %18 : vector<8x256xf32>
    %cst_13 = arith.constant 1.000000e+00 : f32
    %20 = vector.broadcast %cst_13 : f32 to vector<8x256xf32>
    %21 = arith.addf %20, %19 : vector<8x256xf32>
    %22 = arith.divf %20, %21 : vector<8x256xf32>
    %23 = vector.extract_strided_slice %16 {offsets = [0, 256], sizes = [8, 128], strides = [1, 1]} : vector<8x512xf32> to vector<8x128xf32>
    %24 = math.tanh %23 : vector<8x128xf32>
    %25 = vector.extract_strided_slice %16 {offsets = [0, 384], sizes = [8, 128], strides = [1, 1]} : vector<8x512xf32> to vector<8x128xf32>
    %26 = arith.negf %25 : vector<8x128xf32>
    %27 = math.exp %26 : vector<8x128xf32>
    %cst_14 = arith.constant 1.000000e+00 : f32
    %28 = vector.broadcast %cst_14 : f32 to vector<8x128xf32>
    %29 = arith.addf %28, %27 : vector<8x128xf32>
    %30 = arith.divf %28, %29 : vector<8x128xf32>
    %31 = vector.extract_strided_slice %22 {offsets = [0, 128], sizes = [8, 128], strides = [1, 1]} : vector<8x256xf32> to vector<8x128xf32>
    %32 = arith.mulf %31, %4 : vector<8x128xf32>
    %33 = vector.extract_strided_slice %22 {offsets = [0, 0], sizes = [8, 128], strides = [1, 1]} : vector<8x256xf32> to vector<8x128xf32>
    %34 = arith.mulf %33, %24 : vector<8x128xf32>
    %35 = arith.addf %32, %34 : vector<8x128xf32>
    %36 = math.tanh %35 : vector<8x128xf32>
    %37 = arith.mulf %30, %36 : vector<8x128xf32>
    %c0_i32_15 = arith.constant 0 : i32
    %38 = arith.addi %c0_i32_15, %c0_i32 : i32
    %39 = arith.index_cast %38 : i32 to index
    %c0_16 = arith.constant 0 : index
    %c0_17 = arith.constant 0 : index
    %40 = vector.load %arg14[%39, %c0_16, %c0_17] : memref<8x8x128xf32, #tpu.memory_space<vmem>>, vector<1x8x128xf32>
    %41 = vector.shape_cast %40 : vector<1x8x128xf32> to vector<8x128xf32>
    %42 = vector.shape_cast %37 : vector<8x128xf32> to vector<1x8x128xf32>
    tpu.vector_store %arg14[%39, %c0_16, %c0_17], %42 {strides = array<i32>} : memref<8x8x128xf32, #tpu.memory_space<vmem>>, vector<1x8x128xf32>,
    %c1_i32 = arith.constant 1 : i32
    %c8_i32_18 = arith.constant 8 : i32
    %43 = arith.muli %c1_i32, %c8_i32_18 : i32
    %44 = tpu.assume_multiple %43, 8 : i32
    %45 = arith.index_cast %44 : i32 to index
    %c0_19 = arith.constant 0 : index
    %46 = vector.load %arg15[%45, %c0_19] : memref<64x512xf32, #tpu.memory_space<vmem>>, vector<8x512xf32>
    %47 = arith.truncf %37 : vector<8x128xf32> to vector<8x128xbf16>
    %cst_20 = arith.constant dense<0.000000e+00> : vector<8x512xf32>
    %48 = tpu.matmul %47, %1, %cst_20 {dimension_numbers = #tpu.dot_dimension_numbers<[1], [0], [0], [1], [0, 0, 1, 1], [], []>} : vector<8x128xbf16>, vector<128x512xbf16>, vector<8x512xf32> -> vector<8x512xf32>
    %49 = arith.addf %46, %48 : vector<8x512xf32>
    %50 = vector.extract_strided_slice %49 {offsets = [0, 0], sizes = [8, 256], strides = [1, 1]} : vector<8x512xf32> to vector<8x256xf32>
    %51 = arith.negf %50 : vector<8x256xf32>
    %52 = math.exp %51 : vector<8x256xf32>
    %cst_21 = arith.constant 1.000000e+00 : f32
    %53 = vector.broadcast %cst_21 : f32 to vector<8x256xf32>
    %54 = arith.addf %53, %52 : vector<8x256xf32>
    %55 = arith.divf %53, %54 : vector<8x256xf32>
    %56 = vector.extract_strided_slice %49 {offsets = [0, 256], sizes = [8, 128], strides = [1, 1]} : vector<8x512xf32> to vector<8x128xf32>
    %57 = math.tanh %56 : vector<8x128xf32>
    %58 = vector.extract_strided_slice %49 {offsets = [0, 384], sizes = [8, 128], strides = [1, 1]} : vector<8x512xf32> to vector<8x128xf32>
    %59 = arith.negf %58 : vector<8x128xf32>
    %60 = math.exp %59 : vector<8x128xf32>
    %cst_22 = arith.constant 1.000000e+00 : f32
    %61 = vector.broadcast %cst_22 : f32 to vector<8x128xf32>
    %62 = arith.addf %61, %60 : vector<8x128xf32>
    %63 = arith.divf %61, %62 : vector<8x128xf32>
    %64 = vector.extract_strided_slice %55 {offsets = [0, 128], sizes = [8, 128], strides = [1, 1]} : vector<8x256xf32> to vector<8x128xf32>
    %65 = arith.mulf %64, %35 : vector<8x128xf32>
    %66 = vector.extract_strided_slice %55 {offsets = [0, 0], sizes = [8, 128], strides = [1, 1]} : vector<8x256xf32> to vector<8x128xf32>
    %67 = arith.mulf %66, %57 : vector<8x128xf32>
    %68 = arith.addf %65, %67 : vector<8x128xf32>
    %69 = math.tanh %68 : vector<8x128xf32>
    %70 = arith.mulf %63, %69 : vector<8x128xf32>
    %c0_i32_23 = arith.constant 0 : i32
    %71 = arith.addi %c0_i32_23, %c1_i32 : i32
    %72 = arith.index_cast %71 : i32 to index
    %c0_24 = arith.constant 0 : index
    %c0_25 = arith.constant 0 : index
    %73 = vector.load %arg14[%72, %c0_24, %c0_25] : memref<8x8x128xf32, #tpu.memory_space<vmem>>, vector<1x8x128xf32>
    %74 = vector.shape_cast %73 : vector<1x8x128xf32> to vector<8x128xf32>
    %75 = vector.shape_cast %70 : vector<8x128xf32> to vector<1x8x128xf32>
    tpu.vector_store %arg14[%72, %c0_24, %c0_25], %75 {strides = array<i32>} : memref<8x8x128xf32, #tpu.memory_space<vmem>>, vector<1x8x128xf32>,
    %c2_i32 = arith.constant 2 : i32
    %c8_i32_26 = arith.constant 8 : i32
    %76 = arith.muli %c2_i32, %c8_i32_26 : i32
    %77 = tpu.assume_multiple %76, 8 : i32
    %78 = arith.index_cast %77 : i32 to index
    %c0_27 = arith.constant 0 : index
    %79 = vector.load %arg15[%78, %c0_27] : memref<64x512xf32, #tpu.memory_space<vmem>>, vector<8x512xf32>
    %80 = arith.truncf %70 : vector<8x128xf32> to vector<8x128xbf16>
    %cst_28 = arith.constant dense<0.000000e+00> : vector<8x512xf32>
    %81 = tpu.matmul %80, %1, %cst_28 {dimension_numbers = #tpu.dot_dimension_numbers<[1], [0], [0], [1], [0, 0, 1, 1], [], []>} : vector<8x128xbf16>, vector<128x512xbf16>, vector<8x512xf32> -> vector<8x512xf32>
    %82 = arith.addf %79, %81 : vector<8x512xf32>
    %83 = vector.extract_strided_slice %82 {offsets = [0, 0], sizes = [8, 256], strides = [1, 1]} : vector<8x512xf32> to vector<8x256xf32>
    %84 = arith.negf %83 : vector<8x256xf32>
    %85 = math.exp %84 : vector<8x256xf32>
    %cst_29 = arith.constant 1.000000e+00 : f32
    %86 = vector.broadcast %cst_29 : f32 to vector<8x256xf32>
    %87 = arith.addf %86, %85 : vector<8x256xf32>
    %88 = arith.divf %86, %87 : vector<8x256xf32>
    %89 = vector.extract_strided_slice %82 {offsets = [0, 256], sizes = [8, 128], strides = [1, 1]} : vector<8x512xf32> to vector<8x128xf32>
    %90 = math.tanh %89 : vector<8x128xf32>
    %91 = vector.extract_strided_slice %82 {offsets = [0, 384], sizes = [8, 128], strides = [1, 1]} : vector<8x512xf32> to vector<8x128xf32>
    %92 = arith.negf %91 : vector<8x128xf32>
    %93 = math.exp %92 : vector<8x128xf32>
    %cst_30 = arith.constant 1.000000e+00 : f32
    %94 = vector.broadcast %cst_30 : f32 to vector<8x128xf32>
    %95 = arith.addf %94, %93 : vector<8x128xf32>
    %96 = arith.divf %94, %95 : vector<8x128xf32>
    %97 = vector.extract_strided_slice %88 {offsets = [0, 128], sizes = [8, 128], strides = [1, 1]} : vector<8x256xf32> to vector<8x128xf32>
    %98 = arith.mulf %97, %68 : vector<8x128xf32>
    %99 = vector.extract_strided_slice %88 {offsets = [0, 0], sizes = [8, 128], strides = [1, 1]} : vector<8x256xf32> to vector<8x128xf32>
    %100 = arith.mulf %99, %90 : vector<8x128xf32>
    %101 = arith.addf %98, %100 : vector<8x128xf32>
    %102 = math.tanh %101 : vector<8x128xf32>
    %103 = arith.mulf %96, %102 : vector<8x128xf32>
    %c0_i32_31 = arith.constant 0 : i32
    %104 = arith.addi %c0_i32_31, %c2_i32 : i32
    %105 = arith.index_cast %104 : i32 to index
    %c0_32 = arith.constant 0 : index
    %c0_33 = arith.constant 0 : index
    %106 = vector.load %arg14[%105, %c0_32, %c0_33] : memref<8x8x128xf32, #tpu.memory_space<vmem>>, vector<1x8x128xf32>
    %107 = vector.shape_cast %106 : vector<1x8x128xf32> to vector<8x128xf32>
    %108 = vector.shape_cast %103 : vector<8x128xf32> to vector<1x8x128xf32>
    tpu.vector_store %arg14[%105, %c0_32, %c0_33], %108 {strides = array<i32>} : memref<8x8x128xf32, #tpu.memory_space<vmem>>, vector<1x8x128xf32>,
    %c3_i32 = arith.constant 3 : i32
    %c8_i32_34 = arith.constant 8 : i32
    %109 = arith.muli %c3_i32, %c8_i32_34 : i32
    %110 = tpu.assume_multiple %109, 8 : i32
    %111 = arith.index_cast %110 : i32 to index
    %c0_35 = arith.constant 0 : index
    %112 = vector.load %arg15[%111, %c0_35] : memref<64x512xf32, #tpu.memory_space<vmem>>, vector<8x512xf32>
    %113 = arith.truncf %103 : vector<8x128xf32> to vector<8x128xbf16>
    %cst_36 = arith.constant dense<0.000000e+00> : vector<8x512xf32>
    %114 = tpu.matmul %113, %1, %cst_36 {dimension_numbers = #tpu.dot_dimension_numbers<[1], [0], [0], [1], [0, 0, 1, 1], [], []>} : vector<8x128xbf16>, vector<128x512xbf16>, vector<8x512xf32> -> vector<8x512xf32>
    %115 = arith.addf %112, %114 : vector<8x512xf32>
    %116 = vector.extract_strided_slice %115 {offsets = [0, 0], sizes = [8, 256], strides = [1, 1]} : vector<8x512xf32> to vector<8x256xf32>
    %117 = arith.negf %116 : vector<8x256xf32>
    %118 = math.exp %117 : vector<8x256xf32>
    %cst_37 = arith.constant 1.000000e+00 : f32
    %119 = vector.broadcast %cst_37 : f32 to vector<8x256xf32>
    %120 = arith.addf %119, %118 : vector<8x256xf32>
    %121 = arith.divf %119, %120 : vector<8x256xf32>
    %122 = vector.extract_strided_slice %115 {offsets = [0, 256], sizes = [8, 128], strides = [1, 1]} : vector<8x512xf32> to vector<8x128xf32>
    %123 = math.tanh %122 : vector<8x128xf32>
    %124 = vector.extract_strided_slice %115 {offsets = [0, 384], sizes = [8, 128], strides = [1, 1]} : vector<8x512xf32> to vector<8x128xf32>
    %125 = arith.negf %124 : vector<8x128xf32>
    %126 = math.exp %125 : vector<8x128xf32>
    %cst_38 = arith.constant 1.000000e+00 : f32
    %127 = vector.broadcast %cst_38 : f32 to vector<8x128xf32>
    %128 = arith.addf %127, %126 : vector<8x128xf32>
    %129 = arith.divf %127, %128 : vector<8x128xf32>
    %130 = vector.extract_strided_slice %121 {offsets = [0, 128], sizes = [8, 128], strides = [1, 1]} : vector<8x256xf32> to vector<8x128xf32>
    %131 = arith.mulf %130, %101 : vector<8x128xf32>
    %132 = vector.extract_strided_slice %121 {offsets = [0, 0], sizes = [8, 128], strides = [1, 1]} : vector<8x256xf32> to vector<8x128xf32>
    %133 = arith.mulf %132, %123 : vector<8x128xf32>
    %134 = arith.addf %131, %133 : vector<8x128xf32>
    %135 = math.tanh %134 : vector<8x128xf32>
    %136 = arith.mulf %129, %135 : vector<8x128xf32>
    %c0_i32_39 = arith.constant 0 : i32
    %137 = arith.addi %c0_i32_39, %c3_i32 : i32
    %138 = arith.index_cast %137 : i32 to index
    %c0_40 = arith.constant 0 : index
    %c0_41 = arith.constant 0 : index
    %139 = vector.load %arg14[%138, %c0_40, %c0_41] : memref<8x8x128xf32, #tpu.memory_space<vmem>>, vector<1x8x128xf32>
    %140 = vector.shape_cast %139 : vector<1x8x128xf32> to vector<8x128xf32>
    %141 = vector.shape_cast %136 : vector<8x128xf32> to vector<1x8x128xf32>
    tpu.vector_store %arg14[%138, %c0_40, %c0_41], %141 {strides = array<i32>} : memref<8x8x128xf32, #tpu.memory_space<vmem>>, vector<1x8x128xf32>,
    %c4_i32 = arith.constant 4 : i32
    %c8_i32_42 = arith.constant 8 : i32
    %142 = arith.muli %c4_i32, %c8_i32_42 : i32
    %143 = tpu.assume_multiple %142, 8 : i32
    %144 = arith.index_cast %143 : i32 to index
    %c0_43 = arith.constant 0 : index
    %145 = vector.load %arg15[%144, %c0_43] : memref<64x512xf32, #tpu.memory_space<vmem>>, vector<8x512xf32>
    %146 = arith.truncf %136 : vector<8x128xf32> to vector<8x128xbf16>
    %cst_44 = arith.constant dense<0.000000e+00> : vector<8x512xf32>
    %147 = tpu.matmul %146, %1, %cst_44 {dimension_numbers = #tpu.dot_dimension_numbers<[1], [0], [0], [1], [0, 0, 1, 1], [], []>} : vector<8x128xbf16>, vector<128x512xbf16>, vector<8x512xf32> -> vector<8x512xf32>
    %148 = arith.addf %145, %147 : vector<8x512xf32>
    %149 = vector.extract_strided_slice %148 {offsets = [0, 0], sizes = [8, 256], strides = [1, 1]} : vector<8x512xf32> to vector<8x256xf32>
    %150 = arith.negf %149 : vector<8x256xf32>
    %151 = math.exp %150 : vector<8x256xf32>
    %cst_45 = arith.constant 1.000000e+00 : f32
    %152 = vector.broadcast %cst_45 : f32 to vector<8x256xf32>
    %153 = arith.addf %152, %151 : vector<8x256xf32>
    %154 = arith.divf %152, %153 : vector<8x256xf32>
    %155 = vector.extract_strided_slice %148 {offsets = [0, 256], sizes = [8, 128], strides = [1, 1]} : vector<8x512xf32> to vector<8x128xf32>
    %156 = math.tanh %155 : vector<8x128xf32>
    %157 = vector.extract_strided_slice %148 {offsets = [0, 384], sizes = [8, 128], strides = [1, 1]} : vector<8x512xf32> to vector<8x128xf32>
    %158 = arith.negf %157 : vector<8x128xf32>
    %159 = math.exp %158 : vector<8x128xf32>
    %cst_46 = arith.constant 1.000000e+00 : f32
    %160 = vector.broadcast %cst_46 : f32 to vector<8x128xf32>
    %161 = arith.addf %160, %159 : vector<8x128xf32>
    %162 = arith.divf %160, %161 : vector<8x128xf32>
    %163 = vector.extract_strided_slice %154 {offsets = [0, 128], sizes = [8, 128], strides = [1, 1]} : vector<8x256xf32> to vector<8x128xf32>
    %164 = arith.mulf %163, %134 : vector<8x128xf32>
    %165 = vector.extract_strided_slice %154 {offsets = [0, 0], sizes = [8, 128], strides = [1, 1]} : vector<8x256xf32> to vector<8x128xf32>
    %166 = arith.mulf %165, %156 : vector<8x128xf32>
    %167 = arith.addf %164, %166 : vector<8x128xf32>
    %168 = math.tanh %167 : vector<8x128xf32>
    %169 = arith.mulf %162, %168 : vector<8x128xf32>
    %c0_i32_47 = arith.constant 0 : i32
    %170 = arith.addi %c0_i32_47, %c4_i32 : i32
    %171 = arith.index_cast %170 : i32 to index
    %c0_48 = arith.constant 0 : index
    %c0_49 = arith.constant 0 : index
    %172 = vector.load %arg14[%171, %c0_48, %c0_49] : memref<8x8x128xf32, #tpu.memory_space<vmem>>, vector<1x8x128xf32>
    %173 = vector.shape_cast %172 : vector<1x8x128xf32> to vector<8x128xf32>
    %174 = vector.shape_cast %169 : vector<8x128xf32> to vector<1x8x128xf32>
    tpu.vector_store %arg14[%171, %c0_48, %c0_49], %174 {strides = array<i32>} : memref<8x8x128xf32, #tpu.memory_space<vmem>>, vector<1x8x128xf32>,
    %c5_i32 = arith.constant 5 : i32
    %c8_i32_50 = arith.constant 8 : i32
    %175 = arith.muli %c5_i32, %c8_i32_50 : i32
    %176 = tpu.assume_multiple %175, 8 : i32
    %177 = arith.index_cast %176 : i32 to index
    %c0_51 = arith.constant 0 : index
    %178 = vector.load %arg15[%177, %c0_51] : memref<64x512xf32, #tpu.memory_space<vmem>>, vector<8x512xf32>
    %179 = arith.truncf %169 : vector<8x128xf32> to vector<8x128xbf16>
    %cst_52 = arith.constant dense<0.000000e+00> : vector<8x512xf32>
    %180 = tpu.matmul %179, %1, %cst_52 {dimension_numbers = #tpu.dot_dimension_numbers<[1], [0], [0], [1], [0, 0, 1, 1], [], []>} : vector<8x128xbf16>, vector<128x512xbf16>, vector<8x512xf32> -> vector<8x512xf32>
    %181 = arith.addf %178, %180 : vector<8x512xf32>
    %182 = vector.extract_strided_slice %181 {offsets = [0, 0], sizes = [8, 256], strides = [1, 1]} : vector<8x512xf32> to vector<8x256xf32>
    %183 = arith.negf %182 : vector<8x256xf32>
    %184 = math.exp %183 : vector<8x256xf32>
    %cst_53 = arith.constant 1.000000e+00 : f32
    %185 = vector.broadcast %cst_53 : f32 to vector<8x256xf32>
    %186 = arith.addf %185, %184 : vector<8x256xf32>
    %187 = arith.divf %185, %186 : vector<8x256xf32>
    %188 = vector.extract_strided_slice %181 {offsets = [0, 256], sizes = [8, 128], strides = [1, 1]} : vector<8x512xf32> to vector<8x128xf32>
    %189 = math.tanh %188 : vector<8x128xf32>
    %190 = vector.extract_strided_slice %181 {offsets = [0, 384], sizes = [8, 128], strides = [1, 1]} : vector<8x512xf32> to vector<8x128xf32>
    %191 = arith.negf %190 : vector<8x128xf32>
    %192 = math.exp %191 : vector<8x128xf32>
    %cst_54 = arith.constant 1.000000e+00 : f32
    %193 = vector.broadcast %cst_54 : f32 to vector<8x128xf32>
    %194 = arith.addf %193, %192 : vector<8x128xf32>
    %195 = arith.divf %193, %194 : vector<8x128xf32>
    %196 = vector.extract_strided_slice %187 {offsets = [0, 128], sizes = [8, 128], strides = [1, 1]} : vector<8x256xf32> to vector<8x128xf32>
    %197 = arith.mulf %196, %167 : vector<8x128xf32>
    %198 = vector.extract_strided_slice %187 {offsets = [0, 0], sizes = [8, 128], strides = [1, 1]} : vector<8x256xf32> to vector<8x128xf32>
    %199 = arith.mulf %198, %189 : vector<8x128xf32>
    %200 = arith.addf %197, %199 : vector<8x128xf32>
    %201 = math.tanh %200 : vector<8x128xf32>
    %202 = arith.mulf %195, %201 : vector<8x128xf32>
    %c0_i32_55 = arith.constant 0 : i32
    %203 = arith.addi %c0_i32_55, %c5_i32 : i32
    %204 = arith.index_cast %203 : i32 to index
    %c0_56 = arith.constant 0 : index
    %c0_57 = arith.constant 0 : index
    %205 = vector.load %arg14[%204, %c0_56, %c0_57] : memref<8x8x128xf32, #tpu.memory_space<vmem>>, vector<1x8x128xf32>
    %206 = vector.shape_cast %205 : vector<1x8x128xf32> to vector<8x128xf32>
    %207 = vector.shape_cast %202 : vector<8x128xf32> to vector<1x8x128xf32>
    tpu.vector_store %arg14[%204, %c0_56, %c0_57], %207 {strides = array<i32>} : memref<8x8x128xf32, #tpu.memory_space<vmem>>, vector<1x8x128xf32>,
    %c6_i32 = arith.constant 6 : i32
    %c8_i32_58 = arith.constant 8 : i32
    %208 = arith.muli %c6_i32, %c8_i32_58 : i32
    %209 = tpu.assume_multiple %208, 8 : i32
    %210 = arith.index_cast %209 : i32 to index
    %c0_59 = arith.constant 0 : index
    %211 = vector.load %arg15[%210, %c0_59] : memref<64x512xf32, #tpu.memory_space<vmem>>, vector<8x512xf32>
    %212 = arith.truncf %202 : vector<8x128xf32> to vector<8x128xbf16>
    %cst_60 = arith.constant dense<0.000000e+00> : vector<8x512xf32>
    %213 = tpu.matmul %212, %1, %cst_60 {dimension_numbers = #tpu.dot_dimension_numbers<[1], [0], [0], [1], [0, 0, 1, 1], [], []>} : vector<8x128xbf16>, vector<128x512xbf16>, vector<8x512xf32> -> vector<8x512xf32>
    %214 = arith.addf %211, %213 : vector<8x512xf32>
    %215 = vector.extract_strided_slice %214 {offsets = [0, 0], sizes = [8, 256], strides = [1, 1]} : vector<8x512xf32> to vector<8x256xf32>
    %216 = arith.negf %215 : vector<8x256xf32>
    %217 = math.exp %216 : vector<8x256xf32>
    %cst_61 = arith.constant 1.000000e+00 : f32
    %218 = vector.broadcast %cst_61 : f32 to vector<8x256xf32>
    %219 = arith.addf %218, %217 : vector<8x256xf32>
    %220 = arith.divf %218, %219 : vector<8x256xf32>
    %221 = vector.extract_strided_slice %214 {offsets = [0, 256], sizes = [8, 128], strides = [1, 1]} : vector<8x512xf32> to vector<8x128xf32>
    %222 = math.tanh %221 : vector<8x128xf32>
    %223 = vector.extract_strided_slice %214 {offsets = [0, 384], sizes = [8, 128], strides = [1, 1]} : vector<8x512xf32> to vector<8x128xf32>
    %224 = arith.negf %223 : vector<8x128xf32>
    %225 = math.exp %224 : vector<8x128xf32>
    %cst_62 = arith.constant 1.000000e+00 : f32
    %226 = vector.broadcast %cst_62 : f32 to vector<8x128xf32>
    %227 = arith.addf %226, %225 : vector<8x128xf32>
    %228 = arith.divf %226, %227 : vector<8x128xf32>
    %229 = vector.extract_strided_slice %220 {offsets = [0, 128], sizes = [8, 128], strides = [1, 1]} : vector<8x256xf32> to vector<8x128xf32>
    %230 = arith.mulf %229, %200 : vector<8x128xf32>
    %231 = vector.extract_strided_slice %220 {offsets = [0, 0], sizes = [8, 128], strides = [1, 1]} : vector<8x256xf32> to vector<8x128xf32>
    %232 = arith.mulf %231, %222 : vector<8x128xf32>
    %233 = arith.addf %230, %232 : vector<8x128xf32>
    %234 = math.tanh %233 : vector<8x128xf32>
    %235 = arith.mulf %228, %234 : vector<8x128xf32>
    %c0_i32_63 = arith.constant 0 : i32
    %236 = arith.addi %c0_i32_63, %c6_i32 : i32
    %237 = arith.index_cast %236 : i32 to index
    %c0_64 = arith.constant 0 : index
    %c0_65 = arith.constant 0 : index
    %238 = vector.load %arg14[%237, %c0_64, %c0_65] : memref<8x8x128xf32, #tpu.memory_space<vmem>>, vector<1x8x128xf32>
    %239 = vector.shape_cast %238 : vector<1x8x128xf32> to vector<8x128xf32>
    %240 = vector.shape_cast %235 : vector<8x128xf32> to vector<1x8x128xf32>
    tpu.vector_store %arg14[%237, %c0_64, %c0_65], %240 {strides = array<i32>} : memref<8x8x128xf32, #tpu.memory_space<vmem>>, vector<1x8x128xf32>,
    %c7_i32 = arith.constant 7 : i32
    %c8_i32_66 = arith.constant 8 : i32
    %241 = arith.muli %c7_i32, %c8_i32_66 : i32
    %242 = tpu.assume_multiple %241, 8 : i32
    %243 = arith.index_cast %242 : i32 to index
    %c0_67 = arith.constant 0 : index
    %244 = vector.load %arg15[%243, %c0_67] : memref<64x512xf32, #tpu.memory_space<vmem>>, vector<8x512xf32>
    %245 = arith.truncf %235 : vector<8x128xf32> to vector<8x128xbf16>
    %cst_68 = arith.constant dense<0.000000e+00> : vector<8x512xf32>
    %246 = tpu.matmul %245, %1, %cst_68 {dimension_numbers = #tpu.dot_dimension_numbers<[1], [0], [0], [1], [0, 0, 1, 1], [], []>} : vector<8x128xbf16>, vector<128x512xbf16>, vector<8x512xf32> -> vector<8x512xf32>
    %247 = arith.addf %244, %246 : vector<8x512xf32>
    %248 = vector.extract_strided_slice %247 {offsets = [0, 0], sizes = [8, 256], strides = [1, 1]} : vector<8x512xf32> to vector<8x256xf32>
    %249 = arith.negf %248 : vector<8x256xf32>
    %250 = math.exp %249 : vector<8x256xf32>
    %cst_69 = arith.constant 1.000000e+00 : f32
    %251 = vector.broadcast %cst_69 : f32 to vector<8x256xf32>
    %252 = arith.addf %251, %250 : vector<8x256xf32>
    %253 = arith.divf %251, %252 : vector<8x256xf32>
    %254 = vector.extract_strided_slice %247 {offsets = [0, 256], sizes = [8, 128], strides = [1, 1]} : vector<8x512xf32> to vector<8x128xf32>
    %255 = math.tanh %254 : vector<8x128xf32>
    %256 = vector.extract_strided_slice %247 {offsets = [0, 384], sizes = [8, 128], strides = [1, 1]} : vector<8x512xf32> to vector<8x128xf32>
    %257 = arith.negf %256 : vector<8x128xf32>
    %258 = math.exp %257 : vector<8x128xf32>
    %cst_70 = arith.constant 1.000000e+00 : f32
    %259 = vector.broadcast %cst_70 : f32 to vector<8x128xf32>
    %260 = arith.addf %259, %258 : vector<8x128xf32>
    %261 = arith.divf %259, %260 : vector<8x128xf32>
    %262 = vector.extract_strided_slice %253 {offsets = [0, 128], sizes = [8, 128], strides = [1, 1]} : vector<8x256xf32> to vector<8x128xf32>
    %263 = arith.mulf %262, %233 : vector<8x128xf32>
    %264 = vector.extract_strided_slice %253 {offsets = [0, 0], sizes = [8, 128], strides = [1, 1]} : vector<8x256xf32> to vector<8x128xf32>
    %265 = arith.mulf %264, %255 : vector<8x128xf32>
    %266 = arith.addf %263, %265 : vector<8x128xf32>
    %267 = math.tanh %266 : vector<8x128xf32>
    %268 = arith.mulf %261, %267 : vector<8x128xf32>
    %c0_i32_71 = arith.constant 0 : i32
    %269 = arith.addi %c0_i32_71, %c7_i32 : i32
    %270 = arith.index_cast %269 : i32 to index
    %c0_72 = arith.constant 0 : index
    %c0_73 = arith.constant 0 : index
    %271 = vector.load %arg14[%270, %c0_72, %c0_73] : memref<8x8x128xf32, #tpu.memory_space<vmem>>, vector<1x8x128xf32>
    %272 = vector.shape_cast %271 : vector<1x8x128xf32> to vector<8x128xf32>
    %273 = vector.shape_cast %268 : vector<8x128xf32> to vector<1x8x128xf32>
    tpu.vector_store %arg14[%270, %c0_72, %c0_73], %273 {strides = array<i32>} : memref<8x8x128xf32, #tpu.memory_space<vmem>>, vector<1x8x128xf32>,
    %c8_i32_74 = arith.constant 8 : i32
    %c0_75 = arith.constant 0 : index
    %c0_76 = arith.constant 0 : index
    %c0_77 = arith.constant 0 : index
    %274 = vector.load %arg12[%c0_75, %c0_76, %c0_77] : memref<2x8x128xf32, #tpu.memory_space<vmem>>, vector<1x8x128xf32>
    %275 = vector.shape_cast %274 : vector<1x8x128xf32> to vector<8x128xf32>
    %276 = vector.shape_cast %268 : vector<8x128xf32> to vector<1x8x128xf32>
    tpu.vector_store %arg12[%c0_75, %c0_76, %c0_77], %276 {strides = array<i32>} : memref<2x8x128xf32, #tpu.memory_space<vmem>>, vector<1x8x128xf32>,
    %c0_78 = arith.constant 0 : index
    %c0_79 = arith.constant 0 : index
    %c0_80 = arith.constant 0 : index
    %277 = vector.load %arg13[%c0_78, %c0_79, %c0_80] : memref<2x8x128xf32, #tpu.memory_space<vmem>>, vector<1x8x128xf32>
    %278 = vector.shape_cast %277 : vector<1x8x128xf32> to vector<8x128xf32>
    %279 = vector.shape_cast %266 : vector<8x128xf32> to vector<1x8x128xf32>
    tpu.vector_store %arg13[%c0_78, %c0_79, %c0_80], %279 {strides = array<i32>} : memref<2x8x128xf32, #tpu.memory_space<vmem>>, vector<1x8x128xf32>,
    %c0_81 = arith.constant 0 : index
    %c0_82 = arith.constant 0 : index
    %280 = vector.load %arg4[%c0_81, %c0_82] : memref<128x512xbf16, #tpu.memory_space<vmem>>, vector<128x512xbf16>
    %c0_83 = arith.constant 0 : index
    %c0_84 = arith.constant 0 : index
    %281 = vector.load %arg5[%c0_83, %c0_84] : memref<128x512xbf16, #tpu.memory_space<vmem>>, vector<128x512xbf16>
    %c0_85 = arith.constant 0 : index
    %c0_86 = arith.constant 0 : index
    %282 = vector.load %arg6[%c0_85, %c0_86] : memref<1x512xf32, #tpu.memory_space<vmem>>, vector<1x512xf32>
    %cst_87 = arith.constant 0.000000e+00 : f32
    %283 = vector.broadcast %cst_87 : f32 to vector<8x128xf32>
    %cst_88 = arith.constant 0.000000e+00 : f32
    %284 = vector.broadcast %cst_88 : f32 to vector<8x128xf32>
    %c0_89 = arith.constant 0 : index
    %c0_90 = arith.constant 0 : index
    %c0_91 = arith.constant 0 : index
    %285 = vector.load %arg14[%c0_89, %c0_90, %c0_91] : memref<8x8x128xf32, #tpu.memory_space<vmem>>, vector<8x8x128xf32>
    %286 = vector.shape_cast %285 : vector<8x8x128xf32> to vector<64x128xf32>
    %287 = arith.truncf %286 : vector<64x128xf32> to vector<64x128xbf16>
    %cst_92 = arith.constant dense<0.000000e+00> : vector<64x512xf32>
    %288 = tpu.matmul %287, %280, %cst_92 {dimension_numbers = #tpu.dot_dimension_numbers<[1], [0], [0], [1], [0, 0, 1, 1], [], []>} : vector<64x128xbf16>, vector<128x512xbf16>, vector<64x512xf32> -> vector<64x512xf32>
    %289 = vector.broadcast %282 : vector<1x512xf32> to vector<64x512xf32>
    %290 = arith.addf %288, %289 : vector<64x512xf32>
    %c0_93 = arith.constant 0 : index
    %c0_94 = arith.constant 0 : index
    %291 = vector.load %arg15[%c0_93, %c0_94] : memref<64x512xf32, #tpu.memory_space<vmem>>, vector<64x512xf32>
    tpu.vector_store %arg15[%c0_93, %c0_94], %290 {strides = array<i32>} : memref<64x512xf32, #tpu.memory_space<vmem>>, vector<64x512xf32>,
    %c0_i32_95 = arith.constant 0 : i32
    %c8_i32_96 = arith.constant 8 : i32
    %292 = arith.muli %c0_i32_95, %c8_i32_96 : i32
    %293 = tpu.assume_multiple %292, 8 : i32
    %294 = arith.index_cast %293 : i32 to index
    %c0_97 = arith.constant 0 : index
    %295 = vector.load %arg15[%294, %c0_97] : memref<64x512xf32, #tpu.memory_space<vmem>>, vector<8x512xf32>
    %296 = arith.truncf %283 : vector<8x128xf32> to vector<8x128xbf16>
    %cst_98 = arith.constant dense<0.000000e+00> : vector<8x512xf32>
    %297 = tpu.matmul %296, %281, %cst_98 {dimension_numbers = #tpu.dot_dimension_numbers<[1], [0], [0], [1], [0, 0, 1, 1], [], []>} : vector<8x128xbf16>, vector<128x512xbf16>, vector<8x512xf32> -> vector<8x512xf32>
    %298 = arith.addf %295, %297 : vector<8x512xf32>
    %299 = vector.extract_strided_slice %298 {offsets = [0, 0], sizes = [8, 256], strides = [1, 1]} : vector<8x512xf32> to vector<8x256xf32>
    %300 = arith.negf %299 : vector<8x256xf32>
    %301 = math.exp %300 : vector<8x256xf32>
    %cst_99 = arith.constant 1.000000e+00 : f32
    %302 = vector.broadcast %cst_99 : f32 to vector<8x256xf32>
    %303 = arith.addf %302, %301 : vector<8x256xf32>
    %304 = arith.divf %302, %303 : vector<8x256xf32>
    %305 = vector.extract_strided_slice %298 {offsets = [0, 256], sizes = [8, 128], strides = [1, 1]} : vector<8x512xf32> to vector<8x128xf32>
    %306 = math.tanh %305 : vector<8x128xf32>
    %307 = vector.extract_strided_slice %298 {offsets = [0, 384], sizes = [8, 128], strides = [1, 1]} : vector<8x512xf32> to vector<8x128xf32>
    %308 = arith.negf %307 : vector<8x128xf32>
    %309 = math.exp %308 : vector<8x128xf32>
    %cst_100 = arith.constant 1.000000e+00 : f32
    %310 = vector.broadcast %cst_100 : f32 to vector<8x128xf32>
    %311 = arith.addf %310, %309 : vector<8x128xf32>
    %312 = arith.divf %310, %311 : vector<8x128xf32>
    %313 = vector.extract_strided_slice %304 {offsets = [0, 128], sizes = [8, 128], strides = [1, 1]} : vector<8x256xf32> to vector<8x128xf32>
    %314 = arith.mulf %313, %284 : vector<8x128xf32>
    %315 = vector.extract_strided_slice %304 {offsets = [0, 0], sizes = [8, 128], strides = [1, 1]} : vector<8x256xf32> to vector<8x128xf32>
    %316 = arith.mulf %315, %306 : vector<8x128xf32>
    %317 = arith.addf %314, %316 : vector<8x128xf32>
    %318 = math.tanh %317 : vector<8x128xf32>
    %319 = arith.mulf %312, %318 : vector<8x128xf32>
    %c1_i32_101 = arith.constant 1 : i32
    %c8_i32_102 = arith.constant 8 : i32
    %320 = arith.muli %c1_i32_101, %c8_i32_102 : i32
    %321 = tpu.assume_multiple %320, 8 : i32
    %322 = arith.index_cast %321 : i32 to index
    %c0_103 = arith.constant 0 : index
    %323 = vector.load %arg15[%322, %c0_103] : memref<64x512xf32, #tpu.memory_space<vmem>>, vector<8x512xf32>
    %324 = arith.truncf %319 : vector<8x128xf32> to vector<8x128xbf16>
    %cst_104 = arith.constant dense<0.000000e+00> : vector<8x512xf32>
    %325 = tpu.matmul %324, %281, %cst_104 {dimension_numbers = #tpu.dot_dimension_numbers<[1], [0], [0], [1], [0, 0, 1, 1], [], []>} : vector<8x128xbf16>, vector<128x512xbf16>, vector<8x512xf32> -> vector<8x512xf32>
    %326 = arith.addf %323, %325 : vector<8x512xf32>
    %327 = vector.extract_strided_slice %326 {offsets = [0, 0], sizes = [8, 256], strides = [1, 1]} : vector<8x512xf32> to vector<8x256xf32>
    %328 = arith.negf %327 : vector<8x256xf32>
    %329 = math.exp %328 : vector<8x256xf32>
    %cst_105 = arith.constant 1.000000e+00 : f32
    %330 = vector.broadcast %cst_105 : f32 to vector<8x256xf32>
    %331 = arith.addf %330, %329 : vector<8x256xf32>
    %332 = arith.divf %330, %331 : vector<8x256xf32>
    %333 = vector.extract_strided_slice %326 {offsets = [0, 256], sizes = [8, 128], strides = [1, 1]} : vector<8x512xf32> to vector<8x128xf32>
    %334 = math.tanh %333 : vector<8x128xf32>
    %335 = vector.extract_strided_slice %326 {offsets = [0, 384], sizes = [8, 128], strides = [1, 1]} : vector<8x512xf32> to vector<8x128xf32>
    %336 = arith.negf %335 : vector<8x128xf32>
    %337 = math.exp %336 : vector<8x128xf32>
    %cst_106 = arith.constant 1.000000e+00 : f32
    %338 = vector.broadcast %cst_106 : f32 to vector<8x128xf32>
    %339 = arith.addf %338, %337 : vector<8x128xf32>
    %340 = arith.divf %338, %339 : vector<8x128xf32>
    %341 = vector.extract_strided_slice %332 {offsets = [0, 128], sizes = [8, 128], strides = [1, 1]} : vector<8x256xf32> to vector<8x128xf32>
    %342 = arith.mulf %341, %317 : vector<8x128xf32>
    %343 = vector.extract_strided_slice %332 {offsets = [0, 0], sizes = [8, 128], strides = [1, 1]} : vector<8x256xf32> to vector<8x128xf32>
    %344 = arith.mulf %343, %334 : vector<8x128xf32>
    %345 = arith.addf %342, %344 : vector<8x128xf32>
    %346 = math.tanh %345 : vector<8x128xf32>
    %347 = arith.mulf %340, %346 : vector<8x128xf32>
    %c2_i32_107 = arith.constant 2 : i32
    %c8_i32_108 = arith.constant 8 : i32
    %348 = arith.muli %c2_i32_107, %c8_i32_108 : i32
    %349 = tpu.assume_multiple %348, 8 : i32
    %350 = arith.index_cast %349 : i32 to index
    %c0_109 = arith.constant 0 : index
    %351 = vector.load %arg15[%350, %c0_109] : memref<64x512xf32, #tpu.memory_space<vmem>>, vector<8x512xf32>
    %352 = arith.truncf %347 : vector<8x128xf32> to vector<8x128xbf16>
    %cst_110 = arith.constant dense<0.000000e+00> : vector<8x512xf32>
    %353 = tpu.matmul %352, %281, %cst_110 {dimension_numbers = #tpu.dot_dimension_numbers<[1], [0], [0], [1], [0, 0, 1, 1], [], []>} : vector<8x128xbf16>, vector<128x512xbf16>, vector<8x512xf32> -> vector<8x512xf32>
    %354 = arith.addf %351, %353 : vector<8x512xf32>
    %355 = vector.extract_strided_slice %354 {offsets = [0, 0], sizes = [8, 256], strides = [1, 1]} : vector<8x512xf32> to vector<8x256xf32>
    %356 = arith.negf %355 : vector<8x256xf32>
    %357 = math.exp %356 : vector<8x256xf32>
    %cst_111 = arith.constant 1.000000e+00 : f32
    %358 = vector.broadcast %cst_111 : f32 to vector<8x256xf32>
    %359 = arith.addf %358, %357 : vector<8x256xf32>
    %360 = arith.divf %358, %359 : vector<8x256xf32>
    %361 = vector.extract_strided_slice %354 {offsets = [0, 256], sizes = [8, 128], strides = [1, 1]} : vector<8x512xf32> to vector<8x128xf32>
    %362 = math.tanh %361 : vector<8x128xf32>
    %363 = vector.extract_strided_slice %354 {offsets = [0, 384], sizes = [8, 128], strides = [1, 1]} : vector<8x512xf32> to vector<8x128xf32>
    %364 = arith.negf %363 : vector<8x128xf32>
    %365 = math.exp %364 : vector<8x128xf32>
    %cst_112 = arith.constant 1.000000e+00 : f32
    %366 = vector.broadcast %cst_112 : f32 to vector<8x128xf32>
    %367 = arith.addf %366, %365 : vector<8x128xf32>
    %368 = arith.divf %366, %367 : vector<8x128xf32>
    %369 = vector.extract_strided_slice %360 {offsets = [0, 128], sizes = [8, 128], strides = [1, 1]} : vector<8x256xf32> to vector<8x128xf32>
    %370 = arith.mulf %369, %345 : vector<8x128xf32>
    %371 = vector.extract_strided_slice %360 {offsets = [0, 0], sizes = [8, 128], strides = [1, 1]} : vector<8x256xf32> to vector<8x128xf32>
    %372 = arith.mulf %371, %362 : vector<8x128xf32>
    %373 = arith.addf %370, %372 : vector<8x128xf32>
    %374 = math.tanh %373 : vector<8x128xf32>
    %375 = arith.mulf %368, %374 : vector<8x128xf32>
    %c3_i32_113 = arith.constant 3 : i32
    %c8_i32_114 = arith.constant 8 : i32
    %376 = arith.muli %c3_i32_113, %c8_i32_114 : i32
    %377 = tpu.assume_multiple %376, 8 : i32
    %378 = arith.index_cast %377 : i32 to index
    %c0_115 = arith.constant 0 : index
    %379 = vector.load %arg15[%378, %c0_115] : memref<64x512xf32, #tpu.memory_space<vmem>>, vector<8x512xf32>
    %380 = arith.truncf %375 : vector<8x128xf32> to vector<8x128xbf16>
    %cst_116 = arith.constant dense<0.000000e+00> : vector<8x512xf32>
    %381 = tpu.matmul %380, %281, %cst_116 {dimension_numbers = #tpu.dot_dimension_numbers<[1], [0], [0], [1], [0, 0, 1, 1], [], []>} : vector<8x128xbf16>, vector<128x512xbf16>, vector<8x512xf32> -> vector<8x512xf32>
    %382 = arith.addf %379, %381 : vector<8x512xf32>
    %383 = vector.extract_strided_slice %382 {offsets = [0, 0], sizes = [8, 256], strides = [1, 1]} : vector<8x512xf32> to vector<8x256xf32>
    %384 = arith.negf %383 : vector<8x256xf32>
    %385 = math.exp %384 : vector<8x256xf32>
    %cst_117 = arith.constant 1.000000e+00 : f32
    %386 = vector.broadcast %cst_117 : f32 to vector<8x256xf32>
    %387 = arith.addf %386, %385 : vector<8x256xf32>
    %388 = arith.divf %386, %387 : vector<8x256xf32>
    %389 = vector.extract_strided_slice %382 {offsets = [0, 256], sizes = [8, 128], strides = [1, 1]} : vector<8x512xf32> to vector<8x128xf32>
    %390 = math.tanh %389 : vector<8x128xf32>
    %391 = vector.extract_strided_slice %382 {offsets = [0, 384], sizes = [8, 128], strides = [1, 1]} : vector<8x512xf32> to vector<8x128xf32>
    %392 = arith.negf %391 : vector<8x128xf32>
    %393 = math.exp %392 : vector<8x128xf32>
    %cst_118 = arith.constant 1.000000e+00 : f32
    %394 = vector.broadcast %cst_118 : f32 to vector<8x128xf32>
    %395 = arith.addf %394, %393 : vector<8x128xf32>
    %396 = arith.divf %394, %395 : vector<8x128xf32>
    %397 = vector.extract_strided_slice %388 {offsets = [0, 128], sizes = [8, 128], strides = [1, 1]} : vector<8x256xf32> to vector<8x128xf32>
    %398 = arith.mulf %397, %373 : vector<8x128xf32>
    %399 = vector.extract_strided_slice %388 {offsets = [0, 0], sizes = [8, 128], strides = [1, 1]} : vector<8x256xf32> to vector<8x128xf32>
    %400 = arith.mulf %399, %390 : vector<8x128xf32>
    %401 = arith.addf %398, %400 : vector<8x128xf32>
    %402 = math.tanh %401 : vector<8x128xf32>
    %403 = arith.mulf %396, %402 : vector<8x128xf32>
    %c4_i32_119 = arith.constant 4 : i32
    %c8_i32_120 = arith.constant 8 : i32
    %404 = arith.muli %c4_i32_119, %c8_i32_120 : i32
    %405 = tpu.assume_multiple %404, 8 : i32
    %406 = arith.index_cast %405 : i32 to index
    %c0_121 = arith.constant 0 : index
    %407 = vector.load %arg15[%406, %c0_121] : memref<64x512xf32, #tpu.memory_space<vmem>>, vector<8x512xf32>
    %408 = arith.truncf %403 : vector<8x128xf32> to vector<8x128xbf16>
    %cst_122 = arith.constant dense<0.000000e+00> : vector<8x512xf32>
    %409 = tpu.matmul %408, %281, %cst_122 {dimension_numbers = #tpu.dot_dimension_numbers<[1], [0], [0], [1], [0, 0, 1, 1], [], []>} : vector<8x128xbf16>, vector<128x512xbf16>, vector<8x512xf32> -> vector<8x512xf32>
    %410 = arith.addf %407, %409 : vector<8x512xf32>
    %411 = vector.extract_strided_slice %410 {offsets = [0, 0], sizes = [8, 256], strides = [1, 1]} : vector<8x512xf32> to vector<8x256xf32>
    %412 = arith.negf %411 : vector<8x256xf32>
    %413 = math.exp %412 : vector<8x256xf32>
    %cst_123 = arith.constant 1.000000e+00 : f32
    %414 = vector.broadcast %cst_123 : f32 to vector<8x256xf32>
    %415 = arith.addf %414, %413 : vector<8x256xf32>
    %416 = arith.divf %414, %415 : vector<8x256xf32>
    %417 = vector.extract_strided_slice %410 {offsets = [0, 256], sizes = [8, 128], strides = [1, 1]} : vector<8x512xf32> to vector<8x128xf32>
    %418 = math.tanh %417 : vector<8x128xf32>
    %419 = vector.extract_strided_slice %410 {offsets = [0, 384], sizes = [8, 128], strides = [1, 1]} : vector<8x512xf32> to vector<8x128xf32>
    %420 = arith.negf %419 : vector<8x128xf32>
    %421 = math.exp %420 : vector<8x128xf32>
    %cst_124 = arith.constant 1.000000e+00 : f32
    %422 = vector.broadcast %cst_124 : f32 to vector<8x128xf32>
    %423 = arith.addf %422, %421 : vector<8x128xf32>
    %424 = arith.divf %422, %423 : vector<8x128xf32>
    %425 = vector.extract_strided_slice %416 {offsets = [0, 128], sizes = [8, 128], strides = [1, 1]} : vector<8x256xf32> to vector<8x128xf32>
    %426 = arith.mulf %425, %401 : vector<8x128xf32>
    %427 = vector.extract_strided_slice %416 {offsets = [0, 0], sizes = [8, 128], strides = [1, 1]} : vector<8x256xf32> to vector<8x128xf32>
    %428 = arith.mulf %427, %418 : vector<8x128xf32>
    %429 = arith.addf %426, %428 : vector<8x128xf32>
    %430 = math.tanh %429 : vector<8x128xf32>
    %431 = arith.mulf %424, %430 : vector<8x128xf32>
    %c5_i32_125 = arith.constant 5 : i32
    %c8_i32_126 = arith.constant 8 : i32
    %432 = arith.muli %c5_i32_125, %c8_i32_126 : i32
    %433 = tpu.assume_multiple %432, 8 : i32
    %434 = arith.index_cast %433 : i32 to index
    %c0_127 = arith.constant 0 : index
    %435 = vector.load %arg15[%434, %c0_127] : memref<64x512xf32, #tpu.memory_space<vmem>>, vector<8x512xf32>
    %436 = arith.truncf %431 : vector<8x128xf32> to vector<8x128xbf16>
    %cst_128 = arith.constant dense<0.000000e+00> : vector<8x512xf32>
    %437 = tpu.matmul %436, %281, %cst_128 {dimension_numbers = #tpu.dot_dimension_numbers<[1], [0], [0], [1], [0, 0, 1, 1], [], []>} : vector<8x128xbf16>, vector<128x512xbf16>, vector<8x512xf32> -> vector<8x512xf32>
    %438 = arith.addf %435, %437 : vector<8x512xf32>
    %439 = vector.extract_strided_slice %438 {offsets = [0, 0], sizes = [8, 256], strides = [1, 1]} : vector<8x512xf32> to vector<8x256xf32>
    %440 = arith.negf %439 : vector<8x256xf32>
    %441 = math.exp %440 : vector<8x256xf32>
    %cst_129 = arith.constant 1.000000e+00 : f32
    %442 = vector.broadcast %cst_129 : f32 to vector<8x256xf32>
    %443 = arith.addf %442, %441 : vector<8x256xf32>
    %444 = arith.divf %442, %443 : vector<8x256xf32>
    %445 = vector.extract_strided_slice %438 {offsets = [0, 256], sizes = [8, 128], strides = [1, 1]} : vector<8x512xf32> to vector<8x128xf32>
    %446 = math.tanh %445 : vector<8x128xf32>
    %447 = vector.extract_strided_slice %438 {offsets = [0, 384], sizes = [8, 128], strides = [1, 1]} : vector<8x512xf32> to vector<8x128xf32>
    %448 = arith.negf %447 : vector<8x128xf32>
    %449 = math.exp %448 : vector<8x128xf32>
    %cst_130 = arith.constant 1.000000e+00 : f32
    %450 = vector.broadcast %cst_130 : f32 to vector<8x128xf32>
    %451 = arith.addf %450, %449 : vector<8x128xf32>
    %452 = arith.divf %450, %451 : vector<8x128xf32>
    %453 = vector.extract_strided_slice %444 {offsets = [0, 128], sizes = [8, 128], strides = [1, 1]} : vector<8x256xf32> to vector<8x128xf32>
    %454 = arith.mulf %453, %429 : vector<8x128xf32>
    %455 = vector.extract_strided_slice %444 {offsets = [0, 0], sizes = [8, 128], strides = [1, 1]} : vector<8x256xf32> to vector<8x128xf32>
    %456 = arith.mulf %455, %446 : vector<8x128xf32>
    %457 = arith.addf %454, %456 : vector<8x128xf32>
    %458 = math.tanh %457 : vector<8x128xf32>
    %459 = arith.mulf %452, %458 : vector<8x128xf32>
    %c6_i32_131 = arith.constant 6 : i32
    %c8_i32_132 = arith.constant 8 : i32
    %460 = arith.muli %c6_i32_131, %c8_i32_132 : i32
    %461 = tpu.assume_multiple %460, 8 : i32
    %462 = arith.index_cast %461 : i32 to index
    %c0_133 = arith.constant 0 : index
    %463 = vector.load %arg15[%462, %c0_133] : memref<64x512xf32, #tpu.memory_space<vmem>>, vector<8x512xf32>
    %464 = arith.truncf %459 : vector<8x128xf32> to vector<8x128xbf16>
    %cst_134 = arith.constant dense<0.000000e+00> : vector<8x512xf32>
    %465 = tpu.matmul %464, %281, %cst_134 {dimension_numbers = #tpu.dot_dimension_numbers<[1], [0], [0], [1], [0, 0, 1, 1], [], []>} : vector<8x128xbf16>, vector<128x512xbf16>, vector<8x512xf32> -> vector<8x512xf32>
    %466 = arith.addf %463, %465 : vector<8x512xf32>
    %467 = vector.extract_strided_slice %466 {offsets = [0, 0], sizes = [8, 256], strides = [1, 1]} : vector<8x512xf32> to vector<8x256xf32>
    %468 = arith.negf %467 : vector<8x256xf32>
    %469 = math.exp %468 : vector<8x256xf32>
    %cst_135 = arith.constant 1.000000e+00 : f32
    %470 = vector.broadcast %cst_135 : f32 to vector<8x256xf32>
    %471 = arith.addf %470, %469 : vector<8x256xf32>
    %472 = arith.divf %470, %471 : vector<8x256xf32>
    %473 = vector.extract_strided_slice %466 {offsets = [0, 256], sizes = [8, 128], strides = [1, 1]} : vector<8x512xf32> to vector<8x128xf32>
    %474 = math.tanh %473 : vector<8x128xf32>
    %475 = vector.extract_strided_slice %466 {offsets = [0, 384], sizes = [8, 128], strides = [1, 1]} : vector<8x512xf32> to vector<8x128xf32>
    %476 = arith.negf %475 : vector<8x128xf32>
    %477 = math.exp %476 : vector<8x128xf32>
    %cst_136 = arith.constant 1.000000e+00 : f32
    %478 = vector.broadcast %cst_136 : f32 to vector<8x128xf32>
    %479 = arith.addf %478, %477 : vector<8x128xf32>
    %480 = arith.divf %478, %479 : vector<8x128xf32>
    %481 = vector.extract_strided_slice %472 {offsets = [0, 128], sizes = [8, 128], strides = [1, 1]} : vector<8x256xf32> to vector<8x128xf32>
    %482 = arith.mulf %481, %457 : vector<8x128xf32>
    %483 = vector.extract_strided_slice %472 {offsets = [0, 0], sizes = [8, 128], strides = [1, 1]} : vector<8x256xf32> to vector<8x128xf32>
    %484 = arith.mulf %483, %474 : vector<8x128xf32>
    %485 = arith.addf %482, %484 : vector<8x128xf32>
    %486 = math.tanh %485 : vector<8x128xf32>
    %487 = arith.mulf %480, %486 : vector<8x128xf32>
    %c7_i32_137 = arith.constant 7 : i32
    %c8_i32_138 = arith.constant 8 : i32
    %488 = arith.muli %c7_i32_137, %c8_i32_138 : i32
    %489 = tpu.assume_multiple %488, 8 : i32
    %490 = arith.index_cast %489 : i32 to index
    %c0_139 = arith.constant 0 : index
    %491 = vector.load %arg15[%490, %c0_139] : memref<64x512xf32, #tpu.memory_space<vmem>>, vector<8x512xf32>
    %492 = arith.truncf %487 : vector<8x128xf32> to vector<8x128xbf16>
    %cst_140 = arith.constant dense<0.000000e+00> : vector<8x512xf32>
    %493 = tpu.matmul %492, %281, %cst_140 {dimension_numbers = #tpu.dot_dimension_numbers<[1], [0], [0], [1], [0, 0, 1, 1], [], []>} : vector<8x128xbf16>, vector<128x512xbf16>, vector<8x512xf32> -> vector<8x512xf32>
    %494 = arith.addf %491, %493 : vector<8x512xf32>
    %495 = vector.extract_strided_slice %494 {offsets = [0, 0], sizes = [8, 256], strides = [1, 1]} : vector<8x512xf32> to vector<8x256xf32>
    %496 = arith.negf %495 : vector<8x256xf32>
    %497 = math.exp %496 : vector<8x256xf32>
    %cst_141 = arith.constant 1.000000e+00 : f32
    %498 = vector.broadcast %cst_141 : f32 to vector<8x256xf32>
    %499 = arith.addf %498, %497 : vector<8x256xf32>
    %500 = arith.divf %498, %499 : vector<8x256xf32>
    %501 = vector.extract_strided_slice %494 {offsets = [0, 256], sizes = [8, 128], strides = [1, 1]} : vector<8x512xf32> to vector<8x128xf32>
    %502 = math.tanh %501 : vector<8x128xf32>
    %503 = vector.extract_strided_slice %494 {offsets = [0, 384], sizes = [8, 128], strides = [1, 1]} : vector<8x512xf32> to vector<8x128xf32>
    %504 = arith.negf %503 : vector<8x128xf32>
    %505 = math.exp %504 : vector<8x128xf32>
    %cst_142 = arith.constant 1.000000e+00 : f32
    %506 = vector.broadcast %cst_142 : f32 to vector<8x128xf32>
    %507 = arith.addf %506, %505 : vector<8x128xf32>
    %508 = arith.divf %506, %507 : vector<8x128xf32>
    %509 = vector.extract_strided_slice %500 {offsets = [0, 128], sizes = [8, 128], strides = [1, 1]} : vector<8x256xf32> to vector<8x128xf32>
    %510 = arith.mulf %509, %485 : vector<8x128xf32>
    %511 = vector.extract_strided_slice %500 {offsets = [0, 0], sizes = [8, 128], strides = [1, 1]} : vector<8x256xf32> to vector<8x128xf32>
    %512 = arith.mulf %511, %502 : vector<8x128xf32>
    %513 = arith.addf %510, %512 : vector<8x128xf32>
    %514 = math.tanh %513 : vector<8x128xf32>
    %515 = arith.mulf %508, %514 : vector<8x128xf32>
    %c8_i32_143 = arith.constant 8 : i32
    %c1 = arith.constant 1 : index
    %c0_144 = arith.constant 0 : index
    %c0_145 = arith.constant 0 : index
    %516 = vector.load %arg12[%c1, %c0_144, %c0_145] : memref<2x8x128xf32, #tpu.memory_space<vmem>>, vector<1x8x128xf32>
    %517 = vector.shape_cast %516 : vector<1x8x128xf32> to vector<8x128xf32>
    %518 = vector.shape_cast %515 : vector<8x128xf32> to vector<1x8x128xf32>
    tpu.vector_store %arg12[%c1, %c0_144, %c0_145], %518 {strides = array<i32>} : memref<2x8x128xf32, #tpu.memory_space<vmem>>, vector<1x8x128xf32>,
    %c1_146 = arith.constant 1 : index
    %c0_147 = arith.constant 0 : index
    %c0_148 = arith.constant 0 : index
    %519 = vector.load %arg13[%c1_146, %c0_147, %c0_148] : memref<2x8x128xf32, #tpu.memory_space<vmem>>, vector<1x8x128xf32>
    %520 = vector.shape_cast %519 : vector<1x8x128xf32> to vector<8x128xf32>
    %521 = vector.shape_cast %513 : vector<8x128xf32> to vector<1x8x128xf32>
    tpu.vector_store %arg13[%c1_146, %c0_147, %c0_148], %521 {strides = array<i32>} : memref<2x8x128xf32, #tpu.memory_space<vmem>>, vector<1x8x128xf32>,
    %cst_149 = arith.constant 0.000000e+00 : f32
    %522 = vector.broadcast %cst_149 : f32 to vector<8x128xf32>
    %523 = arith.maximumf %515, %522 : vector<8x128xf32>
    %524 = arith.truncf %523 : vector<8x128xf32> to vector<8x128xbf16>
    %c0_150 = arith.constant 0 : index
    %c0_151 = arith.constant 0 : index
    %525 = vector.load %arg7[%c0_150, %c0_151] : memref<128x128xbf16, #tpu.memory_space<vmem>>, vector<128x128xbf16>
    %cst_152 = arith.constant dense<0.000000e+00> : vector<8x128xf32>
    %526 = tpu.matmul %524, %525, %cst_152 {dimension_numbers = #tpu.dot_dimension_numbers<[1], [0], [0], [1], [0, 0, 1, 1], [], []>} : vector<8x128xbf16>, vector<128x128xbf16>, vector<8x128xf32> -> vector<8x128xf32>
    %c0_153 = arith.constant 0 : index
    %c0_154 = arith.constant 0 : index
    %527 = vector.load %arg8[%c0_153, %c0_154] : memref<1x128xf32, #tpu.memory_space<vmem>>, vector<1x128xf32>
    %528 = vector.broadcast %527 : vector<1x128xf32> to vector<8x128xf32>
    %529 = arith.addf %526, %528 : vector<8x128xf32>
    %cst_155 = arith.constant 0.000000e+00 : f32
    %530 = vector.broadcast %cst_155 : f32 to vector<8x128xf32>
    %531 = arith.maximumf %529, %530 : vector<8x128xf32>
    %532 = arith.truncf %531 : vector<8x128xf32> to vector<8x128xbf16>
    %c0_156 = arith.constant 0 : index
    %c0_157 = arith.constant 0 : index
    %533 = vector.load %arg9[%c0_156, %c0_157] : memref<128x128xbf16, #tpu.memory_space<vmem>>, vector<128x128xbf16>
    %cst_158 = arith.constant dense<0.000000e+00> : vector<8x128xf32>
    %534 = tpu.matmul %532, %533, %cst_158 {dimension_numbers = #tpu.dot_dimension_numbers<[1], [0], [0], [1], [0, 0, 1, 1], [], []>} : vector<8x128xbf16>, vector<128x128xbf16>, vector<8x128xf32> -> vector<8x128xf32>
    %c0_159 = arith.constant 0 : index
    %c0_160 = arith.constant 0 : index
    %535 = vector.load %arg10[%c0_159, %c0_160] : memref<1x128xf32, #tpu.memory_space<vmem>>, vector<1x128xf32>
    %536 = vector.broadcast %535 : vector<1x128xf32> to vector<8x128xf32>
    %537 = arith.addf %534, %536 : vector<8x128xf32>
    %c0_161 = arith.constant 0 : index
    %c0_162 = arith.constant 0 : index
    %538 = vector.load %arg11[%c0_161, %c0_162] : memref<8x128xf32, #tpu.memory_space<vmem>>, vector<8x128xf32>
    tpu.vector_store %arg11[%c0_161, %c0_162], %537 {strides = array<i32>} : memref<8x128xf32, #tpu.memory_space<vmem>>, vector<8x128xf32>,
    return
  }
}

</mosaic_0001>

<llo_original>
// kernel: tpu_custom_call.1
$region0: #{tpu_custom_call.1}
  #allocation0 [shape = 'u32[]', space=smem, size = 0x4, offset = 0x4, fixed_abs, tag = 'smem constant byte address 0x4 - core index']
  #allocation1 [shape = 'u32[144,128]{1,0:T(1,128)}', space=vmem, size = 0x12000, scoped, tag = 'internal scratch']
  #allocation2 [shape = 'f32[8,8,128]{2,1,0:T(8,128)}', space=vmem, size = 0x8000, scoped, tag = 'scratch operand']
  #allocation3 [shape = 'f32[64,512]{1,0:T(8,128)}', space=vmem, size = 0x20000, scoped, tag = 'scratch operand']
  %s0 = inlined_call_operand.hbm [shape: bf16[64,16], index: 0, kind: input, shape index: {}]
  %s1 = inlined_call_operand.hbm [shape: bf16[16,512], index: 1, kind: input, shape index: {}]
  %s2 = inlined_call_operand.hbm [shape: bf16[128,512], index: 2, kind: input, shape index: {}]
  %s3 = inlined_call_operand.hbm [shape: f32[1,512], index: 3, kind: input, shape index: {}]
  %s4 = inlined_call_operand.hbm [shape: bf16[128,512], index: 4, kind: input, shape index: {}]
  %s5 = inlined_call_operand.hbm [shape: bf16[128,512], index: 5, kind: input, shape index: {}]
  %s6 = inlined_call_operand.hbm [shape: f32[1,512], index: 6, kind: input, shape index: {}]
  %s7 = inlined_call_operand.hbm [shape: bf16[128,128], index: 7, kind: input, shape index: {}]
  %s8 = inlined_call_operand.hbm [shape: f32[1,128], index: 8, kind: input, shape index: {}]
  %s9 = inlined_call_operand.hbm [shape: bf16[128,128], index: 9, kind: input, shape index: {}]
  %s10 = inlined_call_operand.hbm [shape: f32[1,128], index: 10, kind: input, shape index: {}]
  %s11 = inlined_call_operand.hbm [shape: f32[8,128], index: 11, kind: output, shape index: {0}]
  %s12 = inlined_call_operand.hbm [shape: f32[2,8,128], index: 12, kind: output, shape index: {1}]
  %s13 = inlined_call_operand.hbm [shape: f32[2,8,128], index: 13, kind: output, shape index: {2}]
  %14 = xla_tuple %s11, %s12, %s13
  %s15 = sld [smem:[#allocation0]]
  $region114: #{tpu_custom_call.1} parent=0
    _
  %s17 = ssub.s32 1, %s15
  %s18 = scalar_select 0, %s17, %s15
  $region1: #{tpu_custom_call.1} parent=0
    #allocation4 [shape = 'u8[16384]{0}', space=vmem, size = 0x4000, scoped, tag = 'input window, operand 0, single buffered']
    #allocation5 [shape = 's32[1]{0}', space=sflag, size = 0x4, scoped, tag = 'scoped memory for tpu_custom_call.1']
    #allocation6 [shape = 's32[1]{0}', space=sflag, size = 0x4, scoped, tag = 'scoped memory for tpu_custom_call.1']
    #allocation7 [shape = 'u8[16384]{0}', space=vmem, size = 0x4000, scoped, tag = 'input window, operand 1, single buffered']
    #allocation8 [shape = 's32[1]{0}', space=sflag, size = 0x4, scoped, tag = 'scoped memory for tpu_custom_call.1']
    #allocation9 [shape = 'u8[131072]{0}', space=vmem, size = 0x20000, scoped, tag = 'input window, operand 2, single buffered']
    #allocation10 [shape = 'u8[2048]{0}', space=vmem, size = 0x800, scoped, tag = 'input window, operand 3, single buffered']
    #allocation11 [shape = 's32[1]{0}', space=sflag, size = 0x4, scoped, tag = 'scoped memory for tpu_custom_call.1']
    #allocation12 [shape = 'u8[131072]{0}', space=vmem, size = 0x20000, scoped, tag = 'input window, operand 4, single buffered']
    #allocation13 [shape = 'u8[131072]{0}', space=vmem, size = 0x20000, scoped, tag = 'input window, operand 5, single buffered']
    #allocation14 [shape = 's32[1]{0}', space=sflag, size = 0x4, scoped, tag = 'scoped memory for tpu_custom_call.1']
    #allocation15 [shape = 'u8[2048]{0}', space=vmem, size = 0x800, scoped, tag = 'input window, operand 6, single buffered']
    #allocation16 [shape = 'u8[32768]{0}', space=vmem, size = 0x8000, scoped, tag = 'input window, operand 7, single buffered']
    #allocation17 [shape = 's32[1]{0}', space=sflag, size = 0x4, scoped, tag = 'scoped memory for tpu_custom_call.1']
    #allocation18 [shape = 'u8[512]{0}', space=vmem, size = 0x400, scoped, tag = 'input window, operand 8, single buffered']
    #allocation19 [shape = 'u8[32768]{0}', space=vmem, size = 0x8000, scoped, tag = 'input window, operand 9, single buffered']
    #allocation20 [shape = 's32[1]{0}', space=sflag, size = 0x4, scoped, tag = 'scoped memory for tpu_custom_call.1']
    #allocation21 [shape = 'u8[512]{0}', space=vmem, size = 0x400, scoped, tag = 'input window, operand 10, single buffered']
    #allocation22 [shape = 'u8[4096]{0}', space=vmem, size = 0x1000, scoped, tag = 'output window, operand 0, single buffered']
    #allocation23 [shape = 'u8[8192]{0}', space=vmem, size = 0x2000, scoped, tag = 'output window, operand 1, single buffered']
    #allocation24 [shape = 's32[1]{0}', space=sflag, size = 0x4, scoped, tag = 'scoped memory for tpu_custom_call.1']
    #allocation25 [shape = 'u8[8192]{0}', space=vmem, size = 0x2000, scoped, tag = 'output window, operand 2, single buffered']
    %19 = vsyncpa [#allocation5], 0
    %20 = vsyncpa [#allocation8], 0
    %21 = vsyncpa [#allocation11], 0
    %22 = vsyncpa [#allocation14], 0
    %23 = vsyncpa [#allocation17], 0
    %24 = vsyncpa [#allocation20], 0
    %25 = vsyncpa [#allocation6], 0
    %26 = vsyncpa [#allocation24], 0
    // Predicated region
    $region2: #{tpu_custom_call.1} parent=1 // pred_check
      _
    $region3: #{tpu_custom_call.1} parent=1 // pred_check_branch
      %28 = sbr.rel (0) target = $region5
    $region4: #{tpu_custom_call.1} parent=1 // pred_region
      %s30 = ssub.s32 512, 512
      %31 = vsyncadd [#allocation5], %s30
      %s32 = sshll.u32 [#allocation4], 4
      %s33 = int_to_ptr.vmem [resolvable:$true] %s32
      %38 = dma.hbm_to_vmem [thread:$0]  %s0, 512, %s33, [#allocation5], 64, 64, 4
    $region5: #{tpu_custom_call.1} parent=1 // pred_fallthru
      _
    // Predicated region
    $region6: #{tpu_custom_call.1} parent=1 // pred_check
      _
    $region7: #{tpu_custom_call.1} parent=1 // pred_check_branch
      %40 = sbr.rel (0) target = $region9
    $region8: #{tpu_custom_call.1} parent=1 // pred_region
      %s42 = ssub.s32 512, 512
      %43 = vsyncadd [#allocation8], %s42
      %s44 = sshll.u32 [#allocation7], 4
      %s45 = int_to_ptr.vmem [resolvable:$true] %s44
      %50 = dma.hbm_to_vmem [thread:$0]  %s1, 512, %s45, [#allocation8], 256, 256, 16
    $region9: #{tpu_custom_call.1} parent=1 // pred_fallthru
      _
    // Predicated region
    $region10: #{tpu_custom_call.1} parent=1 // pred_check
      _
    $region11: #{tpu_custom_call.1} parent=1 // pred_check_branch
      %52 = sbr.rel (0) target = $region13
    $region12: #{tpu_custom_call.1} parent=1 // pred_region
      %s54 = ssub.s32 4096, 4096
      %55 = vsyncadd [#allocation8], %s54
      %s56 = sshll.u32 [#allocation9], 4
      %s57 = int_to_ptr.vmem [resolvable:$true] %s56
      %62 = dma.hbm_to_vmem [thread:$0]  %s2, 4096, %s57, [#allocation8], 256, 256, 16
    $region13: #{tpu_custom_call.1} parent=1 // pred_fallthru
      _
    // Predicated region
    $region14: #{tpu_custom_call.1} parent=1 // pred_check
      _
    $region15: #{tpu_custom_call.1} parent=1 // pred_check_branch
      %64 = sbr.rel (0) target = $region17
    $region16: #{tpu_custom_call.1} parent=1 // pred_region
      %s66 = ssub.s32 64, 64
      %67 = vsyncadd [#allocation11], %s66
      %s69 = sshll.u32 [#allocation10], 4
      %s70 = int_to_ptr.vmem [resolvable:$true] %s69
      %72 = dma.hbm_to_vmem [thread:$0]  %s3, 64, %s70, [#allocation11]
    $region17: #{tpu_custom_call.1} parent=1 // pred_fallthru
      _
    // Predicated region
    $region18: #{tpu_custom_call.1} parent=1 // pred_check
      _
    $region19: #{tpu_custom_call.1} parent=1 // pred_check_branch
      %74 = sbr.rel (0) target = $region21
    $region20: #{tpu_custom_call.1} parent=1 // pred_region
      %s76 = ssub.s32 4096, 4096
      %77 = vsyncadd [#allocation11], %s76
      %s78 = sshll.u32 [#allocation12], 4
      %s79 = int_to_ptr.vmem [resolvable:$true] %s78
      %84 = dma.hbm_to_vmem [thread:$0]  %s4, 4096, %s79, [#allocation11], 256, 256, 16
    $region21: #{tpu_custom_call.1} parent=1 // pred_fallthru
      _
    // Predicated region
    $region22: #{tpu_custom_call.1} parent=1 // pred_check
      _
    $region23: #{tpu_custom_call.1} parent=1 // pred_check_branch
      %86 = sbr.rel (0) target = $region25
    $region24: #{tpu_custom_call.1} parent=1 // pred_region
      %s88 = ssub.s32 4096, 4096
      %89 = vsyncadd [#allocation14], %s88
      %s90 = sshll.u32 [#allocation13], 4
      %s91 = int_to_ptr.vmem [resolvable:$true] %s90
      %96 = dma.hbm_to_vmem [thread:$0]  %s5, 4096, %s91, [#allocation14], 256, 256, 16
    $region25: #{tpu_custom_call.1} parent=1 // pred_fallthru
      _
    // Predicated region
    $region26: #{tpu_custom_call.1} parent=1 // pred_check
      _
    $region27: #{tpu_custom_call.1} parent=1 // pred_check_branch
      %98 = sbr.rel (0) target = $region29
    $region28: #{tpu_custom_call.1} parent=1 // pred_region
      %s100 = ssub.s32 64, 64
      %101 = vsyncadd [#allocation14], %s100
      %s103 = sshll.u32 [#allocation15], 4
      %s104 = int_to_ptr.vmem [resolvable:$true] %s103
      %106 = dma.hbm_to_vmem [thread:$0]  %s6, 64, %s104, [#allocation14]
    $region29: #{tpu_custom_call.1} parent=1 // pred_fallthru
      _
    // Predicated region
    $region30: #{tpu_custom_call.1} parent=1 // pred_check
      _
    $region31: #{tpu_custom_call.1} parent=1 // pred_check_branch
      %108 = sbr.rel (0) target = $region33
    $region32: #{tpu_custom_call.1} parent=1 // pred_region
      %s110 = ssub.s32 1024, 1024
      %111 = vsyncadd [#allocation17], %s110
      %s112 = sshll.u32 [#allocation16], 4
      %s113 = int_to_ptr.vmem [resolvable:$true] %s112
      %118 = dma.hbm_to_vmem [thread:$0]  %s7, 1024, %s113, [#allocation17], 64, 64, 4
    $region33: #{tpu_custom_call.1} parent=1 // pred_fallthru
      _
    // Predicated region
    $region34: #{tpu_custom_call.1} parent=1 // pred_check
      _
    $region35: #{tpu_custom_call.1} parent=1 // pred_check_branch
      %120 = sbr.rel (0) target = $region37
    $region36: #{tpu_custom_call.1} parent=1 // pred_region
      %s122 = ssub.s32 16, 16
      %123 = vsyncadd [#allocation17], %s122
      %s125 = sshll.u32 [#allocation18], 4
      %s126 = int_to_ptr.vmem [resolvable:$true] %s125
      %128 = dma.hbm_to_vmem [thread:$0]  %s8, 16, %s126, [#allocation17]
    $region37: #{tpu_custom_call.1} parent=1 // pred_fallthru
      _
    // Predicated region
    $region38: #{tpu_custom_call.1} parent=1 // pred_check
      _
    $region39: #{tpu_custom_call.1} parent=1 // pred_check_branch
      %130 = sbr.rel (0) target = $region41
    $region40: #{tpu_custom_call.1} parent=1 // pred_region
      %s132 = ssub.s32 1024, 1024
      %133 = vsyncadd [#allocation20], %s132
      %s134 = sshll.u32 [#allocation19], 4
      %s135 = int_to_ptr.vmem [resolvable:$true] %s134
      %140 = dma.hbm_to_vmem [thread:$0]  %s9, 1024, %s135, [#allocation20], 64, 64, 4
    $region41: #{tpu_custom_call.1} parent=1 // pred_fallthru
      _
    // Predicated region
    $region42: #{tpu_custom_call.1} parent=1 // pred_check
      _
    $region43: #{tpu_custom_call.1} parent=1 // pred_check_branch
      %142 = sbr.rel (0) target = $region45
    $region44: #{tpu_custom_call.1} parent=1 // pred_region
      %s144 = ssub.s32 16, 16
      %145 = vsyncadd [#allocation20], %s144
      %s147 = sshll.u32 [#allocation21], 4
      %s148 = int_to_ptr.vmem [resolvable:$true] %s147
      %150 = dma.hbm_to_vmem [thread:$0]  %s10, 16, %s148, [#allocation20]
    $region45: #{tpu_custom_call.1} parent=1 // pred_fallthru
      _
    // Predicated region
    $region46: #{tpu_custom_call.1} parent=1 // pred_check
      _
    $region47: #{tpu_custom_call.1} parent=1 // pred_check_branch
      %152 = sbr.rel (0) target = $region49
    $region48: #{tpu_custom_call.1} parent=1 // pred_region
      %153 = dma.done [#allocation5], 512
    $region49: #{tpu_custom_call.1} parent=1 // pred_fallthru
      _
    // Predicated region
    $region50: #{tpu_custom_call.1} parent=1 // pred_check
      _
    $region51: #{tpu_custom_call.1} parent=1 // pred_check_branch
      %155 = sbr.rel (0) target = $region53
    $region52: #{tpu_custom_call.1} parent=1 // pred_region
      %156 = dma.done [#allocation8], 512
    $region53: #{tpu_custom_call.1} parent=1 // pred_fallthru
      _
    // Predicated region
    $region54: #{tpu_custom_call.1} parent=1 // pred_check
      _
    $region55: #{tpu_custom_call.1} parent=1 // pred_check_branch
      %158 = sbr.rel (0) target = $region57
    $region56: #{tpu_custom_call.1} parent=1 // pred_region
      %159 = dma.done [#allocation8], 4096
    $region57: #{tpu_custom_call.1} parent=1 // pred_fallthru
      _
    // Predicated region
    $region58: #{tpu_custom_call.1} parent=1 // pred_check
      _
    $region59: #{tpu_custom_call.1} parent=1 // pred_check_branch
      %161 = sbr.rel (0) target = $region61
    $region60: #{tpu_custom_call.1} parent=1 // pred_region
      %162 = dma.done [#allocation11], 64
    $region61: #{tpu_custom_call.1} parent=1 // pred_fallthru
      _
    // Predicated region
    $region62: #{tpu_custom_call.1} parent=1 // pred_check
      _
    $region63: #{tpu_custom_call.1} parent=1 // pred_check_branch
      %164 = sbr.rel (0) target = $region65
    $region64: #{tpu_custom_call.1} parent=1 // pred_region
      %165 = dma.done [#allocation11], 4096
    $region65: #{tpu_custom_call.1} parent=1 // pred_fallthru
      _
    // Predicated region
    $region66: #{tpu_custom_call.1} parent=1 // pred_check
      _
    $region67: #{tpu_custom_call.1} parent=1 // pred_check_branch
      %167 = sbr.rel (0) target = $region69
    $region68: #{tpu_custom_call.1} parent=1 // pred_region
      %168 = dma.done [#allocation14], 4096
    $region69: #{tpu_custom_call.1} parent=1 // pred_fallthru
      _
    // Predicated region
    $region70: #{tpu_custom_call.1} parent=1 // pred_check
      _
    $region71: #{tpu_custom_call.1} parent=1 // pred_check_branch
      %170 = sbr.rel (0) target = $region73
    $region72: #{tpu_custom_call.1} parent=1 // pred_region
      %171 = dma.done [#allocation14], 64
    $region73: #{tpu_custom_call.1} parent=1 // pred_fallthru
      _
    // Predicated region
    $region74: #{tpu_custom_call.1} parent=1 // pred_check
      _
    $region75: #{tpu_custom_call.1} parent=1 // pred_check_branch
      %173 = sbr.rel (0) target = $region77
    $region76: #{tpu_custom_call.1} parent=1 // pred_region
      %174 = dma.done [#allocation17], 1024
    $region77: #{tpu_custom_call.1} parent=1 // pred_fallthru
      _
    // Predicated region
    $region78: #{tpu_custom_call.1} parent=1 // pred_check
      _
    $region79: #{tpu_custom_call.1} parent=1 // pred_check_branch
      %176 = sbr.rel (0) target = $region81
    $region80: #{tpu_custom_call.1} parent=1 // pred_region
      %177 = dma.done [#allocation17], 16
    $region81: #{tpu_custom_call.1} parent=1 // pred_fallthru
      _
    // Predicated region
    $region82: #{tpu_custom_call.1} parent=1 // pred_check
      _
    $region83: #{tpu_custom_call.1} parent=1 // pred_check_branch
      %179 = sbr.rel (0) target = $region85
    $region84: #{tpu_custom_call.1} parent=1 // pred_region
      %180 = dma.done [#allocation20], 1024
    $region85: #{tpu_custom_call.1} parent=1 // pred_fallthru
      _
    // Predicated region
    $region86: #{tpu_custom_call.1} parent=1 // pred_check
      _
    $region87: #{tpu_custom_call.1} parent=1 // pred_check_branch
      %182 = sbr.rel (0) target = $region89
    $region88: #{tpu_custom_call.1} parent=1 // pred_region
      %183 = dma.done [#allocation20], 16
    $region89: #{tpu_custom_call.1} parent=1 // pred_fallthru
      _
    %v185 = vld [vmem:[#allocation7] sm:$0xff]
    %v186 = vld [vmem:[#allocation7 + $0x8] sm:$0xff]
    %v187 = vld [vmem:[#allocation7 + $0x10] sm:$0xff]
    %v188 = vld [vmem:[#allocation7 + $0x18] sm:$0xff]
    %v189 = vld [vmem:[#allocation9] sm:$0xff]
    %v190 = vld [vmem:[#allocation9 + $0x8] sm:$0xff]
    %v191 = vld [vmem:[#allocation9 + $0x10] sm:$0xff]
    %v192 = vld [vmem:[#allocation9 + $0x18] sm:$0xff]
    %v193 = vld [vmem:[#allocation9 + $0x20] sm:$0xff]
    %v194 = vld [vmem:[#allocation9 + $0x28] sm:$0xff]
    %v195 = vld [vmem:[#allocation9 + $0x30] sm:$0xff]
    %v196 = vld [vmem:[#allocation9 + $0x38] sm:$0xff]
    %v197 = vld [vmem:[#allocation9 + $0x40] sm:$0xff]
    %v198 = vld [vmem:[#allocation9 + $0x48] sm:$0xff]
    %v199 = vld [vmem:[#allocation9 + $0x50] sm:$0xff]
    %v200 = vld [vmem:[#allocation9 + $0x58] sm:$0xff]
    %v201 = vld [vmem:[#allocation9 + $0x60] sm:$0xff]
    %v202 = vld [vmem:[#allocation9 + $0x68] sm:$0xff]
    %v203 = vld [vmem:[#allocation9 + $0x70] sm:$0xff]
    %v204 = vld [vmem:[#allocation9 + $0x78] sm:$0xff]
    %v205 = vld [vmem:[#allocation9 + $0x80] sm:$0xff]
    %v206 = vld [vmem:[#allocation9 + $0x88] sm:$0xff]
    %v207 = vld [vmem:[#allocation9 + $0x90] sm:$0xff]
    %v208 = vld [vmem:[#allocation9 + $0x98] sm:$0xff]
    %v209 = vld [vmem:[#allocation9 + $0xa0] sm:$0xff]
    %v210 = vld [vmem:[#allocation9 + $0xa8] sm:$0xff]
    %v211 = vld [vmem:[#allocation9 + $0xb0] sm:$0xff]
    %v212 = vld [vmem:[#allocation9 + $0xb8] sm:$0xff]
    %v213 = vld [vmem:[#allocation9 + $0xc0] sm:$0xff]
    %v214 = vld [vmem:[#allocation9 + $0xc8] sm:$0xff]
    %v215 = vld [vmem:[#allocation9 + $0xd0] sm:$0xff]
    %v216 = vld [vmem:[#allocation9 + $0xd8] sm:$0xff]
    %v217 = vld [vmem:[#allocation9 + $0xe0] sm:$0xff]
    %v218 = vld [vmem:[#allocation9 + $0xe8] sm:$0xff]
    %v219 = vld [vmem:[#allocation9 + $0xf0] sm:$0xff]
    %v220 = vld [vmem:[#allocation9 + $0xf8] sm:$0xff]
    %v221 = vld [vmem:[#allocation10] sm:$0xf]
    %v222 = vld [vmem:[#allocation4] sm:$0xf]
    %v223 = vld [vmem:[#allocation4 + $0x4] sm:$0xf]
    %v224 = vld [vmem:[#allocation4 + $0x8] sm:$0xf]
    %v225 = vld [vmem:[#allocation4 + $0xc] sm:$0xf]
    %v226 = vld [vmem:[#allocation4 + $0x10] sm:$0xf]
    %v227 = vld [vmem:[#allocation4 + $0x14] sm:$0xf]
    %v228 = vld [vmem:[#allocation4 + $0x18] sm:$0xf]
    %v229 = vld [vmem:[#allocation4 + $0x1c] sm:$0xf]
    %v231 = vlaneseq
    %v232 = vshrl.u32 %v231, 7
    %v233 = vsub.s32 0, %v232
    %v234 = vrot.slane %v221, %v233
    %v235 = vlaneseq
    %v236 = vshrl.u32 %v235, 7
    %v237 = vsub.s32 1, %v236
    %v238 = vrot.slane %v221, %v237
    %v239 = vlaneseq
    %v240 = vshrl.u32 %v239, 7
    %v241 = vsub.s32 2, %v240
    %v242 = vrot.slane %v221, %v241
    %v243 = vlaneseq
    %v244 = vshrl.u32 %v243, 7
    %v245 = vsub.s32 3, %v244
    %v246 = vrot.slane %v221, %v245
    %v259 = vunpack.c.l.b16 %v222
    %v260 = vunpack.c.l.b16 %v223
    %v261 = vunpack.c.l.b16 %v224
    %v262 = vunpack.c.l.b16 %v225
    %v263 = vunpack.c.l.b16 %v226
    %v264 = vunpack.c.l.b16 %v227
    %v265 = vunpack.c.l.b16 %v228
    %v266 = vunpack.c.l.b16 %v229
    %v267 = vpack.c.b16 %v260, %v259
    %v268 = vpack.c.b16 %v262, %v261
    %v269 = vpack.c.b16 %v264, %v263
    %v270 = vpack.c.b16 %v266, %v265
    %v275 = vunpack.c.l.b16 %v185
    %v276 = vunpack.c.h.b16 %v185
    %v277 = vunpack.c.l.b16 %v186
    %v278 = vunpack.c.h.b16 %v186
    %v279 = vunpack.c.l.b16 %v187
    %v280 = vunpack.c.h.b16 %v187
    %v281 = vunpack.c.l.b16 %v188
    %v282 = vunpack.c.h.b16 %v188
    %v283 = vpack.c.b16 %v279, %v275
    %v284 = vpack.c.b16 %v280, %v276
    %v285 = vpack.c.b16 %v281, %v277
    %v286 = vpack.c.b16 %v282, %v278
    %vm291 = vcmask 130048
    %v293 = vsel %vm291, %v267, 0
    %v296 = vsel %vm291, %v268, 0
    %v299 = vsel %vm291, %v269, 0
    %v302 = vsel %vm291, %v270, 0
    %304 = vmatprep.subr.bf16.mxu0 %v284
    %305 = vmatpush1.bf16.msra.mxu0 %v283
    %306 = vmatprep.subr.bf16.mxu0 0
    %307 = vmatpush1.bf16.msra.mxu0 0
    %308 = vmatprep.subr.bf16.mxu0 0
    %309 = vmatpush1.bf16.msra.mxu0 0
    %310 = vmatprep.subr.bf16.mxu0 0
    %311 = vmatpush1.bf16.msra.mxu0 0
    %312 = vmatprep.subr.bf16.mxu0 0
    %313 = vmatpush1.bf16.msra.mxu0 0
    %314 = vmatprep.subr.bf16.mxu0 0
    %315 = vmatpush1.bf16.msra.mxu0 0
    %316 = vmatprep.subr.bf16.mxu0 0
    %317 = vmatpush1.bf16.msra.mxu0 0
    %318 = vmatprep.subr.bf16.mxu0 0
    %319 = vmatpush1.bf16.msra.mxu0 0
    %320 = vmatprep.subr.bf16.mxu0 0
    %321 = vmatpush1.bf16.msra.mxu0 0
    %322 = vmatprep.subr.bf16.mxu0 0
    %323 = vmatpush1.bf16.msra.mxu0 0
    %324 = vmatprep.subr.bf16.mxu0 0
    %325 = vmatpush1.bf16.msra.mxu0 0
    %326 = vmatprep.subr.bf16.mxu0 0
    %327 = vmatpush1.bf16.msra.mxu0 0
    %328 = vmatprep.subr.bf16.mxu0 0
    %329 = vmatpush1.bf16.msra.mxu0 0
    %330 = vmatprep.subr.bf16.mxu0 0
    %331 = vmatpush1.bf16.msra.mxu0 0
    %332 = vmatprep.subr.bf16.mxu0 0
    %333 = vmatpush1.bf16.msra.mxu0 0
    %334 = vmatprep.subr.bf16.mxu0 0
    %335 = vmatpush1.bf16.msra.mxu0 0
    %336 = vmatprep.mubr.bf16.mxu0 0
    %337 = vmatmul.mubr.bf16.gmra.mrb[0].mxu0 %v293
    %v338 = vpop.f32.mrb[0].mxu0
    %v339 = vadd.f32 %v234, %v338
    %v340 = vpop.f32.mrb[0].mxu0
    %v341 = vadd.f32 %v238, %v340
    %v342 = vpop.f32.mrb[0].mxu0
    %v343 = vadd.f32 %v234, %v342
    %v344 = vpop.f32.mrb[0].mxu0
    %v345 = vadd.f32 %v238, %v344
    %346 = vmatprep.mubr.bf16.mxu0 0
    %347 = vmatmul.mubr.bf16.gmra.mrb[0].mxu0 %v296
    %v348 = vpop.f32.mrb[0].mxu0
    %v349 = vadd.f32 %v234, %v348
    %v350 = vpop.f32.mrb[0].mxu0
    %v351 = vadd.f32 %v238, %v350
    %v352 = vpop.f32.mrb[0].mxu0
    %v353 = vadd.f32 %v234, %v352
    %v354 = vpop.f32.mrb[0].mxu0
    %v355 = vadd.f32 %v238, %v354
    %356 = vmatprep.mubr.bf16.mxu0 0
    %357 = vmatmul.mubr.bf16.gmra.mrb[0].mxu0 %v299
    %v358 = vpop.f32.mrb[0].mxu0
    %v359 = vadd.f32 %v234, %v358
    %v360 = vpop.f32.mrb[0].mxu0
    %v361 = vadd.f32 %v238, %v360
    %v362 = vpop.f32.mrb[0].mxu0
    %v363 = vadd.f32 %v234, %v362
    %v364 = vpop.f32.mrb[0].mxu0
    %v365 = vadd.f32 %v238, %v364
    %366 = vmatprep.mubr.bf16.mxu0 0
    %367 = vmatmul.mubr.bf16.gmra.mrb[0].mxu0 %v302
    %v368 = vpop.f32.mrb[0].mxu0
    %v369 = vadd.f32 %v234, %v368
    %v370 = vpop.f32.mrb[0].mxu0
    %v371 = vadd.f32 %v238, %v370
    %v372 = vpop.f32.mrb[0].mxu0
    %v373 = vadd.f32 %v234, %v372
    %v374 = vpop.f32.mrb[0].mxu0
    %v375 = vadd.f32 %v238, %v374
    %376 = vdwg.mxu0
    %377 = vmatprep.subr.bf16.mxu0 %v286
    %378 = vmatpush1.bf16.msra.mxu0 %v285
    %379 = vmatprep.subr.bf16.mxu0 0
    %380 = vmatpush1.bf16.msra.mxu0 0
    %381 = vmatprep.subr.bf16.mxu0 0
    %382 = vmatpush1.bf16.msra.mxu0 0
    %383 = vmatprep.subr.bf16.mxu0 0
    %384 = vmatpush1.bf16.msra.mxu0 0
    %385 = vmatprep.subr.bf16.mxu0 0
    %386 = vmatpush1.bf16.msra.mxu0 0
    %387 = vmatprep.subr.bf16.mxu0 0
    %388 = vmatpush1.bf16.msra.mxu0 0
    %389 = vmatprep.subr.bf16.mxu0 0
    %390 = vmatpush1.bf16.msra.mxu0 0
    %391 = vmatprep.subr.bf16.mxu0 0
    %392 = vmatpush1.bf16.msra.mxu0 0
    %393 = vmatprep.subr.bf16.mxu0 0
    %394 = vmatpush1.bf16.msra.mxu0 0
    %395 = vmatprep.subr.bf16.mxu0 0
    %396 = vmatpush1.bf16.msra.mxu0 0
    %397 = vmatprep.subr.bf16.mxu0 0
    %398 = vmatpush1.bf16.msra.mxu0 0
    %399 = vmatprep.subr.bf16.mxu0 0
    %400 = vmatpush1.bf16.msra.mxu0 0
    %401 = vmatprep.subr.bf16.mxu0 0
    %402 = vmatpush1.bf16.msra.mxu0 0
    %403 = vmatprep.subr.bf16.mxu0 0
    %404 = vmatpush1.bf16.msra.mxu0 0
    %405 = vmatprep.subr.bf16.mxu0 0
    %406 = vmatpush1.bf16.msra.mxu0 0
    %407 = vmatprep.subr.bf16.mxu0 0
    %408 = vmatpush1.bf16.msra.mxu0 0
    %409 = vmatprep.mubr.bf16.mxu0 0
    %410 = vmatmul.mubr.bf16.gmra.mrb[0].mxu0 %v293
    %v411 = vpop.f32.mrb[0].mxu0
    %v412 = vadd.f32 %v242, %v411
    %v413 = vpop.f32.mrb[0].mxu0
    %v414 = vadd.f32 %v246, %v413
    %v415 = vpop.f32.mrb[0].mxu0
    %v416 = vadd.f32 %v242, %v415
    %v417 = vpop.f32.mrb[0].mxu0
    %v418 = vadd.f32 %v246, %v417
    %419 = vmatprep.mubr.bf16.mxu0 0
    %420 = vmatmul.mubr.bf16.gmra.mrb[0].mxu0 %v296
    %v421 = vpop.f32.mrb[0].mxu0
    %v422 = vadd.f32 %v242, %v421
    %v423 = vpop.f32.mrb[0].mxu0
    %v424 = vadd.f32 %v246, %v423
    %v425 = vpop.f32.mrb[0].mxu0
    %v426 = vadd.f32 %v242, %v425
    %v427 = vpop.f32.mrb[0].mxu0
    %v428 = vadd.f32 %v246, %v427
    %429 = vmatprep.mubr.bf16.mxu0 0
    %430 = vmatmul.mubr.bf16.gmra.mrb[0].mxu0 %v299
    %v431 = vpop.f32.mrb[0].mxu0
    %v432 = vadd.f32 %v242, %v431
    %v433 = vpop.f32.mrb[0].mxu0
    %v434 = vadd.f32 %v246, %v433
    %v435 = vpop.f32.mrb[0].mxu0
    %v436 = vadd.f32 %v242, %v435
    %v437 = vpop.f32.mrb[0].mxu0
    %v438 = vadd.f32 %v246, %v437
    %439 = vmatprep.mubr.bf16.mxu0 0
    %440 = vmatmul.mubr.bf16.gmra.mrb[0].mxu0 %v302
    %v441 = vpop.f32.mrb[0].mxu0
    %v442 = vadd.f32 %v242, %v441
    %v443 = vpop.f32.mrb[0].mxu0
    %v444 = vadd.f32 %v246, %v443
    %v445 = vpop.f32.mrb[0].mxu0
    %v446 = vadd.f32 %v242, %v445
    %v447 = vpop.f32.mrb[0].mxu0
    %v448 = vadd.f32 %v246, %v447
    %449 = vdwg.mxu0
    %450 = vst [vmem:[#allocation3] sm:$0xff] %v339
    %451 = vst [vmem:[#allocation3 + $0x8] sm:$0xff] %v341
    %452 = vst [vmem:[#allocation3 + $0x10] sm:$0xff] %v412
    %453 = vst [vmem:[#allocation3 + $0x18] sm:$0xff] %v414
    %454 = vst [vmem:[#allocation3 + $0x20] sm:$0xff] %v343
    %455 = vst [vmem:[#allocation3 + $0x28] sm:$0xff] %v345
    %456 = vst [vmem:[#allocation3 + $0x30] sm:$0xff] %v416
    %457 = vst [vmem:[#allocation3 + $0x38] sm:$0xff] %v418
    %458 = vst [vmem:[#allocation3 + $0x40] sm:$0xff] %v349
    %459 = vst [vmem:[#allocation3 + $0x48] sm:$0xff] %v351
    %460 = vst [vmem:[#allocation3 + $0x50] sm:$0xff] %v422
    %461 = vst [vmem:[#allocation3 + $0x58] sm:$0xff] %v424
    %462 = vst [vmem:[#allocation3 + $0x60] sm:$0xff] %v353
    %463 = vst [vmem:[#allocation3 + $0x68] sm:$0xff] %v355
    %464 = vst [vmem:[#allocation3 + $0x70] sm:$0xff] %v426
    %465 = vst [vmem:[#allocation3 + $0x78] sm:$0xff] %v428
    %466 = vst [vmem:[#allocation3 + $0x80] sm:$0xff] %v359
    %467 = vst [vmem:[#allocation3 + $0x88] sm:$0xff] %v361
    %468 = vst [vmem:[#allocation3 + $0x90] sm:$0xff] %v432
    %469 = vst [vmem:[#allocation3 + $0x98] sm:$0xff] %v434
    %470 = vst [vmem:[#allocation3 + $0xa0] sm:$0xff] %v363
    %471 = vst [vmem:[#allocation3 + $0xa8] sm:$0xff] %v365
    %472 = vst [vmem:[#allocation3 + $0xb0] sm:$0xff] %v436
    %473 = vst [vmem:[#allocation3 + $0xb8] sm:$0xff] %v438
    %474 = vst [vmem:[#allocation3 + $0xc0] sm:$0xff] %v369
    %475 = vst [vmem:[#allocation3 + $0xc8] sm:$0xff] %v371
    %476 = vst [vmem:[#allocation3 + $0xd0] sm:$0xff] %v442
    %477 = vst [vmem:[#allocation3 + $0xd8] sm:$0xff] %v444
    %478 = vst [vmem:[#allocation3 + $0xe0] sm:$0xff] %v373
    %479 = vst [vmem:[#allocation3 + $0xe8] sm:$0xff] %v375
    %480 = vst [vmem:[#allocation3 + $0xf0] sm:$0xff] %v446
    %481 = vst [vmem:[#allocation3 + $0xf8] sm:$0xff] %v448
    %s482 = smul.u32 0, 4
    %s483 = smul.addr %s482, 8
    %s484 = scalar_lea.vmem [#allocation3], %s483
    %v485 = vld [vmem:[%s484] sm:$0xff]
    %v486 = vld [vmem:[%s484 + $0x8] sm:$0xff]
    %v487 = vld [vmem:[%s484 + $0x10] sm:$0xff]
    %v488 = vld [vmem:[%s484 + $0x18] sm:$0xff]
    %v521 = vunpack.c.l.b16 %v189
    %v522 = vunpack.c.h.b16 %v189
    %v523 = vunpack.c.l.b16 %v190
    %v524 = vunpack.c.h.b16 %v190
    %v525 = vunpack.c.l.b16 %v191
    %v526 = vunpack.c.h.b16 %v191
    %v527 = vunpack.c.l.b16 %v192
    %v528 = vunpack.c.h.b16 %v192
    %v529 = vunpack.c.l.b16 %v193
    %v530 = vunpack.c.h.b16 %v193
    %v531 = vunpack.c.l.b16 %v194
    %v532 = vunpack.c.h.b16 %v194
    %v533 = vunpack.c.l.b16 %v195
    %v534 = vunpack.c.h.b16 %v195
    %v535 = vunpack.c.l.b16 %v196
    %v536 = vunpack.c.h.b16 %v196
    %v537 = vunpack.c.l.b16 %v197
    %v538 = vunpack.c.h.b16 %v197
    %v539 = vunpack.c.l.b16 %v198
    %v540 = vunpack.c.h.b16 %v198
    %v541 = vunpack.c.l.b16 %v199
    %v542 = vunpack.c.h.b16 %v199
    %v543 = vunpack.c.l.b16 %v200
    %v544 = vunpack.c.h.b16 %v200
    %v545 = vunpack.c.l.b16 %v201
    %v546 = vunpack.c.h.b16 %v201
    %v547 = vunpack.c.l.b16 %v202
    %v548 = vunpack.c.h.b16 %v202
    %v549 = vunpack.c.l.b16 %v203
    %v550 = vunpack.c.h.b16 %v203
    %v551 = vunpack.c.l.b16 %v204
    %v552 = vunpack.c.h.b16 %v204
    %v553 = vunpack.c.l.b16 %v205
    %v554 = vunpack.c.h.b16 %v205
    %v555 = vunpack.c.l.b16 %v206
    %v556 = vunpack.c.h.b16 %v206
    %v557 = vunpack.c.l.b16 %v207
    %v558 = vunpack.c.h.b16 %v207
    %v559 = vunpack.c.l.b16 %v208
    %v560 = vunpack.c.h.b16 %v208
    %v561 = vunpack.c.l.b16 %v209
    %v562 = vunpack.c.h.b16 %v209
    %v563 = vunpack.c.l.b16 %v210
    %v564 = vunpack.c.h.b16 %v210
    %v565 = vunpack.c.l.b16 %v211
    %v566 = vunpack.c.h.b16 %v211
    %v567 = vunpack.c.l.b16 %v212
    %v568 = vunpack.c.h.b16 %v212
    %v569 = vunpack.c.l.b16 %v213
    %v570 = vunpack.c.h.b16 %v213
    %v571 = vunpack.c.l.b16 %v214
    %v572 = vunpack.c.h.b16 %v214
    %v573 = vunpack.c.l.b16 %v215
    %v574 = vunpack.c.h.b16 %v215
    %v575 = vunpack.c.l.b16 %v216
    %v576 = vunpack.c.h.b16 %v216
    %v577 = vunpack.c.l.b16 %v217
    %v578 = vunpack.c.h.b16 %v217
    %v579 = vunpack.c.l.b16 %v218
    %v580 = vunpack.c.h.b16 %v218
    %v581 = vunpack.c.l.b16 %v219
    %v582 = vunpack.c.h.b16 %v219
    %v583 = vunpack.c.l.b16 %v220
    %v584 = vunpack.c.h.b16 %v220
    %v585 = vpack.c.b16 %v525, %v521
    %v586 = vpack.c.b16 %v526, %v522
    %v587 = vpack.c.b16 %v527, %v523
    %v588 = vpack.c.b16 %v528, %v524
    %v589 = vpack.c.b16 %v533, %v529
    %v590 = vpack.c.b16 %v534, %v530
    %v591 = vpack.c.b16 %v535, %v531
    %v592 = vpack.c.b16 %v536, %v532
    %v593 = vpack.c.b16 %v541, %v537
    %v594 = vpack.c.b16 %v542, %v538
    %v595 = vpack.c.b16 %v543, %v539
    %v596 = vpack.c.b16 %v544, %v540
    %v597 = vpack.c.b16 %v549, %v545
    %v598 = vpack.c.b16 %v550, %v546
    %v599 = vpack.c.b16 %v551, %v547
    %v600 = vpack.c.b16 %v552, %v548
    %v601 = vpack.c.b16 %v557, %v553
    %v602 = vpack.c.b16 %v558, %v554
    %v603 = vpack.c.b16 %v559, %v555
    %v604 = vpack.c.b16 %v560, %v556
    %v605 = vpack.c.b16 %v565, %v561
    %v606 = vpack.c.b16 %v566, %v562
    %v607 = vpack.c.b16 %v567, %v563
    %v608 = vpack.c.b16 %v568, %v564
    %v609 = vpack.c.b16 %v573, %v569
    %v610 = vpack.c.b16 %v574, %v570
    %v611 = vpack.c.b16 %v575, %v571
    %v612 = vpack.c.b16 %v576, %v572
    %v613 = vpack.c.b16 %v581, %v577
    %v614 = vpack.c.b16 %v582, %v578
    %v615 = vpack.c.b16 %v583, %v579
    %v616 = vpack.c.b16 %v584, %v580
    %649 = vmatprep.subr.bf16.mxu0 %v586
    %650 = vmatpush1.bf16.msra.mxu0 %v585
    %651 = vmatprep.subr.bf16.mxu0 %v590
    %652 = vmatpush1.bf16.msra.mxu0 %v589
    %653 = vmatprep.subr.bf16.mxu0 %v594
    %654 = vmatpush1.bf16.msra.mxu0 %v593
    %655 = vmatprep.subr.bf16.mxu0 %v598
    %656 = vmatpush1.bf16.msra.mxu0 %v597
    %657 = vmatprep.subr.bf16.mxu0 %v602
    %658 = vmatpush1.bf16.msra.mxu0 %v601
    %659 = vmatprep.subr.bf16.mxu0 %v606
    %660 = vmatpush1.bf16.msra.mxu0 %v605
    %661 = vmatprep.subr.bf16.mxu0 %v610
    %662 = vmatpush1.bf16.msra.mxu0 %v609
    %663 = vmatprep.subr.bf16.mxu0 %v614
    %664 = vmatpush1.bf16.msra.mxu0 %v613
    %665 = vmatprep.subr.bf16.mxu0 0
    %666 = vmatpush1.bf16.msra.mxu0 0
    %667 = vmatprep.subr.bf16.mxu0 0
    %668 = vmatpush1.bf16.msra.mxu0 0
    %669 = vmatprep.subr.bf16.mxu0 0
    %670 = vmatpush1.bf16.msra.mxu0 0
    %671 = vmatprep.subr.bf16.mxu0 0
    %672 = vmatpush1.bf16.msra.mxu0 0
    %673 = vmatprep.subr.bf16.mxu0 0
    %674 = vmatpush1.bf16.msra.mxu0 0
    %675 = vmatprep.subr.bf16.mxu0 0
    %676 = vmatpush1.bf16.msra.mxu0 0
    %677 = vmatprep.subr.bf16.mxu0 0
    %678 = vmatpush1.bf16.msra.mxu0 0
    %679 = vmatprep.subr.bf16.mxu0 0
    %680 = vmatpush1.bf16.msra.mxu0 0
    %681 = vmatprep.mubr.bf16.mxu0 0
    %682 = vmatmul.mubr.bf16.gmra.mrb[0].mxu0 0
    %v683 = vpop.f32.mrb[0].mxu0
    %v684 = vadd.f32 0.0, %v683
    %v685 = vpop.f32.mrb[0].mxu0
    %v686 = vadd.f32 0.0, %v685
    %v687 = vpop.f32.mrb[0].mxu0
    %v688 = vpop.f32.mrb[0].mxu0
    %689 = vdwg.mxu0
    %690 = vmatprep.subr.bf16.mxu0 %v588
    %691 = vmatpush1.bf16.msra.mxu0 %v587
    %692 = vmatprep.subr.bf16.mxu0 %v592
    %693 = vmatpush1.bf16.msra.mxu0 %v591
    %694 = vmatprep.subr.bf16.mxu0 %v596
    %695 = vmatpush1.bf16.msra.mxu0 %v595
    %696 = vmatprep.subr.bf16.mxu0 %v600
    %697 = vmatpush1.bf16.msra.mxu0 %v599
    %698 = vmatprep.subr.bf16.mxu0 %v604
    %699 = vmatpush1.bf16.msra.mxu0 %v603
    %700 = vmatprep.subr.bf16.mxu0 %v608
    %701 = vmatpush1.bf16.msra.mxu0 %v607
    %702 = vmatprep.subr.bf16.mxu0 %v612
    %703 = vmatpush1.bf16.msra.mxu0 %v611
    %704 = vmatprep.subr.bf16.mxu0 %v616
    %705 = vmatpush1.bf16.msra.mxu0 %v615
    %706 = vmatprep.subr.bf16.mxu0 0
    %707 = vmatpush1.bf16.msra.mxu0 0
    %708 = vmatprep.subr.bf16.mxu0 0
    %709 = vmatpush1.bf16.msra.mxu0 0
    %710 = vmatprep.subr.bf16.mxu0 0
    %711 = vmatpush1.bf16.msra.mxu0 0
    %712 = vmatprep.subr.bf16.mxu0 0
    %713 = vmatpush1.bf16.msra.mxu0 0
    %714 = vmatprep.subr.bf16.mxu0 0
    %715 = vmatpush1.bf16.msra.mxu0 0
    %716 = vmatprep.subr.bf16.mxu0 0
    %717 = vmatpush1.bf16.msra.mxu0 0
    %718 = vmatprep.subr.bf16.mxu0 0
    %719 = vmatpush1.bf16.msra.mxu0 0
    %720 = vmatprep.subr.bf16.mxu0 0
    %721 = vmatpush1.bf16.msra.mxu0 0
    %722 = vmatprep.mubr.bf16.mxu0 0
    %723 = vmatmul.mubr.bf16.gmra.mrb[0].mxu0 0
    %v724 = vpop.f32.mrb[0].mxu0
    %v725 = vadd.f32 0.0, %v724
    %v726 = vpop.f32.mrb[0].mxu0
    %v727 = vadd.f32 0.0, %v726
    %v728 = vpop.f32.mrb[0].mxu0
    %v729 = vpop.f32.mrb[0].mxu0
    %730 = vdwg.mxu0
    %v731 = vadd.f32 %v485, %v684
    %v732 = vadd.f32 %v486, %v686
    %v733 = vadd.f32 %v487, %v725
    %v734 = vadd.f32 %v488, %v727
    %v735 = vxor.u32 %v731, 2147483648
    %v736 = vxor.u32 %v732, 2147483648
    %v737 = vmul.f32 %v735, 1.442695
    %v738 = vpow.pop %v737
    %v739 = vmul.f32 %v736, 1.442695
    %v740 = vpow.pop %v739
    %v741 = vadd.f32 %v738, 1.0
    %v742 = vadd.f32 %v740, 1.0
    %v743 = vrcp.pop %v741
    %v744 = vmul.f32 1.0, %v743
    %v745 = vrcp.pop %v742
    %v746 = vmul.f32 1.0, %v745
    %v747 = vtanh.pop %v733
    %v748 = vxor.u32 %v734, 2147483648
    %v749 = vmul.f32 %v748, 1.442695
    %v750 = vpow.pop %v749
    %v751 = vadd.f32 %v750, 1.0
    %v752 = vrcp.pop %v751
    %v753 = vmul.f32 1.0, %v752
    %v754 = vmul.f32 %v746, 0.0
    %v755 = vmul.f32 %v744, %v747
    %v756 = vadd.f32 %v754, %v755
    %v757 = vtanh.pop %v756
    %v758 = vmul.f32 %v753, %v757
    %759 = vst [vmem:[#allocation2] sm:$0xff] %v758
    %s760 = smul.u32 1, 4
    %s761 = smul.addr %s760, 8
    %s762 = scalar_lea.vmem [#allocation3], %s761
    %v763 = vld [vmem:[%s762] sm:$0xff]
    %v764 = vld [vmem:[%s762 + $0x8] sm:$0xff]
    %v765 = vld [vmem:[%s762 + $0x10] sm:$0xff]
    %v766 = vld [vmem:[%s762 + $0x18] sm:$0xff]
    %v767 = vpack.c.bf16 %v758, %v758
    %768 = vmatprep.subr.bf16.mxu0 %v586
    %769 = vmatpush1.bf16.msra.mxu0 %v585
    %770 = vmatprep.subr.bf16.mxu0 %v590
    %771 = vmatpush1.bf16.msra.mxu0 %v589
    %772 = vmatprep.subr.bf16.mxu0 %v594
    %773 = vmatpush1.bf16.msra.mxu0 %v593
    %774 = vmatprep.subr.bf16.mxu0 %v598
    %775 = vmatpush1.bf16.msra.mxu0 %v597
    %776 = vmatprep.subr.bf16.mxu0 %v602
    %777 = vmatpush1.bf16.msra.mxu0 %v601
    %778 = vmatprep.subr.bf16.mxu0 %v606
    %779 = vmatpush1.bf16.msra.mxu0 %v605
    %780 = vmatprep.subr.bf16.mxu0 %v610
    %781 = vmatpush1.bf16.msra.mxu0 %v609
    %782 = vmatprep.subr.bf16.mxu0 %v614
    %783 = vmatpush1.bf16.msra.mxu0 %v613
    %784 = vmatprep.subr.bf16.mxu0 0
    %785 = vmatpush1.bf16.msra.mxu0 0
    %786 = vmatprep.subr.bf16.mxu0 0
    %787 = vmatpush1.bf16.msra.mxu0 0
    %788 = vmatprep.subr.bf16.mxu0 0
    %789 = vmatpush1.bf16.msra.mxu0 0
    %790 = vmatprep.subr.bf16.mxu0 0
    %791 = vmatpush1.bf16.msra.mxu0 0
    %792 = vmatprep.subr.bf16.mxu0 0
    %793 = vmatpush1.bf16.msra.mxu0 0
    %794 = vmatprep.subr.bf16.mxu0 0
    %795 = vmatpush1.bf16.msra.mxu0 0
    %796 = vmatprep.subr.bf16.mxu0 0
    %797 = vmatpush1.bf16.msra.mxu0 0
    %798 = vmatprep.subr.bf16.mxu0 0
    %799 = vmatpush1.bf16.msra.mxu0 0
    %800 = vmatprep.mubr.bf16.mxu0 0
    %801 = vmatmul.mubr.bf16.gmra.mrb[0].mxu0 %v767
    %v802 = vpop.f32.mrb[0].mxu0
    %v803 = vadd.f32 0.0, %v802
    %v804 = vpop.f32.mrb[0].mxu0
    %v805 = vadd.f32 0.0, %v804
    %v806 = vpop.f32.mrb[0].mxu0
    %v807 = vpop.f32.mrb[0].mxu0
    %808 = vdwg.mxu0
    %809 = vmatprep.subr.bf16.mxu0 %v588
    %810 = vmatpush1.bf16.msra.mxu0 %v587
    %811 = vmatprep.subr.bf16.mxu0 %v592
    %812 = vmatpush1.bf16.msra.mxu0 %v591
    %813 = vmatprep.subr.bf16.mxu0 %v596
    %814 = vmatpush1.bf16.msra.mxu0 %v595
    %815 = vmatprep.subr.bf16.mxu0 %v600
    %816 = vmatpush1.bf16.msra.mxu0 %v599
    %817 = vmatprep.subr.bf16.mxu0 %v604
    %818 = vmatpush1.bf16.msra.mxu0 %v603
    %819 = vmatprep.subr.bf16.mxu0 %v608
    %820 = vmatpush1.bf16.msra.mxu0 %v607
    %821 = vmatprep.subr.bf16.mxu0 %v612
    %822 = vmatpush1.bf16.msra.mxu0 %v611
    %823 = vmatprep.subr.bf16.mxu0 %v616
    %824 = vmatpush1.bf16.msra.mxu0 %v615
    %825 = vmatprep.subr.bf16.mxu0 0
    %826 = vmatpush1.bf16.msra.mxu0 0
    %827 = vmatprep.subr.bf16.mxu0 0
    %828 = vmatpush1.bf16.msra.mxu0 0
    %829 = vmatprep.subr.bf16.mxu0 0
    %830 = vmatpush1.bf16.msra.mxu0 0
    %831 = vmatprep.subr.bf16.mxu0 0
    %832 = vmatpush1.bf16.msra.mxu0 0
    %833 = vmatprep.subr.bf16.mxu0 0
    %834 = vmatpush1.bf16.msra.mxu0 0
    %835 = vmatprep.subr.bf16.mxu0 0
    %836 = vmatpush1.bf16.msra.mxu0 0
    %837 = vmatprep.subr.bf16.mxu0 0
    %838 = vmatpush1.bf16.msra.mxu0 0
    %839 = vmatprep.subr.bf16.mxu0 0
    %840 = vmatpush1.bf16.msra.mxu0 0
    %841 = vmatprep.mubr.bf16.mxu0 0
    %842 = vmatmul.mubr.bf16.gmra.mrb[0].mxu0 %v767
    %v843 = vpop.f32.mrb[0].mxu0
    %v844 = vadd.f32 0.0, %v843
    %v845 = vpop.f32.mrb[0].mxu0
    %v846 = vadd.f32 0.0, %v845
    %v847 = vpop.f32.mrb[0].mxu0
    %v848 = vpop.f32.mrb[0].mxu0
    %849 = vdwg.mxu0
    %v850 = vadd.f32 %v763, %v803
    %v851 = vadd.f32 %v764, %v805
    %v852 = vadd.f32 %v765, %v844
    %v853 = vadd.f32 %v766, %v846
    %v854 = vxor.u32 %v850, 2147483648
    %v855 = vxor.u32 %v851, 2147483648
    %v856 = vmul.f32 %v854, 1.442695
    %v857 = vpow.pop %v856
    %v858 = vmul.f32 %v855, 1.442695
    %v859 = vpow.pop %v858
    %v860 = vadd.f32 %v857, 1.0
    %v861 = vadd.f32 %v859, 1.0
    %v862 = vrcp.pop %v860
    %v863 = vmul.f32 1.0, %v862
    %v864 = vrcp.pop %v861
    %v865 = vmul.f32 1.0, %v864
    %v866 = vtanh.pop %v852
    %v867 = vxor.u32 %v853, 2147483648
    %v868 = vmul.f32 %v867, 1.442695
    %v869 = vpow.pop %v868
    %v870 = vadd.f32 %v869, 1.0
    %v871 = vrcp.pop %v870
    %v872 = vmul.f32 1.0, %v871
    %v873 = vmul.f32 %v865, %v756
    %v874 = vmul.f32 %v863, %v866
    %v875 = vadd.f32 %v873, %v874
    %v876 = vtanh.pop %v875
    %v877 = vmul.f32 %v872, %v876
    %s878 = scalar_lea.vmem [#allocation2], 8
    %879 = vst [vmem:[%s878] sm:$0xff] %v877
    %s880 = smul.u32 2, 4
    %s881 = smul.addr %s880, 8
    %s882 = scalar_lea.vmem [#allocation3], %s881
    %v883 = vld [vmem:[%s882] sm:$0xff]
    %v884 = vld [vmem:[%s882 + $0x8] sm:$0xff]
    %v885 = vld [vmem:[%s882 + $0x10] sm:$0xff]
    %v886 = vld [vmem:[%s882 + $0x18] sm:$0xff]
    %v887 = vpack.c.bf16 %v877, %v877
    %888 = vmatprep.subr.bf16.mxu0 %v586
    %889 = vmatpush1.bf16.msra.mxu0 %v585
    %890 = vmatprep.subr.bf16.mxu0 %v590
    %891 = vmatpush1.bf16.msra.mxu0 %v589
    %892 = vmatprep.subr.bf16.mxu0 %v594
    %893 = vmatpush1.bf16.msra.mxu0 %v593
    %894 = vmatprep.subr.bf16.mxu0 %v598
    %895 = vmatpush1.bf16.msra.mxu0 %v597
    %896 = vmatprep.subr.bf16.mxu0 %v602
    %897 = vmatpush1.bf16.msra.mxu0 %v601
    %898 = vmatprep.subr.bf16.mxu0 %v606
    %899 = vmatpush1.bf16.msra.mxu0 %v605
    %900 = vmatprep.subr.bf16.mxu0 %v610
    %901 = vmatpush1.bf16.msra.mxu0 %v609
    %902 = vmatprep.subr.bf16.mxu0 %v614
    %903 = vmatpush1.bf16.msra.mxu0 %v613
    %904 = vmatprep.subr.bf16.mxu0 0
    %905 = vmatpush1.bf16.msra.mxu0 0
    %906 = vmatprep.subr.bf16.mxu0 0
    %907 = vmatpush1.bf16.msra.mxu0 0
    %908 = vmatprep.subr.bf16.mxu0 0
    %909 = vmatpush1.bf16.msra.mxu0 0
    %910 = vmatprep.subr.bf16.mxu0 0
    %911 = vmatpush1.bf16.msra.mxu0 0
    %912 = vmatprep.subr.bf16.mxu0 0
    %913 = vmatpush1.bf16.msra.mxu0 0
    %914 = vmatprep.subr.bf16.mxu0 0
    %915 = vmatpush1.bf16.msra.mxu0 0
    %916 = vmatprep.subr.bf16.mxu0 0
    %917 = vmatpush1.bf16.msra.mxu0 0
    %918 = vmatprep.subr.bf16.mxu0 0
    %919 = vmatpush1.bf16.msra.mxu0 0
    %920 = vmatprep.mubr.bf16.mxu0 0
    %921 = vmatmul.mubr.bf16.gmra.mrb[0].mxu0 %v887
    %v922 = vpop.f32.mrb[0].mxu0
    %v923 = vadd.f32 0.0, %v922
    %v924 = vpop.f32.mrb[0].mxu0
    %v925 = vadd.f32 0.0, %v924
    %v926 = vpop.f32.mrb[0].mxu0
    %v927 = vpop.f32.mrb[0].mxu0
    %928 = vdwg.mxu0
    %929 = vmatprep.subr.bf16.mxu0 %v588
    %930 = vmatpush1.bf16.msra.mxu0 %v587
    %931 = vmatprep.subr.bf16.mxu0 %v592
    %932 = vmatpush1.bf16.msra.mxu0 %v591
    %933 = vmatprep.subr.bf16.mxu0 %v596
    %934 = vmatpush1.bf16.msra.mxu0 %v595
    %935 = vmatprep.subr.bf16.mxu0 %v600
    %936 = vmatpush1.bf16.msra.mxu0 %v599
    %937 = vmatprep.subr.bf16.mxu0 %v604
    %938 = vmatpush1.bf16.msra.mxu0 %v603
    %939 = vmatprep.subr.bf16.mxu0 %v608
    %940 = vmatpush1.bf16.msra.mxu0 %v607
    %941 = vmatprep.subr.bf16.mxu0 %v612
    %942 = vmatpush1.bf16.msra.mxu0 %v611
    %943 = vmatprep.subr.bf16.mxu0 %v616
    %944 = vmatpush1.bf16.msra.mxu0 %v615
    %945 = vmatprep.subr.bf16.mxu0 0
    %946 = vmatpush1.bf16.msra.mxu0 0
    %947 = vmatprep.subr.bf16.mxu0 0
    %948 = vmatpush1.bf16.msra.mxu0 0
    %949 = vmatprep.subr.bf16.mxu0 0
    %950 = vmatpush1.bf16.msra.mxu0 0
    %951 = vmatprep.subr.bf16.mxu0 0
    %952 = vmatpush1.bf16.msra.mxu0 0
    %953 = vmatprep.subr.bf16.mxu0 0
    %954 = vmatpush1.bf16.msra.mxu0 0
    %955 = vmatprep.subr.bf16.mxu0 0
    %956 = vmatpush1.bf16.msra.mxu0 0
    %957 = vmatprep.subr.bf16.mxu0 0
    %958 = vmatpush1.bf16.msra.mxu0 0
    %959 = vmatprep.subr.bf16.mxu0 0
    %960 = vmatpush1.bf16.msra.mxu0 0
    %961 = vmatprep.mubr.bf16.mxu0 0
    %962 = vmatmul.mubr.bf16.gmra.mrb[0].mxu0 %v887
    %v963 = vpop.f32.mrb[0].mxu0
    %v964 = vadd.f32 0.0, %v963
    %v965 = vpop.f32.mrb[0].mxu0
    %v966 = vadd.f32 0.0, %v965
    %v967 = vpop.f32.mrb[0].mxu0
    %v968 = vpop.f32.mrb[0].mxu0
    %969 = vdwg.mxu0
    %v970 = vadd.f32 %v883, %v923
    %v971 = vadd.f32 %v884, %v925
    %v972 = vadd.f32 %v885, %v964
    %v973 = vadd.f32 %v886, %v966
    %v974 = vxor.u32 %v970, 2147483648
    %v975 = vxor.u32 %v971, 2147483648
    %v976 = vmul.f32 %v974, 1.442695
    %v977 = vpow.pop %v976
    %v978 = vmul.f32 %v975, 1.442695
    %v979 = vpow.pop %v978
    %v980 = vadd.f32 %v977, 1.0
    %v981 = vadd.f32 %v979, 1.0
    %v982 = vrcp.pop %v980
    %v983 = vmul.f32 1.0, %v982
    %v984 = vrcp.pop %v981
    %v985 = vmul.f32 1.0, %v984
    %v986 = vtanh.pop %v972
    %v987 = vxor.u32 %v973, 2147483648
    %v988 = vmul.f32 %v987, 1.442695
    %v989 = vpow.pop %v988
    %v990 = vadd.f32 %v989, 1.0
    %v991 = vrcp.pop %v990
    %v992 = vmul.f32 1.0, %v991
    %v993 = vmul.f32 %v985, %v875
    %v994 = vmul.f32 %v983, %v986
    %v995 = vadd.f32 %v993, %v994
    %v996 = vtanh.pop %v995
    %v997 = vmul.f32 %v992, %v996
    %s998 = scalar_lea.vmem [#allocation2], 16
    %999 = vst [vmem:[%s998] sm:$0xff] %v997
    %s1000 = smul.u32 3, 4
    %s1001 = smul.addr %s1000, 8
    %s1002 = scalar_lea.vmem [#allocation3], %s1001
    %v1003 = vld [vmem:[%s1002] sm:$0xff]
    %v1004 = vld [vmem:[%s1002 + $0x8] sm:$0xff]
    %v1005 = vld [vmem:[%s1002 + $0x10] sm:$0xff]
    %v1006 = vld [vmem:[%s1002 + $0x18] sm:$0xff]
    %v1007 = vpack.c.bf16 %v997, %v997
    %1008 = vmatprep.subr.bf16.mxu0 %v586
    %1009 = vmatpush1.bf16.msra.mxu0 %v585
    %1010 = vmatprep.subr.bf16.mxu0 %v590
    %1011 = vmatpush1.bf16.msra.mxu0 %v589
    %1012 = vmatprep.subr.bf16.mxu0 %v594
    %1013 = vmatpush1.bf16.msra.mxu0 %v593
    %1014 = vmatprep.subr.bf16.mxu0 %v598
    %1015 = vmatpush1.bf16.msra.mxu0 %v597
    %1016 = vmatprep.subr.bf16.mxu0 %v602
    %1017 = vmatpush1.bf16.msra.mxu0 %v601
    %1018 = vmatprep.subr.bf16.mxu0 %v606
    %1019 = vmatpush1.bf16.msra.mxu0 %v605
    %1020 = vmatprep.subr.bf16.mxu0 %v610
    %1021 = vmatpush1.bf16.msra.mxu0 %v609
    %1022 = vmatprep.subr.bf16.mxu0 %v614
    %1023 = vmatpush1.bf16.msra.mxu0 %v613
    %1024 = vmatprep.subr.bf16.mxu0 0
    %1025 = vmatpush1.bf16.msra.mxu0 0
    %1026 = vmatprep.subr.bf16.mxu0 0
    %1027 = vmatpush1.bf16.msra.mxu0 0
    %1028 = vmatprep.subr.bf16.mxu0 0
    %1029 = vmatpush1.bf16.msra.mxu0 0
    %1030 = vmatprep.subr.bf16.mxu0 0
    %1031 = vmatpush1.bf16.msra.mxu0 0
    %1032 = vmatprep.subr.bf16.mxu0 0
    %1033 = vmatpush1.bf16.msra.mxu0 0
    %1034 = vmatprep.subr.bf16.mxu0 0
    %1035 = vmatpush1.bf16.msra.mxu0 0
    %1036 = vmatprep.subr.bf16.mxu0 0
    %1037 = vmatpush1.bf16.msra.mxu0 0
    %1038 = vmatprep.subr.bf16.mxu0 0
    %1039 = vmatpush1.bf16.msra.mxu0 0
    %1040 = vmatprep.mubr.bf16.mxu0 0
    %1041 = vmatmul.mubr.bf16.gmra.mrb[0].mxu0 %v1007
    %v1042 = vpop.f32.mrb[0].mxu0
    %v1043 = vadd.f32 0.0, %v1042
    %v1044 = vpop.f32.mrb[0].mxu0
    %v1045 = vadd.f32 0.0, %v1044
    %v1046 = vpop.f32.mrb[0].mxu0
    %v1047 = vpop.f32.mrb[0].mxu0
    %1048 = vdwg.mxu0
    %1049 = vmatprep.subr.bf16.mxu0 %v588
    %1050 = vmatpush1.bf16.msra.mxu0 %v587
    %1051 = vmatprep.subr.bf16.mxu0 %v592
    %1052 = vmatpush1.bf16.msra.mxu0 %v591
    %1053 = vmatprep.subr.bf16.mxu0 %v596
    %1054 = vmatpush1.bf16.msra.mxu0 %v595
    %1055 = vmatprep.subr.bf16.mxu0 %v600
    %1056 = vmatpush1.bf16.msra.mxu0 %v599
    %1057 = vmatprep.subr.bf16.mxu0 %v604
    %1058 = vmatpush1.bf16.msra.mxu0 %v603
    %1059 = vmatprep.subr.bf16.mxu0 %v608
    %1060 = vmatpush1.bf16.msra.mxu0 %v607
    %1061 = vmatprep.subr.bf16.mxu0 %v612
    %1062 = vmatpush1.bf16.msra.mxu0 %v611
    %1063 = vmatprep.subr.bf16.mxu0 %v616
    %1064 = vmatpush1.bf16.msra.mxu0 %v615
    %1065 = vmatprep.subr.bf16.mxu0 0
    %1066 = vmatpush1.bf16.msra.mxu0 0
    %1067 = vmatprep.subr.bf16.mxu0 0
    %1068 = vmatpush1.bf16.msra.mxu0 0
    %1069 = vmatprep.subr.bf16.mxu0 0
    %1070 = vmatpush1.bf16.msra.mxu0 0
    %1071 = vmatprep.subr.bf16.mxu0 0
    %1072 = vmatpush1.bf16.msra.mxu0 0
    %1073 = vmatprep.subr.bf16.mxu0 0
    %1074 = vmatpush1.bf16.msra.mxu0 0
    %1075 = vmatprep.subr.bf16.mxu0 0
    %1076 = vmatpush1.bf16.msra.mxu0 0
    %1077 = vmatprep.subr.bf16.mxu0 0
    %1078 = vmatpush1.bf16.msra.mxu0 0
    %1079 = vmatprep.subr.bf16.mxu0 0
    %1080 = vmatpush1.bf16.msra.mxu0 0
    %1081 = vmatprep.mubr.bf16.mxu0 0
    %1082 = vmatmul.mubr.bf16.gmra.mrb[0].mxu0 %v1007
    %v1083 = vpop.f32.mrb[0].mxu0
    %v1084 = vadd.f32 0.0, %v1083
    %v1085 = vpop.f32.mrb[0].mxu0
    %v1086 = vadd.f32 0.0, %v1085
    %v1087 = vpop.f32.mrb[0].mxu0
    %v1088 = vpop.f32.mrb[0].mxu0
    %1089 = vdwg.mxu0
    %v1090 = vadd.f32 %v1003, %v1043
    %v1091 = vadd.f32 %v1004, %v1045
    %v1092 = vadd.f32 %v1005, %v1084
    %v1093 = vadd.f32 %v1006, %v1086
    %v1094 = vxor.u32 %v1090, 2147483648
    %v1095 = vxor.u32 %v1091, 2147483648
    %v1096 = vmul.f32 %v1094, 1.442695
    %v1097 = vpow.pop %v1096
    %v1098 = vmul.f32 %v1095, 1.442695
    %v1099 = vpow.pop %v1098
    %v1100 = vadd.f32 %v1097, 1.0
    %v1101 = vadd.f32 %v1099, 1.0
    %v1102 = vrcp.pop %v1100
    %v1103 = vmul.f32 1.0, %v1102
    %v1104 = vrcp.pop %v1101
    %v1105 = vmul.f32 1.0, %v1104
    %v1106 = vtanh.pop %v1092
    %v1107 = vxor.u32 %v1093, 2147483648
    %v1108 = vmul.f32 %v1107, 1.442695
    %v1109 = vpow.pop %v1108
    %v1110 = vadd.f32 %v1109, 1.0
    %v1111 = vrcp.pop %v1110
    %v1112 = vmul.f32 1.0, %v1111
    %v1113 = vmul.f32 %v1105, %v995
    %v1114 = vmul.f32 %v1103, %v1106
    %v1115 = vadd.f32 %v1113, %v1114
    %v1116 = vtanh.pop %v1115
    %v1117 = vmul.f32 %v1112, %v1116
    %s1118 = scalar_lea.vmem [#allocation2], 24
    %1119 = vst [vmem:[%s1118] sm:$0xff] %v1117
    %s1120 = smul.u32 4, 4
    %s1121 = smul.addr %s1120, 8
    %s1122 = scalar_lea.vmem [#allocation3], %s1121
    %v1123 = vld [vmem:[%s1122] sm:$0xff]
    %v1124 = vld [vmem:[%s1122 + $0x8] sm:$0xff]
    %v1125 = vld [vmem:[%s1122 + $0x10] sm:$0xff]
    %v1126 = vld [vmem:[%s1122 + $0x18] sm:$0xff]
    %v1127 = vpack.c.bf16 %v1117, %v1117
    %1128 = vmatprep.subr.bf16.mxu0 %v586
    %1129 = vmatpush1.bf16.msra.mxu0 %v585
    %1130 = vmatprep.subr.bf16.mxu0 %v590
    %1131 = vmatpush1.bf16.msra.mxu0 %v589
    %1132 = vmatprep.subr.bf16.mxu0 %v594
    %1133 = vmatpush1.bf16.msra.mxu0 %v593
    %1134 = vmatprep.subr.bf16.mxu0 %v598
    %1135 = vmatpush1.bf16.msra.mxu0 %v597
    %1136 = vmatprep.subr.bf16.mxu0 %v602
    %1137 = vmatpush1.bf16.msra.mxu0 %v601
    %1138 = vmatprep.subr.bf16.mxu0 %v606
    %1139 = vmatpush1.bf16.msra.mxu0 %v605
    %1140 = vmatprep.subr.bf16.mxu0 %v610
    %1141 = vmatpush1.bf16.msra.mxu0 %v609
    %1142 = vmatprep.subr.bf16.mxu0 %v614
    %1143 = vmatpush1.bf16.msra.mxu0 %v613
    %1144 = vmatprep.subr.bf16.mxu0 0
    %1145 = vmatpush1.bf16.msra.mxu0 0
    %1146 = vmatprep.subr.bf16.mxu0 0
    %1147 = vmatpush1.bf16.msra.mxu0 0
    %1148 = vmatprep.subr.bf16.mxu0 0
    %1149 = vmatpush1.bf16.msra.mxu0 0
    %1150 = vmatprep.subr.bf16.mxu0 0
    %1151 = vmatpush1.bf16.msra.mxu0 0
    %1152 = vmatprep.subr.bf16.mxu0 0
    %1153 = vmatpush1.bf16.msra.mxu0 0
    %1154 = vmatprep.subr.bf16.mxu0 0
    %1155 = vmatpush1.bf16.msra.mxu0 0
    %1156 = vmatprep.subr.bf16.mxu0 0
    %1157 = vmatpush1.bf16.msra.mxu0 0
    %1158 = vmatprep.subr.bf16.mxu0 0
    %1159 = vmatpush1.bf16.msra.mxu0 0
    %1160 = vmatprep.mubr.bf16.mxu0 0
    %1161 = vmatmul.mubr.bf16.gmra.mrb[0].mxu0 %v1127
    %v1162 = vpop.f32.mrb[0].mxu0
    %v1163 = vadd.f32 0.0, %v1162
    %v1164 = vpop.f32.mrb[0].mxu0
    %v1165 = vadd.f32 0.0, %v1164
    %v1166 = vpop.f32.mrb[0].mxu0
    %v1167 = vpop.f32.mrb[0].mxu0
    %1168 = vdwg.mxu0
    %1169 = vmatprep.subr.bf16.mxu0 %v588
    %1170 = vmatpush1.bf16.msra.mxu0 %v587
    %1171 = vmatprep.subr.bf16.mxu0 %v592
    %1172 = vmatpush1.bf16.msra.mxu0 %v591
    %1173 = vmatprep.subr.bf16.mxu0 %v596
    %1174 = vmatpush1.bf16.msra.mxu0 %v595
    %1175 = vmatprep.subr.bf16.mxu0 %v600
    %1176 = vmatpush1.bf16.msra.mxu0 %v599
    %1177 = vmatprep.subr.bf16.mxu0 %v604
    %1178 = vmatpush1.bf16.msra.mxu0 %v603
    %1179 = vmatprep.subr.bf16.mxu0 %v608
    %1180 = vmatpush1.bf16.msra.mxu0 %v607
    %1181 = vmatprep.subr.bf16.mxu0 %v612
    %1182 = vmatpush1.bf16.msra.mxu0 %v611
    %1183 = vmatprep.subr.bf16.mxu0 %v616
    %1184 = vmatpush1.bf16.msra.mxu0 %v615
    %1185 = vmatprep.subr.bf16.mxu0 0
    %1186 = vmatpush1.bf16.msra.mxu0 0
    %1187 = vmatprep.subr.bf16.mxu0 0
    %1188 = vmatpush1.bf16.msra.mxu0 0
    %1189 = vmatprep.subr.bf16.mxu0 0
    %1190 = vmatpush1.bf16.msra.mxu0 0
    %1191 = vmatprep.subr.bf16.mxu0 0
    %1192 = vmatpush1.bf16.msra.mxu0 0
    %1193 = vmatprep.subr.bf16.mxu0 0
    %1194 = vmatpush1.bf16.msra.mxu0 0
    %1195 = vmatprep.subr.bf16.mxu0 0
    %1196 = vmatpush1.bf16.msra.mxu0 0
    %1197 = vmatprep.subr.bf16.mxu0 0
    %1198 = vmatpush1.bf16.msra.mxu0 0
    %1199 = vmatprep.subr.bf16.mxu0 0
    %1200 = vmatpush1.bf16.msra.mxu0 0
    %1201 = vmatprep.mubr.bf16.mxu0 0
    %1202 = vmatmul.mubr.bf16.gmra.mrb[0].mxu0 %v1127
    %v1203 = vpop.f32.mrb[0].mxu0
    %v1204 = vadd.f32 0.0, %v1203
    %v1205 = vpop.f32.mrb[0].mxu0
    %v1206 = vadd.f32 0.0, %v1205
    %v1207 = vpop.f32.mrb[0].mxu0
    %v1208 = vpop.f32.mrb[0].mxu0
    %1209 = vdwg.mxu0
    %v1210 = vadd.f32 %v1123, %v1163
    %v1211 = vadd.f32 %v1124, %v1165
    %v1212 = vadd.f32 %v1125, %v1204
    %v1213 = vadd.f32 %v1126, %v1206
    %v1214 = vxor.u32 %v1210, 2147483648
    %v1215 = vxor.u32 %v1211, 2147483648
    %v1216 = vmul.f32 %v1214, 1.442695
    %v1217 = vpow.pop %v1216
    %v1218 = vmul.f32 %v1215, 1.442695
    %v1219 = vpow.pop %v1218
    %v1220 = vadd.f32 %v1217, 1.0
    %v1221 = vadd.f32 %v1219, 1.0
    %v1222 = vrcp.pop %v1220
    %v1223 = vmul.f32 1.0, %v1222
    %v1224 = vrcp.pop %v1221
    %v1225 = vmul.f32 1.0, %v1224
    %v1226 = vtanh.pop %v1212
    %v1227 = vxor.u32 %v1213, 2147483648
    %v1228 = vmul.f32 %v1227, 1.442695
    %v1229 = vpow.pop %v1228
    %v1230 = vadd.f32 %v1229, 1.0
    %v1231 = vrcp.pop %v1230
    %v1232 = vmul.f32 1.0, %v1231
    %v1233 = vmul.f32 %v1225, %v1115
    %v1234 = vmul.f32 %v1223, %v1226
    %v1235 = vadd.f32 %v1233, %v1234
    %v1236 = vtanh.pop %v1235
    %v1237 = vmul.f32 %v1232, %v1236
    %s1238 = scalar_lea.vmem [#allocation2], 32
    %1239 = vst [vmem:[%s1238] sm:$0xff] %v1237
    %s1240 = smul.u32 5, 4
    %s1241 = smul.addr %s1240, 8
    %s1242 = scalar_lea.vmem [#allocation3], %s1241
    %v1243 = vld [vmem:[%s1242] sm:$0xff]
    %v1244 = vld [vmem:[%s1242 + $0x8] sm:$0xff]
    %v1245 = vld [vmem:[%s1242 + $0x10] sm:$0xff]
    %v1246 = vld [vmem:[%s1242 + $0x18] sm:$0xff]
    %v1247 = vpack.c.bf16 %v1237, %v1237
    %1248 = vmatprep.subr.bf16.mxu0 %v586
    %1249 = vmatpush1.bf16.msra.mxu0 %v585
    %1250 = vmatprep.subr.bf16.mxu0 %v590
    %1251 = vmatpush1.bf16.msra.mxu0 %v589
    %1252 = vmatprep.subr.bf16.mxu0 %v594
    %1253 = vmatpush1.bf16.msra.mxu0 %v593
    %1254 = vmatprep.subr.bf16.mxu0 %v598
    %1255 = vmatpush1.bf16.msra.mxu0 %v597
    %1256 = vmatprep.subr.bf16.mxu0 %v602
    %1257 = vmatpush1.bf16.msra.mxu0 %v601
    %1258 = vmatprep.subr.bf16.mxu0 %v606
    %1259 = vmatpush1.bf16.msra.mxu0 %v605
    %1260 = vmatprep.subr.bf16.mxu0 %v610
    %1261 = vmatpush1.bf16.msra.mxu0 %v609
    %1262 = vmatprep.subr.bf16.mxu0 %v614
    %1263 = vmatpush1.bf16.msra.mxu0 %v613
    %1264 = vmatprep.subr.bf16.mxu0 0
    %1265 = vmatpush1.bf16.msra.mxu0 0
    %1266 = vmatprep.subr.bf16.mxu0 0
    %1267 = vmatpush1.bf16.msra.mxu0 0
    %1268 = vmatprep.subr.bf16.mxu0 0
    %1269 = vmatpush1.bf16.msra.mxu0 0
    %1270 = vmatprep.subr.bf16.mxu0 0
    %1271 = vmatpush1.bf16.msra.mxu0 0
    %1272 = vmatprep.subr.bf16.mxu0 0
    %1273 = vmatpush1.bf16.msra.mxu0 0
    %1274 = vmatprep.subr.bf16.mxu0 0
    %1275 = vmatpush1.bf16.msra.mxu0 0
    %1276 = vmatprep.subr.bf16.mxu0 0
    %1277 = vmatpush1.bf16.msra.mxu0 0
    %1278 = vmatprep.subr.bf16.mxu0 0
    %1279 = vmatpush1.bf16.msra.mxu0 0
    %1280 = vmatprep.mubr.bf16.mxu0 0
    %1281 = vmatmul.mubr.bf16.gmra.mrb[0].mxu0 %v1247
    %v1282 = vpop.f32.mrb[0].mxu0
    %v1283 = vadd.f32 0.0, %v1282
    %v1284 = vpop.f32.mrb[0].mxu0
    %v1285 = vadd.f32 0.0, %v1284
    %v1286 = vpop.f32.mrb[0].mxu0
    %v1287 = vpop.f32.mrb[0].mxu0
    %1288 = vdwg.mxu0
    %1289 = vmatprep.subr.bf16.mxu0 %v588
    %1290 = vmatpush1.bf16.msra.mxu0 %v587
    %1291 = vmatprep.subr.bf16.mxu0 %v592
    %1292 = vmatpush1.bf16.msra.mxu0 %v591
    %1293 = vmatprep.subr.bf16.mxu0 %v596
    %1294 = vmatpush1.bf16.msra.mxu0 %v595
    %1295 = vmatprep.subr.bf16.mxu0 %v600
    %1296 = vmatpush1.bf16.msra.mxu0 %v599
    %1297 = vmatprep.subr.bf16.mxu0 %v604
    %1298 = vmatpush1.bf16.msra.mxu0 %v603
    %1299 = vmatprep.subr.bf16.mxu0 %v608
    %1300 = vmatpush1.bf16.msra.mxu0 %v607
    %1301 = vmatprep.subr.bf16.mxu0 %v612
    %1302 = vmatpush1.bf16.msra.mxu0 %v611
    %1303 = vmatprep.subr.bf16.mxu0 %v616
    %1304 = vmatpush1.bf16.msra.mxu0 %v615
    %1305 = vmatprep.subr.bf16.mxu0 0
    %1306 = vmatpush1.bf16.msra.mxu0 0
    %1307 = vmatprep.subr.bf16.mxu0 0
    %1308 = vmatpush1.bf16.msra.mxu0 0
    %1309 = vmatprep.subr.bf16.mxu0 0
    %1310 = vmatpush1.bf16.msra.mxu0 0
    %1311 = vmatprep.subr.bf16.mxu0 0
    %1312 = vmatpush1.bf16.msra.mxu0 0
    %1313 = vmatprep.subr.bf16.mxu0 0
    %1314 = vmatpush1.bf16.msra.mxu0 0
    %1315 = vmatprep.subr.bf16.mxu0 0
    %1316 = vmatpush1.bf16.msra.mxu0 0
    %1317 = vmatprep.subr.bf16.mxu0 0
    %1318 = vmatpush1.bf16.msra.mxu0 0
    %1319 = vmatprep.subr.bf16.mxu0 0
    %1320 = vmatpush1.bf16.msra.mxu0 0
    %1321 = vmatprep.mubr.bf16.mxu0 0
    %1322 = vmatmul.mubr.bf16.gmra.mrb[0].mxu0 %v1247
    %v1323 = vpop.f32.mrb[0].mxu0
    %v1324 = vadd.f32 0.0, %v1323
    %v1325 = vpop.f32.mrb[0].mxu0
    %v1326 = vadd.f32 0.0, %v1325
    %v1327 = vpop.f32.mrb[0].mxu0
    %v1328 = vpop.f32.mrb[0].mxu0
    %1329 = vdwg.mxu0
    %v1330 = vadd.f32 %v1243, %v1283
    %v1331 = vadd.f32 %v1244, %v1285
    %v1332 = vadd.f32 %v1245, %v1324
    %v1333 = vadd.f32 %v1246, %v1326
    %v1334 = vxor.u32 %v1330, 2147483648
    %v1335 = vxor.u32 %v1331, 2147483648
    %v1336 = vmul.f32 %v1334, 1.442695
    %v1337 = vpow.pop %v1336
    %v1338 = vmul.f32 %v1335, 1.442695
    %v1339 = vpow.pop %v1338
    %v1340 = vadd.f32 %v1337, 1.0
    %v1341 = vadd.f32 %v1339, 1.0
    %v1342 = vrcp.pop %v1340
    %v1343 = vmul.f32 1.0, %v1342
    %v1344 = vrcp.pop %v1341
    %v1345 = vmul.f32 1.0, %v1344
    %v1346 = vtanh.pop %v1332
    %v1347 = vxor.u32 %v1333, 2147483648
    %v1348 = vmul.f32 %v1347, 1.442695
    %v1349 = vpow.pop %v1348
    %v1350 = vadd.f32 %v1349, 1.0
    %v1351 = vrcp.pop %v1350
    %v1352 = vmul.f32 1.0, %v1351
    %v1353 = vmul.f32 %v1345, %v1235
    %v1354 = vmul.f32 %v1343, %v1346
    %v1355 = vadd.f32 %v1353, %v1354
    %v1356 = vtanh.pop %v1355
    %v1357 = vmul.f32 %v1352, %v1356
    %s1358 = scalar_lea.vmem [#allocation2], 40
    %1359 = vst [vmem:[%s1358] sm:$0xff] %v1357
    %s1360 = smul.u32 6, 4
    %s1361 = smul.addr %s1360, 8
    %s1362 = scalar_lea.vmem [#allocation3], %s1361
    %v1363 = vld [vmem:[%s1362] sm:$0xff]
    %v1364 = vld [vmem:[%s1362 + $0x8] sm:$0xff]
    %v1365 = vld [vmem:[%s1362 + $0x10] sm:$0xff]
    %v1366 = vld [vmem:[%s1362 + $0x18] sm:$0xff]
    %v1367 = vpack.c.bf16 %v1357, %v1357
    %1368 = vmatprep.subr.bf16.mxu0 %v586
    %1369 = vmatpush1.bf16.msra.mxu0 %v585
    %1370 = vmatprep.subr.bf16.mxu0 %v590
    %1371 = vmatpush1.bf16.msra.mxu0 %v589
    %1372 = vmatprep.subr.bf16.mxu0 %v594
    %1373 = vmatpush1.bf16.msra.mxu0 %v593
    %1374 = vmatprep.subr.bf16.mxu0 %v598
    %1375 = vmatpush1.bf16.msra.mxu0 %v597
    %1376 = vmatprep.subr.bf16.mxu0 %v602
    %1377 = vmatpush1.bf16.msra.mxu0 %v601
    %1378 = vmatprep.subr.bf16.mxu0 %v606
    %1379 = vmatpush1.bf16.msra.mxu0 %v605
    %1380 = vmatprep.subr.bf16.mxu0 %v610
    %1381 = vmatpush1.bf16.msra.mxu0 %v609
    %1382 = vmatprep.subr.bf16.mxu0 %v614
    %1383 = vmatpush1.bf16.msra.mxu0 %v613
    %1384 = vmatprep.subr.bf16.mxu0 0
    %1385 = vmatpush1.bf16.msra.mxu0 0
    %1386 = vmatprep.subr.bf16.mxu0 0
    %1387 = vmatpush1.bf16.msra.mxu0 0
    %1388 = vmatprep.subr.bf16.mxu0 0
    %1389 = vmatpush1.bf16.msra.mxu0 0
    %1390 = vmatprep.subr.bf16.mxu0 0
    %1391 = vmatpush1.bf16.msra.mxu0 0
    %1392 = vmatprep.subr.bf16.mxu0 0
    %1393 = vmatpush1.bf16.msra.mxu0 0
    %1394 = vmatprep.subr.bf16.mxu0 0
    %1395 = vmatpush1.bf16.msra.mxu0 0
    %1396 = vmatprep.subr.bf16.mxu0 0
    %1397 = vmatpush1.bf16.msra.mxu0 0
    %1398 = vmatprep.subr.bf16.mxu0 0
    %1399 = vmatpush1.bf16.msra.mxu0 0
    %1400 = vmatprep.mubr.bf16.mxu0 0
    %1401 = vmatmul.mubr.bf16.gmra.mrb[0].mxu0 %v1367
    %v1402 = vpop.f32.mrb[0].mxu0
    %v1403 = vadd.f32 0.0, %v1402
    %v1404 = vpop.f32.mrb[0].mxu0
    %v1405 = vadd.f32 0.0, %v1404
    %v1406 = vpop.f32.mrb[0].mxu0
    %v1407 = vpop.f32.mrb[0].mxu0
    %1408 = vdwg.mxu0
    %1409 = vmatprep.subr.bf16.mxu0 %v588
    %1410 = vmatpush1.bf16.msra.mxu0 %v587
    %1411 = vmatprep.subr.bf16.mxu0 %v592
    %1412 = vmatpush1.bf16.msra.mxu0 %v591
    %1413 = vmatprep.subr.bf16.mxu0 %v596
    %1414 = vmatpush1.bf16.msra.mxu0 %v595
    %1415 = vmatprep.subr.bf16.mxu0 %v600
    %1416 = vmatpush1.bf16.msra.mxu0 %v599
    %1417 = vmatprep.subr.bf16.mxu0 %v604
    %1418 = vmatpush1.bf16.msra.mxu0 %v603
    %1419 = vmatprep.subr.bf16.mxu0 %v608
    %1420 = vmatpush1.bf16.msra.mxu0 %v607
    %1421 = vmatprep.subr.bf16.mxu0 %v612
    %1422 = vmatpush1.bf16.msra.mxu0 %v611
    %1423 = vmatprep.subr.bf16.mxu0 %v616
    %1424 = vmatpush1.bf16.msra.mxu0 %v615
    %1425 = vmatprep.subr.bf16.mxu0 0
    %1426 = vmatpush1.bf16.msra.mxu0 0
    %1427 = vmatprep.subr.bf16.mxu0 0
    %1428 = vmatpush1.bf16.msra.mxu0 0
    %1429 = vmatprep.subr.bf16.mxu0 0
    %1430 = vmatpush1.bf16.msra.mxu0 0
    %1431 = vmatprep.subr.bf16.mxu0 0
    %1432 = vmatpush1.bf16.msra.mxu0 0
    %1433 = vmatprep.subr.bf16.mxu0 0
    %1434 = vmatpush1.bf16.msra.mxu0 0
    %1435 = vmatprep.subr.bf16.mxu0 0
    %1436 = vmatpush1.bf16.msra.mxu0 0
    %1437 = vmatprep.subr.bf16.mxu0 0
    %1438 = vmatpush1.bf16.msra.mxu0 0
    %1439 = vmatprep.subr.bf16.mxu0 0
    %1440 = vmatpush1.bf16.msra.mxu0 0
    %1441 = vmatprep.mubr.bf16.mxu0 0
    %1442 = vmatmul.mubr.bf16.gmra.mrb[0].mxu0 %v1367
    %v1443 = vpop.f32.mrb[0].mxu0
    %v1444 = vadd.f32 0.0, %v1443
    %v1445 = vpop.f32.mrb[0].mxu0
    %v1446 = vadd.f32 0.0, %v1445
    %v1447 = vpop.f32.mrb[0].mxu0
    %v1448 = vpop.f32.mrb[0].mxu0
    %1449 = vdwg.mxu0
    %v1450 = vadd.f32 %v1363, %v1403
    %v1451 = vadd.f32 %v1364, %v1405
    %v1452 = vadd.f32 %v1365, %v1444
    %v1453 = vadd.f32 %v1366, %v1446
    %v1454 = vxor.u32 %v1450, 2147483648
    %v1455 = vxor.u32 %v1451, 2147483648
    %v1456 = vmul.f32 %v1454, 1.442695
    %v1457 = vpow.pop %v1456
    %v1458 = vmul.f32 %v1455, 1.442695
    %v1459 = vpow.pop %v1458
    %v1460 = vadd.f32 %v1457, 1.0
    %v1461 = vadd.f32 %v1459, 1.0
    %v1462 = vrcp.pop %v1460
    %v1463 = vmul.f32 1.0, %v1462
    %v1464 = vrcp.pop %v1461
    %v1465 = vmul.f32 1.0, %v1464
    %v1466 = vtanh.pop %v1452
    %v1467 = vxor.u32 %v1453, 2147483648
    %v1468 = vmul.f32 %v1467, 1.442695
    %v1469 = vpow.pop %v1468
    %v1470 = vadd.f32 %v1469, 1.0
    %v1471 = vrcp.pop %v1470
    %v1472 = vmul.f32 1.0, %v1471
    %v1473 = vmul.f32 %v1465, %v1355
    %v1474 = vmul.f32 %v1463, %v1466
    %v1475 = vadd.f32 %v1473, %v1474
    %v1476 = vtanh.pop %v1475
    %v1477 = vmul.f32 %v1472, %v1476
    %s1478 = scalar_lea.vmem [#allocation2], 48
    %1479 = vst [vmem:[%s1478] sm:$0xff] %v1477
    %s1480 = smul.u32 7, 4
    %s1481 = smul.addr %s1480, 8
    %s1482 = scalar_lea.vmem [#allocation3], %s1481
    %v1483 = vld [vmem:[%s1482] sm:$0xff]
    %v1484 = vld [vmem:[%s1482 + $0x8] sm:$0xff]
    %v1485 = vld [vmem:[%s1482 + $0x10] sm:$0xff]
    %v1486 = vld [vmem:[%s1482 + $0x18] sm:$0xff]
    %v1487 = vpack.c.bf16 %v1477, %v1477
    %1488 = vmatprep.subr.bf16.mxu0 %v586
    %1489 = vmatpush1.bf16.msra.mxu0 %v585
    %1490 = vmatprep.subr.bf16.mxu0 %v590
    %1491 = vmatpush1.bf16.msra.mxu0 %v589
    %1492 = vmatprep.subr.bf16.mxu0 %v594
    %1493 = vmatpush1.bf16.msra.mxu0 %v593
    %1494 = vmatprep.subr.bf16.mxu0 %v598
    %1495 = vmatpush1.bf16.msra.mxu0 %v597
    %1496 = vmatprep.subr.bf16.mxu0 %v602
    %1497 = vmatpush1.bf16.msra.mxu0 %v601
    %1498 = vmatprep.subr.bf16.mxu0 %v606
    %1499 = vmatpush1.bf16.msra.mxu0 %v605
    %1500 = vmatprep.subr.bf16.mxu0 %v610
    %1501 = vmatpush1.bf16.msra.mxu0 %v609
    %1502 = vmatprep.subr.bf16.mxu0 %v614
    %1503 = vmatpush1.bf16.msra.mxu0 %v613
    %1504 = vmatprep.subr.bf16.mxu0 0
    %1505 = vmatpush1.bf16.msra.mxu0 0
    %1506 = vmatprep.subr.bf16.mxu0 0
    %1507 = vmatpush1.bf16.msra.mxu0 0
    %1508 = vmatprep.subr.bf16.mxu0 0
    %1509 = vmatpush1.bf16.msra.mxu0 0
    %1510 = vmatprep.subr.bf16.mxu0 0
    %1511 = vmatpush1.bf16.msra.mxu0 0
    %1512 = vmatprep.subr.bf16.mxu0 0
    %1513 = vmatpush1.bf16.msra.mxu0 0
    %1514 = vmatprep.subr.bf16.mxu0 0
    %1515 = vmatpush1.bf16.msra.mxu0 0
    %1516 = vmatprep.subr.bf16.mxu0 0
    %1517 = vmatpush1.bf16.msra.mxu0 0
    %1518 = vmatprep.subr.bf16.mxu0 0
    %1519 = vmatpush1.bf16.msra.mxu0 0
    %1520 = vmatprep.mubr.bf16.mxu0 0
    %1521 = vmatmul.mubr.bf16.gmra.mrb[0].mxu0 %v1487
    %v1522 = vpop.f32.mrb[0].mxu0
    %v1523 = vadd.f32 0.0, %v1522
    %v1524 = vpop.f32.mrb[0].mxu0
    %v1525 = vadd.f32 0.0, %v1524
    %v1526 = vpop.f32.mrb[0].mxu0
    %v1527 = vpop.f32.mrb[0].mxu0
    %1528 = vdwg.mxu0
    %1529 = vmatprep.subr.bf16.mxu0 %v588
    %1530 = vmatpush1.bf16.msra.mxu0 %v587
    %1531 = vmatprep.subr.bf16.mxu0 %v592
    %1532 = vmatpush1.bf16.msra.mxu0 %v591
    %1533 = vmatprep.subr.bf16.mxu0 %v596
    %1534 = vmatpush1.bf16.msra.mxu0 %v595
    %1535 = vmatprep.subr.bf16.mxu0 %v600
    %1536 = vmatpush1.bf16.msra.mxu0 %v599
    %1537 = vmatprep.subr.bf16.mxu0 %v604
    %1538 = vmatpush1.bf16.msra.mxu0 %v603
    %1539 = vmatprep.subr.bf16.mxu0 %v608
    %1540 = vmatpush1.bf16.msra.mxu0 %v607
    %1541 = vmatprep.subr.bf16.mxu0 %v612
    %1542 = vmatpush1.bf16.msra.mxu0 %v611
    %1543 = vmatprep.subr.bf16.mxu0 %v616
    %1544 = vmatpush1.bf16.msra.mxu0 %v615
    %1545 = vmatprep.subr.bf16.mxu0 0
    %1546 = vmatpush1.bf16.msra.mxu0 0
    %1547 = vmatprep.subr.bf16.mxu0 0
    %1548 = vmatpush1.bf16.msra.mxu0 0
    %1549 = vmatprep.subr.bf16.mxu0 0
    %1550 = vmatpush1.bf16.msra.mxu0 0
    %1551 = vmatprep.subr.bf16.mxu0 0
    %1552 = vmatpush1.bf16.msra.mxu0 0
    %1553 = vmatprep.subr.bf16.mxu0 0
    %1554 = vmatpush1.bf16.msra.mxu0 0
    %1555 = vmatprep.subr.bf16.mxu0 0
    %1556 = vmatpush1.bf16.msra.mxu0 0
    %1557 = vmatprep.subr.bf16.mxu0 0
    %1558 = vmatpush1.bf16.msra.mxu0 0
    %1559 = vmatprep.subr.bf16.mxu0 0
    %1560 = vmatpush1.bf16.msra.mxu0 0
    %1561 = vmatprep.mubr.bf16.mxu0 0
    %1562 = vmatmul.mubr.bf16.gmra.mrb[0].mxu0 %v1487
    %v1563 = vpop.f32.mrb[0].mxu0
    %v1564 = vadd.f32 0.0, %v1563
    %v1565 = vpop.f32.mrb[0].mxu0
    %v1566 = vadd.f32 0.0, %v1565
    %v1567 = vpop.f32.mrb[0].mxu0
    %v1568 = vpop.f32.mrb[0].mxu0
    %1569 = vdwg.mxu0
    %v1570 = vadd.f32 %v1483, %v1523
    %v1571 = vadd.f32 %v1484, %v1525
    %v1572 = vadd.f32 %v1485, %v1564
    %v1573 = vadd.f32 %v1486, %v1566
    %v1574 = vxor.u32 %v1570, 2147483648
    %v1575 = vxor.u32 %v1571, 2147483648
    %v1576 = vmul.f32 %v1574, 1.442695
    %v1577 = vpow.pop %v1576
    %v1578 = vmul.f32 %v1575, 1.442695
    %v1579 = vpow.pop %v1578
    %v1580 = vadd.f32 %v1577, 1.0
    %v1581 = vadd.f32 %v1579, 1.0
    %v1582 = vrcp.pop %v1580
    %v1583 = vmul.f32 1.0, %v1582
    %v1584 = vrcp.pop %v1581
    %v1585 = vmul.f32 1.0, %v1584
    %v1586 = vtanh.pop %v1572
    %v1587 = vxor.u32 %v1573, 2147483648
    %v1588 = vmul.f32 %v1587, 1.442695
    %v1589 = vpow.pop %v1588
    %v1590 = vadd.f32 %v1589, 1.0
    %v1591 = vrcp.pop %v1590
    %v1592 = vmul.f32 1.0, %v1591
    %v1593 = vmul.f32 %v1585, %v1475
    %v1594 = vmul.f32 %v1583, %v1586
    %v1595 = vadd.f32 %v1593, %v1594
    %v1596 = vtanh.pop %v1595
    %v1597 = vmul.f32 %v1592, %v1596
    %s1598 = scalar_lea.vmem [#allocation2], 56
    %1599 = vst [vmem:[%s1598] sm:$0xff] %v1597
    %1600 = vst [vmem:[#allocation23] sm:$0xff] %v1597
    %1601 = vst [vmem:[#allocation25] sm:$0xff] %v1595
    %v1602 = vld [vmem:[#allocation12] sm:$0xff]
    %v1603 = vld [vmem:[#allocation12 + $0x8] sm:$0xff]
    %v1604 = vld [vmem:[#allocation12 + $0x10] sm:$0xff]
    %v1605 = vld [vmem:[#allocation12 + $0x18] sm:$0xff]
    %v1606 = vld [vmem:[#allocation12 + $0x20] sm:$0xff]
    %v1607 = vld [vmem:[#allocation12 + $0x28] sm:$0xff]
    %v1608 = vld [vmem:[#allocation12 + $0x30] sm:$0xff]
    %v1609 = vld [vmem:[#allocation12 + $0x38] sm:$0xff]
    %v1610 = vld [vmem:[#allocation12 + $0x40] sm:$0xff]
    %v1611 = vld [vmem:[#allocation12 + $0x48] sm:$0xff]
    %v1612 = vld [vmem:[#allocation12 + $0x50] sm:$0xff]
    %v1613 = vld [vmem:[#allocation12 + $0x58] sm:$0xff]
    %v1614 = vld [vmem:[#allocation12 + $0x60] sm:$0xff]
    %v1615 = vld [vmem:[#allocation12 + $0x68] sm:$0xff]
    %v1616 = vld [vmem:[#allocation12 + $0x70] sm:$0xff]
    %v1617 = vld [vmem:[#allocation12 + $0x78] sm:$0xff]
    %v1618 = vld [vmem:[#allocation12 + $0x80] sm:$0xff]
    %v1619 = vld [vmem:[#allocation12 + $0x88] sm:$0xff]
    %v1620 = vld [vmem:[#allocation12 + $0x90] sm:$0xff]
    %v1621 = vld [vmem:[#allocation12 + $0x98] sm:$0xff]
    %v1622 = vld [vmem:[#allocation12 + $0xa0] sm:$0xff]
    %v1623 = vld [vmem:[#allocation12 + $0xa8] sm:$0xff]
    %v1624 = vld [vmem:[#allocation12 + $0xb0] sm:$0xff]
    %v1625 = vld [vmem:[#allocation12 + $0xb8] sm:$0xff]
    %v1626 = vld [vmem:[#allocation12 + $0xc0] sm:$0xff]
    %v1627 = vld [vmem:[#allocation12 + $0xc8] sm:$0xff]
    %v1628 = vld [vmem:[#allocation12 + $0xd0] sm:$0xff]
    %v1629 = vld [vmem:[#allocation12 + $0xd8] sm:$0xff]
    %v1630 = vld [vmem:[#allocation12 + $0xe0] sm:$0xff]
    %v1631 = vld [vmem:[#allocation12 + $0xe8] sm:$0xff]
    %v1632 = vld [vmem:[#allocation12 + $0xf0] sm:$0xff]
    %v1633 = vld [vmem:[#allocation12 + $0xf8] sm:$0xff]
    %v1634 = vld [vmem:[#allocation13] sm:$0xff]
    %v1635 = vld [vmem:[#allocation13 + $0x8] sm:$0xff]
    %v1636 = vld [vmem:[#allocation13 + $0x10] sm:$0xff]
    %v1637 = vld [vmem:[#allocation13 + $0x18] sm:$0xff]
    %v1638 = vld [vmem:[#allocation13 + $0x20] sm:$0xff]
    %v1639 = vld [vmem:[#allocation13 + $0x28] sm:$0xff]
    %v1640 = vld [vmem:[#allocation13 + $0x30] sm:$0xff]
    %v1641 = vld [vmem:[#allocation13 + $0x38] sm:$0xff]
    %v1642 = vld [vmem:[#allocation13 + $0x40] sm:$0xff]
    %v1643 = vld [vmem:[#allocation13 + $0x48] sm:$0xff]
    %v1644 = vld [vmem:[#allocation13 + $0x50] sm:$0xff]
    %v1645 = vld [vmem:[#allocation13 + $0x58] sm:$0xff]
    %v1646 = vld [vmem:[#allocation13 + $0x60] sm:$0xff]
    %v1647 = vld [vmem:[#allocation13 + $0x68] sm:$0xff]
    %v1648 = vld [vmem:[#allocation13 + $0x70] sm:$0xff]
    %v1649 = vld [vmem:[#allocation13 + $0x78] sm:$0xff]
    %v1650 = vld [vmem:[#allocation13 + $0x80] sm:$0xff]
    %v1651 = vld [vmem:[#allocation13 + $0x88] sm:$0xff]
    %v1652 = vld [vmem:[#allocation13 + $0x90] sm:$0xff]
    %v1653 = vld [vmem:[#allocation13 + $0x98] sm:$0xff]
    %v1654 = vld [vmem:[#allocation13 + $0xa0] sm:$0xff]
    %v1655 = vld [vmem:[#allocation13 + $0xa8] sm:$0xff]
    %v1656 = vld [vmem:[#allocation13 + $0xb0] sm:$0xff]
    %v1657 = vld [vmem:[#allocation13 + $0xb8] sm:$0xff]
    %v1658 = vld [vmem:[#allocation13 + $0xc0] sm:$0xff]
    %v1659 = vld [vmem:[#allocation13 + $0xc8] sm:$0xff]
    %v1660 = vld [vmem:[#allocation13 + $0xd0] sm:$0xff]
    %v1661 = vld [vmem:[#allocation13 + $0xd8] sm:$0xff]
    %v1662 = vld [vmem:[#allocation13 + $0xe0] sm:$0xff]
    %v1663 = vld [vmem:[#allocation13 + $0xe8] sm:$0xff]
    %v1664 = vld [vmem:[#allocation13 + $0xf0] sm:$0xff]
    %v1665 = vld [vmem:[#allocation13 + $0xf8] sm:$0xff]
    %v1666 = vld [vmem:[#allocation15] sm:$0xf]
    %v1667 = vld [vmem:[#allocation2] sm:$0xff]
    %v1668 = vld [vmem:[#allocation2 + $0x8] sm:$0xff]
    %v1669 = vld [vmem:[#allocation2 + $0x10] sm:$0xff]
    %v1670 = vld [vmem:[#allocation2 + $0x18] sm:$0xff]
    %v1671 = vld [vmem:[#allocation2 + $0x20] sm:$0xff]
    %v1672 = vld [vmem:[#allocation2 + $0x28] sm:$0xff]
    %v1673 = vld [vmem:[#allocation2 + $0x30] sm:$0xff]
    %v1674 = vld [vmem:[#allocation2 + $0x38] sm:$0xff]
    %v1675 = vpack.c.bf16 %v1668, %v1667
    %v1676 = vpack.c.bf16 %v1670, %v1669
    %v1677 = vpack.c.bf16 %v1672, %v1671
    %v1678 = vpack.c.bf16 %v1674, %v1673
    %v1680 = vlaneseq
    %v1681 = vshrl.u32 %v1680, 7
    %v1682 = vsub.s32 0, %v1681
    %v1683 = vrot.slane %v1666, %v1682
    %v1684 = vlaneseq
    %v1685 = vshrl.u32 %v1684, 7
    %v1686 = vsub.s32 1, %v1685
    %v1687 = vrot.slane %v1666, %v1686
    %v1688 = vlaneseq
    %v1689 = vshrl.u32 %v1688, 7
    %v1690 = vsub.s32 2, %v1689
    %v1691 = vrot.slane %v1666, %v1690
    %v1692 = vlaneseq
    %v1693 = vshrl.u32 %v1692, 7
    %v1694 = vsub.s32 3, %v1693
    %v1695 = vrot.slane %v1666, %v1694
    %v1732 = vunpack.c.l.b16 %v1602
    %v1733 = vunpack.c.h.b16 %v1602
    %v1734 = vunpack.c.l.b16 %v1603
    %v1735 = vunpack.c.h.b16 %v1603
    %v1736 = vunpack.c.l.b16 %v1604
    %v1737 = vunpack.c.h.b16 %v1604
    %v1738 = vunpack.c.l.b16 %v1605
    %v1739 = vunpack.c.h.b16 %v1605
    %v1740 = vunpack.c.l.b16 %v1606
    %v1741 = vunpack.c.h.b16 %v1606
    %v1742 = vunpack.c.l.b16 %v1607
    %v1743 = vunpack.c.h.b16 %v1607
    %v1744 = vunpack.c.l.b16 %v1608
    %v1745 = vunpack.c.h.b16 %v1608
    %v1746 = vunpack.c.l.b16 %v1609
    %v1747 = vunpack.c.h.b16 %v1609
    %v1748 = vunpack.c.l.b16 %v1610
    %v1749 = vunpack.c.h.b16 %v1610
    %v1750 = vunpack.c.l.b16 %v1611
    %v1751 = vunpack.c.h.b16 %v1611
    %v1752 = vunpack.c.l.b16 %v1612
    %v1753 = vunpack.c.h.b16 %v1612
    %v1754 = vunpack.c.l.b16 %v1613
    %v1755 = vunpack.c.h.b16 %v1613
    %v1756 = vunpack.c.l.b16 %v1614
    %v1757 = vunpack.c.h.b16 %v1614
    %v1758 = vunpack.c.l.b16 %v1615
    %v1759 = vunpack.c.h.b16 %v1615
    %v1760 = vunpack.c.l.b16 %v1616
    %v1761 = vunpack.c.h.b16 %v1616
    %v1762 = vunpack.c.l.b16 %v1617
    %v1763 = vunpack.c.h.b16 %v1617
    %v1764 = vunpack.c.l.b16 %v1618
    %v1765 = vunpack.c.h.b16 %v1618
    %v1766 = vunpack.c.l.b16 %v1619
    %v1767 = vunpack.c.h.b16 %v1619
    %v1768 = vunpack.c.l.b16 %v1620
    %v1769 = vunpack.c.h.b16 %v1620
    %v1770 = vunpack.c.l.b16 %v1621
    %v1771 = vunpack.c.h.b16 %v1621
    %v1772 = vunpack.c.l.b16 %v1622
    %v1773 = vunpack.c.h.b16 %v1622
    %v1774 = vunpack.c.l.b16 %v1623
    %v1775 = vunpack.c.h.b16 %v1623
    %v1776 = vunpack.c.l.b16 %v1624
    %v1777 = vunpack.c.h.b16 %v1624
    %v1778 = vunpack.c.l.b16 %v1625
    %v1779 = vunpack.c.h.b16 %v1625
    %v1780 = vunpack.c.l.b16 %v1626
    %v1781 = vunpack.c.h.b16 %v1626
    %v1782 = vunpack.c.l.b16 %v1627
    %v1783 = vunpack.c.h.b16 %v1627
    %v1784 = vunpack.c.l.b16 %v1628
    %v1785 = vunpack.c.h.b16 %v1628
    %v1786 = vunpack.c.l.b16 %v1629
    %v1787 = vunpack.c.h.b16 %v1629
    %v1788 = vunpack.c.l.b16 %v1630
    %v1789 = vunpack.c.h.b16 %v1630
    %v1790 = vunpack.c.l.b16 %v1631
    %v1791 = vunpack.c.h.b16 %v1631
    %v1792 = vunpack.c.l.b16 %v1632
    %v1793 = vunpack.c.h.b16 %v1632
    %v1794 = vunpack.c.l.b16 %v1633
    %v1795 = vunpack.c.h.b16 %v1633
    %v1796 = vpack.c.b16 %v1736, %v1732
    %v1797 = vpack.c.b16 %v1737, %v1733
    %v1798 = vpack.c.b16 %v1738, %v1734
    %v1799 = vpack.c.b16 %v1739, %v1735
    %v1800 = vpack.c.b16 %v1744, %v1740
    %v1801 = vpack.c.b16 %v1745, %v1741
    %v1802 = vpack.c.b16 %v1746, %v1742
    %v1803 = vpack.c.b16 %v1747, %v1743
    %v1804 = vpack.c.b16 %v1752, %v1748
    %v1805 = vpack.c.b16 %v1753, %v1749
    %v1806 = vpack.c.b16 %v1754, %v1750
    %v1807 = vpack.c.b16 %v1755, %v1751
    %v1808 = vpack.c.b16 %v1760, %v1756
    %v1809 = vpack.c.b16 %v1761, %v1757
    %v1810 = vpack.c.b16 %v1762, %v1758
    %v1811 = vpack.c.b16 %v1763, %v1759
    %v1812 = vpack.c.b16 %v1768, %v1764
    %v1813 = vpack.c.b16 %v1769, %v1765
    %v1814 = vpack.c.b16 %v1770, %v1766
    %v1815 = vpack.c.b16 %v1771, %v1767
    %v1816 = vpack.c.b16 %v1776, %v1772
    %v1817 = vpack.c.b16 %v1777, %v1773
    %v1818 = vpack.c.b16 %v1778, %v1774
    %v1819 = vpack.c.b16 %v1779, %v1775
    %v1820 = vpack.c.b16 %v1784, %v1780
    %v1821 = vpack.c.b16 %v1785, %v1781
    %v1822 = vpack.c.b16 %v1786, %v1782
    %v1823 = vpack.c.b16 %v1787, %v1783
    %v1824 = vpack.c.b16 %v1792, %v1788
    %v1825 = vpack.c.b16 %v1793, %v1789
    %v1826 = vpack.c.b16 %v1794, %v1790
    %v1827 = vpack.c.b16 %v1795, %v1791
    %1860 = vmatprep.subr.bf16.mxu0 %v1797
    %1861 = vmatpush1.bf16.msra.mxu0 %v1796
    %1862 = vmatprep.subr.bf16.mxu0 %v1801
    %1863 = vmatpush1.bf16.msra.mxu0 %v1800
    %1864 = vmatprep.subr.bf16.mxu0 %v1805
    %1865 = vmatpush1.bf16.msra.mxu0 %v1804
    %1866 = vmatprep.subr.bf16.mxu0 %v1809
    %1867 = vmatpush1.bf16.msra.mxu0 %v1808
    %1868 = vmatprep.subr.bf16.mxu0 %v1813
    %1869 = vmatpush1.bf16.msra.mxu0 %v1812
    %1870 = vmatprep.subr.bf16.mxu0 %v1817
    %1871 = vmatpush1.bf16.msra.mxu0 %v1816
    %1872 = vmatprep.subr.bf16.mxu0 %v1821
    %1873 = vmatpush1.bf16.msra.mxu0 %v1820
    %1874 = vmatprep.subr.bf16.mxu0 %v1825
    %1875 = vmatpush1.bf16.msra.mxu0 %v1824
    %1876 = vmatprep.subr.bf16.mxu0 0
    %1877 = vmatpush1.bf16.msra.mxu0 0
    %1878 = vmatprep.subr.bf16.mxu0 0
    %1879 = vmatpush1.bf16.msra.mxu0 0
    %1880 = vmatprep.subr.bf16.mxu0 0
    %1881 = vmatpush1.bf16.msra.mxu0 0
    %1882 = vmatprep.subr.bf16.mxu0 0
    %1883 = vmatpush1.bf16.msra.mxu0 0
    %1884 = vmatprep.subr.bf16.mxu0 0
    %1885 = vmatpush1.bf16.msra.mxu0 0
    %1886 = vmatprep.subr.bf16.mxu0 0
    %1887 = vmatpush1.bf16.msra.mxu0 0
    %1888 = vmatprep.subr.bf16.mxu0 0
    %1889 = vmatpush1.bf16.msra.mxu0 0
    %1890 = vmatprep.subr.bf16.mxu0 0
    %1891 = vmatpush1.bf16.msra.mxu0 0
    %1892 = vmatprep.mubr.bf16.mxu0 0
    %1893 = vmatmul.mubr.bf16.gmra.mrb[0].mxu0 %v1675
    %v1894 = vpop.f32.mrb[0].mxu0
    %v1895 = vadd.f32 %v1683, %v1894
    %v1896 = vpop.f32.mrb[0].mxu0
    %v1897 = vadd.f32 %v1687, %v1896
    %v1898 = vpop.f32.mrb[0].mxu0
    %v1899 = vadd.f32 %v1683, %v1898
    %v1900 = vpop.f32.mrb[0].mxu0
    %v1901 = vadd.f32 %v1687, %v1900
    %1902 = vmatprep.mubr.bf16.mxu0 0
    %1903 = vmatmul.mubr.bf16.gmra.mrb[0].mxu0 %v1676
    %v1904 = vpop.f32.mrb[0].mxu0
    %v1905 = vadd.f32 %v1683, %v1904
    %v1906 = vpop.f32.mrb[0].mxu0
    %v1907 = vadd.f32 %v1687, %v1906
    %v1908 = vpop.f32.mrb[0].mxu0
    %v1909 = vadd.f32 %v1683, %v1908
    %v1910 = vpop.f32.mrb[0].mxu0
    %v1911 = vadd.f32 %v1687, %v1910
    %1912 = vmatprep.mubr.bf16.mxu0 0
    %1913 = vmatmul.mubr.bf16.gmra.mrb[0].mxu0 %v1677
    %v1914 = vpop.f32.mrb[0].mxu0
    %v1915 = vadd.f32 %v1683, %v1914
    %v1916 = vpop.f32.mrb[0].mxu0
    %v1917 = vadd.f32 %v1687, %v1916
    %v1918 = vpop.f32.mrb[0].mxu0
    %v1919 = vadd.f32 %v1683, %v1918
    %v1920 = vpop.f32.mrb[0].mxu0
    %v1921 = vadd.f32 %v1687, %v1920
    %1922 = vmatprep.mubr.bf16.mxu0 0
    %1923 = vmatmul.mubr.bf16.gmra.mrb[0].mxu0 %v1678
    %v1924 = vpop.f32.mrb[0].mxu0
    %v1925 = vadd.f32 %v1683, %v1924
    %v1926 = vpop.f32.mrb[0].mxu0
    %v1927 = vadd.f32 %v1687, %v1926
    %v1928 = vpop.f32.mrb[0].mxu0
    %v1929 = vadd.f32 %v1683, %v1928
    %v1930 = vpop.f32.mrb[0].mxu0
    %v1931 = vadd.f32 %v1687, %v1930
    %1932 = vdwg.mxu0
    %1933 = vmatprep.subr.bf16.mxu0 %v1799
    %1934 = vmatpush1.bf16.msra.mxu0 %v1798
    %1935 = vmatprep.subr.bf16.mxu0 %v1803
    %1936 = vmatpush1.bf16.msra.mxu0 %v1802
    %1937 = vmatprep.subr.bf16.mxu0 %v1807
    %1938 = vmatpush1.bf16.msra.mxu0 %v1806
    %1939 = vmatprep.subr.bf16.mxu0 %v1811
    %1940 = vmatpush1.bf16.msra.mxu0 %v1810
    %1941 = vmatprep.subr.bf16.mxu0 %v1815
    %1942 = vmatpush1.bf16.msra.mxu0 %v1814
    %1943 = vmatprep.subr.bf16.mxu0 %v1819
    %1944 = vmatpush1.bf16.msra.mxu0 %v1818
    %1945 = vmatprep.subr.bf16.mxu0 %v1823
    %1946 = vmatpush1.bf16.msra.mxu0 %v1822
    %1947 = vmatprep.subr.bf16.mxu0 %v1827
    %1948 = vmatpush1.bf16.msra.mxu0 %v1826
    %1949 = vmatprep.subr.bf16.mxu0 0
    %1950 = vmatpush1.bf16.msra.mxu0 0
    %1951 = vmatprep.subr.bf16.mxu0 0
    %1952 = vmatpush1.bf16.msra.mxu0 0
    %1953 = vmatprep.subr.bf16.mxu0 0
    %1954 = vmatpush1.bf16.msra.mxu0 0
    %1955 = vmatprep.subr.bf16.mxu0 0
    %1956 = vmatpush1.bf16.msra.mxu0 0
    %1957 = vmatprep.subr.bf16.mxu0 0
    %1958 = vmatpush1.bf16.msra.mxu0 0
    %1959 = vmatprep.subr.bf16.mxu0 0
    %1960 = vmatpush1.bf16.msra.mxu0 0
    %1961 = vmatprep.subr.bf16.mxu0 0
    %1962 = vmatpush1.bf16.msra.mxu0 0
    %1963 = vmatprep.subr.bf16.mxu0 0
    %1964 = vmatpush1.bf16.msra.mxu0 0
    %1965 = vmatprep.mubr.bf16.mxu0 0
    %1966 = vmatmul.mubr.bf16.gmra.mrb[0].mxu0 %v1675
    %v1967 = vpop.f32.mrb[0].mxu0
    %v1968 = vadd.f32 %v1691, %v1967
    %v1969 = vpop.f32.mrb[0].mxu0
    %v1970 = vadd.f32 %v1695, %v1969
    %v1971 = vpop.f32.mrb[0].mxu0
    %v1972 = vadd.f32 %v1691, %v1971
    %v1973 = vpop.f32.mrb[0].mxu0
    %v1974 = vadd.f32 %v1695, %v1973
    %1975 = vmatprep.mubr.bf16.mxu0 0
    %1976 = vmatmul.mubr.bf16.gmra.mrb[0].mxu0 %v1676
    %v1977 = vpop.f32.mrb[0].mxu0
    %v1978 = vadd.f32 %v1691, %v1977
    %v1979 = vpop.f32.mrb[0].mxu0
    %v1980 = vadd.f32 %v1695, %v1979
    %v1981 = vpop.f32.mrb[0].mxu0
    %v1982 = vadd.f32 %v1691, %v1981
    %v1983 = vpop.f32.mrb[0].mxu0
    %v1984 = vadd.f32 %v1695, %v1983
    %1985 = vmatprep.mubr.bf16.mxu0 0
    %1986 = vmatmul.mubr.bf16.gmra.mrb[0].mxu0 %v1677
    %v1987 = vpop.f32.mrb[0].mxu0
    %v1988 = vadd.f32 %v1691, %v1987
    %v1989 = vpop.f32.mrb[0].mxu0
    %v1990 = vadd.f32 %v1695, %v1989
    %v1991 = vpop.f32.mrb[0].mxu0
    %v1992 = vadd.f32 %v1691, %v1991
    %v1993 = vpop.f32.mrb[0].mxu0
    %v1994 = vadd.f32 %v1695, %v1993
    %1995 = vmatprep.mubr.bf16.mxu0 0
    %1996 = vmatmul.mubr.bf16.gmra.mrb[0].mxu0 %v1678
    %v1997 = vpop.f32.mrb[0].mxu0
    %v1998 = vadd.f32 %v1691, %v1997
    %v1999 = vpop.f32.mrb[0].mxu0
    %v2000 = vadd.f32 %v1695, %v1999
    %v2001 = vpop.f32.mrb[0].mxu0
    %v2002 = vadd.f32 %v1691, %v2001
    %v2003 = vpop.f32.mrb[0].mxu0
    %v2004 = vadd.f32 %v1695, %v2003
    %2005 = vdwg.mxu0
    %2006 = vst [vmem:[#allocation3] sm:$0xff] %v1895
    %2007 = vst [vmem:[#allocation3 + $0x8] sm:$0xff] %v1897
    %2008 = vst [vmem:[#allocation3 + $0x10] sm:$0xff] %v1968
    %2009 = vst [vmem:[#allocation3 + $0x18] sm:$0xff] %v1970
    %2010 = vst [vmem:[#allocation3 + $0x20] sm:$0xff] %v1899
    %2011 = vst [vmem:[#allocation3 + $0x28] sm:$0xff] %v1901
    %2012 = vst [vmem:[#allocation3 + $0x30] sm:$0xff] %v1972
    %2013 = vst [vmem:[#allocation3 + $0x38] sm:$0xff] %v1974
    %2014 = vst [vmem:[#allocation3 + $0x40] sm:$0xff] %v1905
    %2015 = vst [vmem:[#allocation3 + $0x48] sm:$0xff] %v1907
    %2016 = vst [vmem:[#allocation3 + $0x50] sm:$0xff] %v1978
    %2017 = vst [vmem:[#allocation3 + $0x58] sm:$0xff] %v1980
    %2018 = vst [vmem:[#allocation3 + $0x60] sm:$0xff] %v1909
    %2019 = vst [vmem:[#allocation3 + $0x68] sm:$0xff] %v1911
    %2020 = vst [vmem:[#allocation3 + $0x70] sm:$0xff] %v1982
    %2021 = vst [vmem:[#allocation3 + $0x78] sm:$0xff] %v1984
    %2022 = vst [vmem:[#allocation3 + $0x80] sm:$0xff] %v1915
    %2023 = vst [vmem:[#allocation3 + $0x88] sm:$0xff] %v1917
    %2024 = vst [vmem:[#allocation3 + $0x90] sm:$0xff] %v1988
    %2025 = vst [vmem:[#allocation3 + $0x98] sm:$0xff] %v1990
    %2026 = vst [vmem:[#allocation3 + $0xa0] sm:$0xff] %v1919
    %2027 = vst [vmem:[#allocation3 + $0xa8] sm:$0xff] %v1921
    %2028 = vst [vmem:[#allocation3 + $0xb0] sm:$0xff] %v1992
    %2029 = vst [vmem:[#allocation3 + $0xb8] sm:$0xff] %v1994
    %2030 = vst [vmem:[#allocation3 + $0xc0] sm:$0xff] %v1925
    %2031 = vst [vmem:[#allocation3 + $0xc8] sm:$0xff] %v1927
    %2032 = vst [vmem:[#allocation3 + $0xd0] sm:$0xff] %v1998
    %2033 = vst [vmem:[#allocation3 + $0xd8] sm:$0xff] %v2000
    %2034 = vst [vmem:[#allocation3 + $0xe0] sm:$0xff] %v1929
    %2035 = vst [vmem:[#allocation3 + $0xe8] sm:$0xff] %v1931
    %2036 = vst [vmem:[#allocation3 + $0xf0] sm:$0xff] %v2002
    %2037 = vst [vmem:[#allocation3 + $0xf8] sm:$0xff] %v2004
    %v2038 = vld [vmem:[%s484] sm:$0xff]
    %v2039 = vld [vmem:[%s484 + $0x8] sm:$0xff]
    %v2040 = vld [vmem:[%s484 + $0x10] sm:$0xff]
    %v2041 = vld [vmem:[%s484 + $0x18] sm:$0xff]
    %v2074 = vunpack.c.l.b16 %v1634
    %v2075 = vunpack.c.h.b16 %v1634
    %v2076 = vunpack.c.l.b16 %v1635
    %v2077 = vunpack.c.h.b16 %v1635
    %v2078 = vunpack.c.l.b16 %v1636
    %v2079 = vunpack.c.h.b16 %v1636
    %v2080 = vunpack.c.l.b16 %v1637
    %v2081 = vunpack.c.h.b16 %v1637
    %v2082 = vunpack.c.l.b16 %v1638
    %v2083 = vunpack.c.h.b16 %v1638
    %v2084 = vunpack.c.l.b16 %v1639
    %v2085 = vunpack.c.h.b16 %v1639
    %v2086 = vunpack.c.l.b16 %v1640
    %v2087 = vunpack.c.h.b16 %v1640
    %v2088 = vunpack.c.l.b16 %v1641
    %v2089 = vunpack.c.h.b16 %v1641
    %v2090 = vunpack.c.l.b16 %v1642
    %v2091 = vunpack.c.h.b16 %v1642
    %v2092 = vunpack.c.l.b16 %v1643
    %v2093 = vunpack.c.h.b16 %v1643
    %v2094 = vunpack.c.l.b16 %v1644
    %v2095 = vunpack.c.h.b16 %v1644
    %v2096 = vunpack.c.l.b16 %v1645
    %v2097 = vunpack.c.h.b16 %v1645
    %v2098 = vunpack.c.l.b16 %v1646
    %v2099 = vunpack.c.h.b16 %v1646
    %v2100 = vunpack.c.l.b16 %v1647
    %v2101 = vunpack.c.h.b16 %v1647
    %v2102 = vunpack.c.l.b16 %v1648
    %v2103 = vunpack.c.h.b16 %v1648
    %v2104 = vunpack.c.l.b16 %v1649
    %v2105 = vunpack.c.h.b16 %v1649
    %v2106 = vunpack.c.l.b16 %v1650
    %v2107 = vunpack.c.h.b16 %v1650
    %v2108 = vunpack.c.l.b16 %v1651
    %v2109 = vunpack.c.h.b16 %v1651
    %v2110 = vunpack.c.l.b16 %v1652
    %v2111 = vunpack.c.h.b16 %v1652
    %v2112 = vunpack.c.l.b16 %v1653
    %v2113 = vunpack.c.h.b16 %v1653
    %v2114 = vunpack.c.l.b16 %v1654
    %v2115 = vunpack.c.h.b16 %v1654
    %v2116 = vunpack.c.l.b16 %v1655
    %v2117 = vunpack.c.h.b16 %v1655
    %v2118 = vunpack.c.l.b16 %v1656
    %v2119 = vunpack.c.h.b16 %v1656
    %v2120 = vunpack.c.l.b16 %v1657
    %v2121 = vunpack.c.h.b16 %v1657
    %v2122 = vunpack.c.l.b16 %v1658
    %v2123 = vunpack.c.h.b16 %v1658
    %v2124 = vunpack.c.l.b16 %v1659
    %v2125 = vunpack.c.h.b16 %v1659
    %v2126 = vunpack.c.l.b16 %v1660
    %v2127 = vunpack.c.h.b16 %v1660
    %v2128 = vunpack.c.l.b16 %v1661
    %v2129 = vunpack.c.h.b16 %v1661
    %v2130 = vunpack.c.l.b16 %v1662
    %v2131 = vunpack.c.h.b16 %v1662
    %v2132 = vunpack.c.l.b16 %v1663
    %v2133 = vunpack.c.h.b16 %v1663
    %v2134 = vunpack.c.l.b16 %v1664
    %v2135 = vunpack.c.h.b16 %v1664
    %v2136 = vunpack.c.l.b16 %v1665
    %v2137 = vunpack.c.h.b16 %v1665
    %v2138 = vpack.c.b16 %v2078, %v2074
    %v2139 = vpack.c.b16 %v2079, %v2075
    %v2140 = vpack.c.b16 %v2080, %v2076
    %v2141 = vpack.c.b16 %v2081, %v2077
    %v2142 = vpack.c.b16 %v2086, %v2082
    %v2143 = vpack.c.b16 %v2087, %v2083
    %v2144 = vpack.c.b16 %v2088, %v2084
    %v2145 = vpack.c.b16 %v2089, %v2085
    %v2146 = vpack.c.b16 %v2094, %v2090
    %v2147 = vpack.c.b16 %v2095, %v2091
    %v2148 = vpack.c.b16 %v2096, %v2092
    %v2149 = vpack.c.b16 %v2097, %v2093
    %v2150 = vpack.c.b16 %v2102, %v2098
    %v2151 = vpack.c.b16 %v2103, %v2099
    %v2152 = vpack.c.b16 %v2104, %v2100
    %v2153 = vpack.c.b16 %v2105, %v2101
    %v2154 = vpack.c.b16 %v2110, %v2106
    %v2155 = vpack.c.b16 %v2111, %v2107
    %v2156 = vpack.c.b16 %v2112, %v2108
    %v2157 = vpack.c.b16 %v2113, %v2109
    %v2158 = vpack.c.b16 %v2118, %v2114
    %v2159 = vpack.c.b16 %v2119, %v2115
    %v2160 = vpack.c.b16 %v2120, %v2116
    %v2161 = vpack.c.b16 %v2121, %v2117
    %v2162 = vpack.c.b16 %v2126, %v2122
    %v2163 = vpack.c.b16 %v2127, %v2123
    %v2164 = vpack.c.b16 %v2128, %v2124
    %v2165 = vpack.c.b16 %v2129, %v2125
    %v2166 = vpack.c.b16 %v2134, %v2130
    %v2167 = vpack.c.b16 %v2135, %v2131
    %v2168 = vpack.c.b16 %v2136, %v2132
    %v2169 = vpack.c.b16 %v2137, %v2133
    %2202 = vmatprep.subr.bf16.mxu0 %v2139
    %2203 = vmatpush1.bf16.msra.mxu0 %v2138
    %2204 = vmatprep.subr.bf16.mxu0 %v2143
    %2205 = vmatpush1.bf16.msra.mxu0 %v2142
    %2206 = vmatprep.subr.bf16.mxu0 %v2147
    %2207 = vmatpush1.bf16.msra.mxu0 %v2146
    %2208 = vmatprep.subr.bf16.mxu0 %v2151
    %2209 = vmatpush1.bf16.msra.mxu0 %v2150
    %2210 = vmatprep.subr.bf16.mxu0 %v2155
    %2211 = vmatpush1.bf16.msra.mxu0 %v2154
    %2212 = vmatprep.subr.bf16.mxu0 %v2159
    %2213 = vmatpush1.bf16.msra.mxu0 %v2158
    %2214 = vmatprep.subr.bf16.mxu0 %v2163
    %2215 = vmatpush1.bf16.msra.mxu0 %v2162
    %2216 = vmatprep.subr.bf16.mxu0 %v2167
    %2217 = vmatpush1.bf16.msra.mxu0 %v2166
    %2218 = vmatprep.subr.bf16.mxu0 0
    %2219 = vmatpush1.bf16.msra.mxu0 0
    %2220 = vmatprep.subr.bf16.mxu0 0
    %2221 = vmatpush1.bf16.msra.mxu0 0
    %2222 = vmatprep.subr.bf16.mxu0 0
    %2223 = vmatpush1.bf16.msra.mxu0 0
    %2224 = vmatprep.subr.bf16.mxu0 0
    %2225 = vmatpush1.bf16.msra.mxu0 0
    %2226 = vmatprep.subr.bf16.mxu0 0
    %2227 = vmatpush1.bf16.msra.mxu0 0
    %2228 = vmatprep.subr.bf16.mxu0 0
    %2229 = vmatpush1.bf16.msra.mxu0 0
    %2230 = vmatprep.subr.bf16.mxu0 0
    %2231 = vmatpush1.bf16.msra.mxu0 0
    %2232 = vmatprep.subr.bf16.mxu0 0
    %2233 = vmatpush1.bf16.msra.mxu0 0
    %2234 = vmatprep.mubr.bf16.mxu0 0
    %2235 = vmatmul.mubr.bf16.gmra.mrb[0].mxu0 0
    %v2236 = vpop.f32.mrb[0].mxu0
    %v2237 = vadd.f32 0.0, %v2236
    %v2238 = vpop.f32.mrb[0].mxu0
    %v2239 = vadd.f32 0.0, %v2238
    %v2240 = vpop.f32.mrb[0].mxu0
    %v2241 = vpop.f32.mrb[0].mxu0
    %2242 = vdwg.mxu0
    %2243 = vmatprep.subr.bf16.mxu0 %v2141
    %2244 = vmatpush1.bf16.msra.mxu0 %v2140
    %2245 = vmatprep.subr.bf16.mxu0 %v2145
    %2246 = vmatpush1.bf16.msra.mxu0 %v2144
    %2247 = vmatprep.subr.bf16.mxu0 %v2149
    %2248 = vmatpush1.bf16.msra.mxu0 %v2148
    %2249 = vmatprep.subr.bf16.mxu0 %v2153
    %2250 = vmatpush1.bf16.msra.mxu0 %v2152
    %2251 = vmatprep.subr.bf16.mxu0 %v2157
    %2252 = vmatpush1.bf16.msra.mxu0 %v2156
    %2253 = vmatprep.subr.bf16.mxu0 %v2161
    %2254 = vmatpush1.bf16.msra.mxu0 %v2160
    %2255 = vmatprep.subr.bf16.mxu0 %v2165
    %2256 = vmatpush1.bf16.msra.mxu0 %v2164
    %2257 = vmatprep.subr.bf16.mxu0 %v2169
    %2258 = vmatpush1.bf16.msra.mxu0 %v2168
    %2259 = vmatprep.subr.bf16.mxu0 0
    %2260 = vmatpush1.bf16.msra.mxu0 0
    %2261 = vmatprep.subr.bf16.mxu0 0
    %2262 = vmatpush1.bf16.msra.mxu0 0
    %2263 = vmatprep.subr.bf16.mxu0 0
    %2264 = vmatpush1.bf16.msra.mxu0 0
    %2265 = vmatprep.subr.bf16.mxu0 0
    %2266 = vmatpush1.bf16.msra.mxu0 0
    %2267 = vmatprep.subr.bf16.mxu0 0
    %2268 = vmatpush1.bf16.msra.mxu0 0
    %2269 = vmatprep.subr.bf16.mxu0 0
    %2270 = vmatpush1.bf16.msra.mxu0 0
    %2271 = vmatprep.subr.bf16.mxu0 0
    %2272 = vmatpush1.bf16.msra.mxu0 0
    %2273 = vmatprep.subr.bf16.mxu0 0
    %2274 = vmatpush1.bf16.msra.mxu0 0
    %2275 = vmatprep.mubr.bf16.mxu0 0
    %2276 = vmatmul.mubr.bf16.gmra.mrb[0].mxu0 0
    %v2277 = vpop.f32.mrb[0].mxu0
    %v2278 = vadd.f32 0.0, %v2277
    %v2279 = vpop.f32.mrb[0].mxu0
    %v2280 = vadd.f32 0.0, %v2279
    %v2281 = vpop.f32.mrb[0].mxu0
    %v2282 = vpop.f32.mrb[0].mxu0
    %2283 = vdwg.mxu0
    %v2284 = vadd.f32 %v2038, %v2237
    %v2285 = vadd.f32 %v2039, %v2239
    %v2286 = vadd.f32 %v2040, %v2278
    %v2287 = vadd.f32 %v2041, %v2280
    %v2288 = vxor.u32 %v2284, 2147483648
    %v2289 = vxor.u32 %v2285, 2147483648
    %v2290 = vmul.f32 %v2288, 1.442695
    %v2291 = vpow.pop %v2290
    %v2292 = vmul.f32 %v2289, 1.442695
    %v2293 = vpow.pop %v2292
    %v2294 = vadd.f32 %v2291, 1.0
    %v2295 = vadd.f32 %v2293, 1.0
    %v2296 = vrcp.pop %v2294
    %v2297 = vmul.f32 1.0, %v2296
    %v2298 = vrcp.pop %v2295
    %v2299 = vmul.f32 1.0, %v2298
    %v2300 = vtanh.pop %v2286
    %v2301 = vxor.u32 %v2287, 2147483648
    %v2302 = vmul.f32 %v2301, 1.442695
    %v2303 = vpow.pop %v2302
    %v2304 = vadd.f32 %v2303, 1.0
    %v2305 = vrcp.pop %v2304
    %v2306 = vmul.f32 1.0, %v2305
    %v2307 = vmul.f32 %v2299, 0.0
    %v2308 = vmul.f32 %v2297, %v2300
    %v2309 = vadd.f32 %v2307, %v2308
    %v2310 = vtanh.pop %v2309
    %v2311 = vmul.f32 %v2306, %v2310
    %v2312 = vld [vmem:[%s762] sm:$0xff]
    %v2313 = vld [vmem:[%s762 + $0x8] sm:$0xff]
    %v2314 = vld [vmem:[%s762 + $0x10] sm:$0xff]
    %v2315 = vld [vmem:[%s762 + $0x18] sm:$0xff]
    %v2316 = vpack.c.bf16 %v2311, %v2311
    %2317 = vmatprep.subr.bf16.mxu0 %v2139
    %2318 = vmatpush1.bf16.msra.mxu0 %v2138
    %2319 = vmatprep.subr.bf16.mxu0 %v2143
    %2320 = vmatpush1.bf16.msra.mxu0 %v2142
    %2321 = vmatprep.subr.bf16.mxu0 %v2147
    %2322 = vmatpush1.bf16.msra.mxu0 %v2146
    %2323 = vmatprep.subr.bf16.mxu0 %v2151
    %2324 = vmatpush1.bf16.msra.mxu0 %v2150
    %2325 = vmatprep.subr.bf16.mxu0 %v2155
    %2326 = vmatpush1.bf16.msra.mxu0 %v2154
    %2327 = vmatprep.subr.bf16.mxu0 %v2159
    %2328 = vmatpush1.bf16.msra.mxu0 %v2158
    %2329 = vmatprep.subr.bf16.mxu0 %v2163
    %2330 = vmatpush1.bf16.msra.mxu0 %v2162
    %2331 = vmatprep.subr.bf16.mxu0 %v2167
    %2332 = vmatpush1.bf16.msra.mxu0 %v2166
    %2333 = vmatprep.subr.bf16.mxu0 0
    %2334 = vmatpush1.bf16.msra.mxu0 0
    %2335 = vmatprep.subr.bf16.mxu0 0
    %2336 = vmatpush1.bf16.msra.mxu0 0
    %2337 = vmatprep.subr.bf16.mxu0 0
    %2338 = vmatpush1.bf16.msra.mxu0 0
    %2339 = vmatprep.subr.bf16.mxu0 0
    %2340 = vmatpush1.bf16.msra.mxu0 0
    %2341 = vmatprep.subr.bf16.mxu0 0
    %2342 = vmatpush1.bf16.msra.mxu0 0
    %2343 = vmatprep.subr.bf16.mxu0 0
    %2344 = vmatpush1.bf16.msra.mxu0 0
    %2345 = vmatprep.subr.bf16.mxu0 0
    %2346 = vmatpush1.bf16.msra.mxu0 0
    %2347 = vmatprep.subr.bf16.mxu0 0
    %2348 = vmatpush1.bf16.msra.mxu0 0
    %2349 = vmatprep.mubr.bf16.mxu0 0
    %2350 = vmatmul.mubr.bf16.gmra.mrb[0].mxu0 %v2316
    %v2351 = vpop.f32.mrb[0].mxu0
    %v2352 = vadd.f32 0.0, %v2351
    %v2353 = vpop.f32.mrb[0].mxu0
    %v2354 = vadd.f32 0.0, %v2353
    %v2355 = vpop.f32.mrb[0].mxu0
    %v2356 = vpop.f32.mrb[0].mxu0
    %2357 = vdwg.mxu0
    %2358 = vmatprep.subr.bf16.mxu0 %v2141
    %2359 = vmatpush1.bf16.msra.mxu0 %v2140
    %2360 = vmatprep.subr.bf16.mxu0 %v2145
    %2361 = vmatpush1.bf16.msra.mxu0 %v2144
    %2362 = vmatprep.subr.bf16.mxu0 %v2149
    %2363 = vmatpush1.bf16.msra.mxu0 %v2148
    %2364 = vmatprep.subr.bf16.mxu0 %v2153
    %2365 = vmatpush1.bf16.msra.mxu0 %v2152
    %2366 = vmatprep.subr.bf16.mxu0 %v2157
    %2367 = vmatpush1.bf16.msra.mxu0 %v2156
    %2368 = vmatprep.subr.bf16.mxu0 %v2161
    %2369 = vmatpush1.bf16.msra.mxu0 %v2160
    %2370 = vmatprep.subr.bf16.mxu0 %v2165
    %2371 = vmatpush1.bf16.msra.mxu0 %v2164
    %2372 = vmatprep.subr.bf16.mxu0 %v2169
    %2373 = vmatpush1.bf16.msra.mxu0 %v2168
    %2374 = vmatprep.subr.bf16.mxu0 0
    %2375 = vmatpush1.bf16.msra.mxu0 0
    %2376 = vmatprep.subr.bf16.mxu0 0
    %2377 = vmatpush1.bf16.msra.mxu0 0
    %2378 = vmatprep.subr.bf16.mxu0 0
    %2379 = vmatpush1.bf16.msra.mxu0 0
    %2380 = vmatprep.subr.bf16.mxu0 0
    %2381 = vmatpush1.bf16.msra.mxu0 0
    %2382 = vmatprep.subr.bf16.mxu0 0
    %2383 = vmatpush1.bf16.msra.mxu0 0
    %2384 = vmatprep.subr.bf16.mxu0 0
    %2385 = vmatpush1.bf16.msra.mxu0 0
    %2386 = vmatprep.subr.bf16.mxu0 0
    %2387 = vmatpush1.bf16.msra.mxu0 0
    %2388 = vmatprep.subr.bf16.mxu0 0
    %2389 = vmatpush1.bf16.msra.mxu0 0
    %2390 = vmatprep.mubr.bf16.mxu0 0
    %2391 = vmatmul.mubr.bf16.gmra.mrb[0].mxu0 %v2316
    %v2392 = vpop.f32.mrb[0].mxu0
    %v2393 = vadd.f32 0.0, %v2392
    %v2394 = vpop.f32.mrb[0].mxu0
    %v2395 = vadd.f32 0.0, %v2394
    %v2396 = vpop.f32.mrb[0].mxu0
    %v2397 = vpop.f32.mrb[0].mxu0
    %2398 = vdwg.mxu0
    %v2399 = vadd.f32 %v2312, %v2352
    %v2400 = vadd.f32 %v2313, %v2354
    %v2401 = vadd.f32 %v2314, %v2393
    %v2402 = vadd.f32 %v2315, %v2395
    %v2403 = vxor.u32 %v2399, 2147483648
    %v2404 = vxor.u32 %v2400, 2147483648
    %v2405 = vmul.f32 %v2403, 1.442695
    %v2406 = vpow.pop %v2405
    %v2407 = vmul.f32 %v2404, 1.442695
    %v2408 = vpow.pop %v2407
    %v2409 = vadd.f32 %v2406, 1.0
    %v2410 = vadd.f32 %v2408, 1.0
    %v2411 = vrcp.pop %v2409
    %v2412 = vmul.f32 1.0, %v2411
    %v2413 = vrcp.pop %v2410
    %v2414 = vmul.f32 1.0, %v2413
    %v2415 = vtanh.pop %v2401
    %v2416 = vxor.u32 %v2402, 2147483648
    %v2417 = vmul.f32 %v2416, 1.442695
    %v2418 = vpow.pop %v2417
    %v2419 = vadd.f32 %v2418, 1.0
    %v2420 = vrcp.pop %v2419
    %v2421 = vmul.f32 1.0, %v2420
    %v2422 = vmul.f32 %v2414, %v2309
    %v2423 = vmul.f32 %v2412, %v2415
    %v2424 = vadd.f32 %v2422, %v2423
    %v2425 = vtanh.pop %v2424
    %v2426 = vmul.f32 %v2421, %v2425
    %v2427 = vld [vmem:[%s882] sm:$0xff]
    %v2428 = vld [vmem:[%s882 + $0x8] sm:$0xff]
    %v2429 = vld [vmem:[%s882 + $0x10] sm:$0xff]
    %v2430 = vld [vmem:[%s882 + $0x18] sm:$0xff]
    %v2431 = vpack.c.bf16 %v2426, %v2426
    %2432 = vmatprep.subr.bf16.mxu0 %v2139
    %2433 = vmatpush1.bf16.msra.mxu0 %v2138
    %2434 = vmatprep.subr.bf16.mxu0 %v2143
    %2435 = vmatpush1.bf16.msra.mxu0 %v2142
    %2436 = vmatprep.subr.bf16.mxu0 %v2147
    %2437 = vmatpush1.bf16.msra.mxu0 %v2146
    %2438 = vmatprep.subr.bf16.mxu0 %v2151
    %2439 = vmatpush1.bf16.msra.mxu0 %v2150
    %2440 = vmatprep.subr.bf16.mxu0 %v2155
    %2441 = vmatpush1.bf16.msra.mxu0 %v2154
    %2442 = vmatprep.subr.bf16.mxu0 %v2159
    %2443 = vmatpush1.bf16.msra.mxu0 %v2158
    %2444 = vmatprep.subr.bf16.mxu0 %v2163
    %2445 = vmatpush1.bf16.msra.mxu0 %v2162
    %2446 = vmatprep.subr.bf16.mxu0 %v2167
    %2447 = vmatpush1.bf16.msra.mxu0 %v2166
    %2448 = vmatprep.subr.bf16.mxu0 0
    %2449 = vmatpush1.bf16.msra.mxu0 0
    %2450 = vmatprep.subr.bf16.mxu0 0
    %2451 = vmatpush1.bf16.msra.mxu0 0
    %2452 = vmatprep.subr.bf16.mxu0 0
    %2453 = vmatpush1.bf16.msra.mxu0 0
    %2454 = vmatprep.subr.bf16.mxu0 0
    %2455 = vmatpush1.bf16.msra.mxu0 0
    %2456 = vmatprep.subr.bf16.mxu0 0
    %2457 = vmatpush1.bf16.msra.mxu0 0
    %2458 = vmatprep.subr.bf16.mxu0 0
    %2459 = vmatpush1.bf16.msra.mxu0 0
    %2460 = vmatprep.subr.bf16.mxu0 0
    %2461 = vmatpush1.bf16.msra.mxu0 0
    %2462 = vmatprep.subr.bf16.mxu0 0
    %2463 = vmatpush1.bf16.msra.mxu0 0
    %2464 = vmatprep.mubr.bf16.mxu0 0
    %2465 = vmatmul.mubr.bf16.gmra.mrb[0].mxu0 %v2431
    %v2466 = vpop.f32.mrb[0].mxu0
    %v2467 = vadd.f32 0.0, %v2466
    %v2468 = vpop.f32.mrb[0].mxu0
    %v2469 = vadd.f32 0.0, %v2468
    %v2470 = vpop.f32.mrb[0].mxu0
    %v2471 = vpop.f32.mrb[0].mxu0
    %2472 = vdwg.mxu0
    %2473 = vmatprep.subr.bf16.mxu0 %v2141
    %2474 = vmatpush1.bf16.msra.mxu0 %v2140
    %2475 = vmatprep.subr.bf16.mxu0 %v2145
    %2476 = vmatpush1.bf16.msra.mxu0 %v2144
    %2477 = vmatprep.subr.bf16.mxu0 %v2149
    %2478 = vmatpush1.bf16.msra.mxu0 %v2148
    %2479 = vmatprep.subr.bf16.mxu0 %v2153
    %2480 = vmatpush1.bf16.msra.mxu0 %v2152
    %2481 = vmatprep.subr.bf16.mxu0 %v2157
    %2482 = vmatpush1.bf16.msra.mxu0 %v2156
    %2483 = vmatprep.subr.bf16.mxu0 %v2161
    %2484 = vmatpush1.bf16.msra.mxu0 %v2160
    %2485 = vmatprep.subr.bf16.mxu0 %v2165
    %2486 = vmatpush1.bf16.msra.mxu0 %v2164
    %2487 = vmatprep.subr.bf16.mxu0 %v2169
    %2488 = vmatpush1.bf16.msra.mxu0 %v2168
    %2489 = vmatprep.subr.bf16.mxu0 0
    %2490 = vmatpush1.bf16.msra.mxu0 0
    %2491 = vmatprep.subr.bf16.mxu0 0
    %2492 = vmatpush1.bf16.msra.mxu0 0
    %2493 = vmatprep.subr.bf16.mxu0 0
    %2494 = vmatpush1.bf16.msra.mxu0 0
    %2495 = vmatprep.subr.bf16.mxu0 0
    %2496 = vmatpush1.bf16.msra.mxu0 0
    %2497 = vmatprep.subr.bf16.mxu0 0
    %2498 = vmatpush1.bf16.msra.mxu0 0
    %2499 = vmatprep.subr.bf16.mxu0 0
    %2500 = vmatpush1.bf16.msra.mxu0 0
    %2501 = vmatprep.subr.bf16.mxu0 0
    %2502 = vmatpush1.bf16.msra.mxu0 0
    %2503 = vmatprep.subr.bf16.mxu0 0
    %2504 = vmatpush1.bf16.msra.mxu0 0
    %2505 = vmatprep.mubr.bf16.mxu0 0
    %2506 = vmatmul.mubr.bf16.gmra.mrb[0].mxu0 %v2431
    %v2507 = vpop.f32.mrb[0].mxu0
    %v2508 = vadd.f32 0.0, %v2507
    %v2509 = vpop.f32.mrb[0].mxu0
    %v2510 = vadd.f32 0.0, %v2509
    %v2511 = vpop.f32.mrb[0].mxu0
    %v2512 = vpop.f32.mrb[0].mxu0
    %2513 = vdwg.mxu0
    %v2514 = vadd.f32 %v2427, %v2467
    %v2515 = vadd.f32 %v2428, %v2469
    %v2516 = vadd.f32 %v2429, %v2508
    %v2517 = vadd.f32 %v2430, %v2510
    %v2518 = vxor.u32 %v2514, 2147483648
    %v2519 = vxor.u32 %v2515, 2147483648
    %v2520 = vmul.f32 %v2518, 1.442695
    %v2521 = vpow.pop %v2520
    %v2522 = vmul.f32 %v2519, 1.442695
    %v2523 = vpow.pop %v2522
    %v2524 = vadd.f32 %v2521, 1.0
    %v2525 = vadd.f32 %v2523, 1.0
    %v2526 = vrcp.pop %v2524
    %v2527 = vmul.f32 1.0, %v2526
    %v2528 = vrcp.pop %v2525
    %v2529 = vmul.f32 1.0, %v2528
    %v2530 = vtanh.pop %v2516
    %v2531 = vxor.u32 %v2517, 2147483648
    %v2532 = vmul.f32 %v2531, 1.442695
    %v2533 = vpow.pop %v2532
    %v2534 = vadd.f32 %v2533, 1.0
    %v2535 = vrcp.pop %v2534
    %v2536 = vmul.f32 1.0, %v2535
    %v2537 = vmul.f32 %v2529, %v2424
    %v2538 = vmul.f32 %v2527, %v2530
    %v2539 = vadd.f32 %v2537, %v2538
    %v2540 = vtanh.pop %v2539
    %v2541 = vmul.f32 %v2536, %v2540
    %v2542 = vld [vmem:[%s1002] sm:$0xff]
    %v2543 = vld [vmem:[%s1002 + $0x8] sm:$0xff]
    %v2544 = vld [vmem:[%s1002 + $0x10] sm:$0xff]
    %v2545 = vld [vmem:[%s1002 + $0x18] sm:$0xff]
    %v2546 = vpack.c.bf16 %v2541, %v2541
    %2547 = vmatprep.subr.bf16.mxu0 %v2139
    %2548 = vmatpush1.bf16.msra.mxu0 %v2138
    %2549 = vmatprep.subr.bf16.mxu0 %v2143
    %2550 = vmatpush1.bf16.msra.mxu0 %v2142
    %2551 = vmatprep.subr.bf16.mxu0 %v2147
    %2552 = vmatpush1.bf16.msra.mxu0 %v2146
    %2553 = vmatprep.subr.bf16.mxu0 %v2151
    %2554 = vmatpush1.bf16.msra.mxu0 %v2150
    %2555 = vmatprep.subr.bf16.mxu0 %v2155
    %2556 = vmatpush1.bf16.msra.mxu0 %v2154
    %2557 = vmatprep.subr.bf16.mxu0 %v2159
    %2558 = vmatpush1.bf16.msra.mxu0 %v2158
    %2559 = vmatprep.subr.bf16.mxu0 %v2163
    %2560 = vmatpush1.bf16.msra.mxu0 %v2162
    %2561 = vmatprep.subr.bf16.mxu0 %v2167
    %2562 = vmatpush1.bf16.msra.mxu0 %v2166
    %2563 = vmatprep.subr.bf16.mxu0 0
    %2564 = vmatpush1.bf16.msra.mxu0 0
    %2565 = vmatprep.subr.bf16.mxu0 0
    %2566 = vmatpush1.bf16.msra.mxu0 0
    %2567 = vmatprep.subr.bf16.mxu0 0
    %2568 = vmatpush1.bf16.msra.mxu0 0
    %2569 = vmatprep.subr.bf16.mxu0 0
    %2570 = vmatpush1.bf16.msra.mxu0 0
    %2571 = vmatprep.subr.bf16.mxu0 0
    %2572 = vmatpush1.bf16.msra.mxu0 0
    %2573 = vmatprep.subr.bf16.mxu0 0
    %2574 = vmatpush1.bf16.msra.mxu0 0
    %2575 = vmatprep.subr.bf16.mxu0 0
    %2576 = vmatpush1.bf16.msra.mxu0 0
    %2577 = vmatprep.subr.bf16.mxu0 0
    %2578 = vmatpush1.bf16.msra.mxu0 0
    %2579 = vmatprep.mubr.bf16.mxu0 0
    %2580 = vmatmul.mubr.bf16.gmra.mrb[0].mxu0 %v2546
    %v2581 = vpop.f32.mrb[0].mxu0
    %v2582 = vadd.f32 0.0, %v2581
    %v2583 = vpop.f32.mrb[0].mxu0
    %v2584 = vadd.f32 0.0, %v2583
    %v2585 = vpop.f32.mrb[0].mxu0
    %v2586 = vpop.f32.mrb[0].mxu0
    %2587 = vdwg.mxu0
    %2588 = vmatprep.subr.bf16.mxu0 %v2141
    %2589 = vmatpush1.bf16.msra.mxu0 %v2140
    %2590 = vmatprep.subr.bf16.mxu0 %v2145
    %2591 = vmatpush1.bf16.msra.mxu0 %v2144
    %2592 = vmatprep.subr.bf16.mxu0 %v2149
    %2593 = vmatpush1.bf16.msra.mxu0 %v2148
    %2594 = vmatprep.subr.bf16.mxu0 %v2153
    %2595 = vmatpush1.bf16.msra.mxu0 %v2152
    %2596 = vmatprep.subr.bf16.mxu0 %v2157
    %2597 = vmatpush1.bf16.msra.mxu0 %v2156
    %2598 = vmatprep.subr.bf16.mxu0 %v2161
    %2599 = vmatpush1.bf16.msra.mxu0 %v2160
    %2600 = vmatprep.subr.bf16.mxu0 %v2165
    %2601 = vmatpush1.bf16.msra.mxu0 %v2164
    %2602 = vmatprep.subr.bf16.mxu0 %v2169
    %2603 = vmatpush1.bf16.msra.mxu0 %v2168
    %2604 = vmatprep.subr.bf16.mxu0 0
    %2605 = vmatpush1.bf16.msra.mxu0 0
    %2606 = vmatprep.subr.bf16.mxu0 0
    %2607 = vmatpush1.bf16.msra.mxu0 0
    %2608 = vmatprep.subr.bf16.mxu0 0
    %2609 = vmatpush1.bf16.msra.mxu0 0
    %2610 = vmatprep.subr.bf16.mxu0 0
    %2611 = vmatpush1.bf16.msra.mxu0 0
    %2612 = vmatprep.subr.bf16.mxu0 0
    %2613 = vmatpush1.bf16.msra.mxu0 0
    %2614 = vmatprep.subr.bf16.mxu0 0
    %2615 = vmatpush1.bf16.msra.mxu0 0
    %2616 = vmatprep.subr.bf16.mxu0 0
    %2617 = vmatpush1.bf16.msra.mxu0 0
    %2618 = vmatprep.subr.bf16.mxu0 0
    %2619 = vmatpush1.bf16.msra.mxu0 0
    %2620 = vmatprep.mubr.bf16.mxu0 0
    %2621 = vmatmul.mubr.bf16.gmra.mrb[0].mxu0 %v2546
    %v2622 = vpop.f32.mrb[0].mxu0
    %v2623 = vadd.f32 0.0, %v2622
    %v2624 = vpop.f32.mrb[0].mxu0
    %v2625 = vadd.f32 0.0, %v2624
    %v2626 = vpop.f32.mrb[0].mxu0
    %v2627 = vpop.f32.mrb[0].mxu0
    %2628 = vdwg.mxu0
    %v2629 = vadd.f32 %v2542, %v2582
    %v2630 = vadd.f32 %v2543, %v2584
    %v2631 = vadd.f32 %v2544, %v2623
    %v2632 = vadd.f32 %v2545, %v2625
    %v2633 = vxor.u32 %v2629, 2147483648
    %v2634 = vxor.u32 %v2630, 2147483648
    %v2635 = vmul.f32 %v2633, 1.442695
    %v2636 = vpow.pop %v2635
    %v2637 = vmul.f32 %v2634, 1.442695
    %v2638 = vpow.pop %v2637
    %v2639 = vadd.f32 %v2636, 1.0
    %v2640 = vadd.f32 %v2638, 1.0
    %v2641 = vrcp.pop %v2639
    %v2642 = vmul.f32 1.0, %v2641
    %v2643 = vrcp.pop %v2640
    %v2644 = vmul.f32 1.0, %v2643
    %v2645 = vtanh.pop %v2631
    %v2646 = vxor.u32 %v2632, 2147483648
    %v2647 = vmul.f32 %v2646, 1.442695
    %v2648 = vpow.pop %v2647
    %v2649 = vadd.f32 %v2648, 1.0
    %v2650 = vrcp.pop %v2649
    %v2651 = vmul.f32 1.0, %v2650
    %v2652 = vmul.f32 %v2644, %v2539
    %v2653 = vmul.f32 %v2642, %v2645
    %v2654 = vadd.f32 %v2652, %v2653
    %v2655 = vtanh.pop %v2654
    %v2656 = vmul.f32 %v2651, %v2655
    %v2657 = vld [vmem:[%s1122] sm:$0xff]
    %v2658 = vld [vmem:[%s1122 + $0x8] sm:$0xff]
    %v2659 = vld [vmem:[%s1122 + $0x10] sm:$0xff]
    %v2660 = vld [vmem:[%s1122 + $0x18] sm:$0xff]
    %v2661 = vpack.c.bf16 %v2656, %v2656
    %2662 = vmatprep.subr.bf16.mxu0 %v2139
    %2663 = vmatpush1.bf16.msra.mxu0 %v2138
    %2664 = vmatprep.subr.bf16.mxu0 %v2143
    %2665 = vmatpush1.bf16.msra.mxu0 %v2142
    %2666 = vmatprep.subr.bf16.mxu0 %v2147
    %2667 = vmatpush1.bf16.msra.mxu0 %v2146
    %2668 = vmatprep.subr.bf16.mxu0 %v2151
    %2669 = vmatpush1.bf16.msra.mxu0 %v2150
    %2670 = vmatprep.subr.bf16.mxu0 %v2155
    %2671 = vmatpush1.bf16.msra.mxu0 %v2154
    %2672 = vmatprep.subr.bf16.mxu0 %v2159
    %2673 = vmatpush1.bf16.msra.mxu0 %v2158
    %2674 = vmatprep.subr.bf16.mxu0 %v2163
    %2675 = vmatpush1.bf16.msra.mxu0 %v2162
    %2676 = vmatprep.subr.bf16.mxu0 %v2167
    %2677 = vmatpush1.bf16.msra.mxu0 %v2166
    %2678 = vmatprep.subr.bf16.mxu0 0
    %2679 = vmatpush1.bf16.msra.mxu0 0
    %2680 = vmatprep.subr.bf16.mxu0 0
    %2681 = vmatpush1.bf16.msra.mxu0 0
    %2682 = vmatprep.subr.bf16.mxu0 0
    %2683 = vmatpush1.bf16.msra.mxu0 0
    %2684 = vmatprep.subr.bf16.mxu0 0
    %2685 = vmatpush1.bf16.msra.mxu0 0
    %2686 = vmatprep.subr.bf16.mxu0 0
    %2687 = vmatpush1.bf16.msra.mxu0 0
    %2688 = vmatprep.subr.bf16.mxu0 0
    %2689 = vmatpush1.bf16.msra.mxu0 0
    %2690 = vmatprep.subr.bf16.mxu0 0
    %2691 = vmatpush1.bf16.msra.mxu0 0
    %2692 = vmatprep.subr.bf16.mxu0 0
    %2693 = vmatpush1.bf16.msra.mxu0 0
    %2694 = vmatprep.mubr.bf16.mxu0 0
    %2695 = vmatmul.mubr.bf16.gmra.mrb[0].mxu0 %v2661
    %v2696 = vpop.f32.mrb[0].mxu0
    %v2697 = vadd.f32 0.0, %v2696
    %v2698 = vpop.f32.mrb[0].mxu0
    %v2699 = vadd.f32 0.0, %v2698
    %v2700 = vpop.f32.mrb[0].mxu0
    %v2701 = vpop.f32.mrb[0].mxu0
    %2702 = vdwg.mxu0
    %2703 = vmatprep.subr.bf16.mxu0 %v2141
    %2704 = vmatpush1.bf16.msra.mxu0 %v2140
    %2705 = vmatprep.subr.bf16.mxu0 %v2145
    %2706 = vmatpush1.bf16.msra.mxu0 %v2144
    %2707 = vmatprep.subr.bf16.mxu0 %v2149
    %2708 = vmatpush1.bf16.msra.mxu0 %v2148
    %2709 = vmatprep.subr.bf16.mxu0 %v2153
    %2710 = vmatpush1.bf16.msra.mxu0 %v2152
    %2711 = vmatprep.subr.bf16.mxu0 %v2157
    %2712 = vmatpush1.bf16.msra.mxu0 %v2156
    %2713 = vmatprep.subr.bf16.mxu0 %v2161
    %2714 = vmatpush1.bf16.msra.mxu0 %v2160
    %2715 = vmatprep.subr.bf16.mxu0 %v2165
    %2716 = vmatpush1.bf16.msra.mxu0 %v2164
    %2717 = vmatprep.subr.bf16.mxu0 %v2169
    %2718 = vmatpush1.bf16.msra.mxu0 %v2168
    %2719 = vmatprep.subr.bf16.mxu0 0
    %2720 = vmatpush1.bf16.msra.mxu0 0
    %2721 = vmatprep.subr.bf16.mxu0 0
    %2722 = vmatpush1.bf16.msra.mxu0 0
    %2723 = vmatprep.subr.bf16.mxu0 0
    %2724 = vmatpush1.bf16.msra.mxu0 0
    %2725 = vmatprep.subr.bf16.mxu0 0
    %2726 = vmatpush1.bf16.msra.mxu0 0
    %2727 = vmatprep.subr.bf16.mxu0 0
    %2728 = vmatpush1.bf16.msra.mxu0 0
    %2729 = vmatprep.subr.bf16.mxu0 0
    %2730 = vmatpush1.bf16.msra.mxu0 0
    %2731 = vmatprep.subr.bf16.mxu0 0
    %2732 = vmatpush1.bf16.msra.mxu0 0
    %2733 = vmatprep.subr.bf16.mxu0 0
    %2734 = vmatpush1.bf16.msra.mxu0 0
    %2735 = vmatprep.mubr.bf16.mxu0 0
    %2736 = vmatmul.mubr.bf16.gmra.mrb[0].mxu0 %v2661
    %v2737 = vpop.f32.mrb[0].mxu0
    %v2738 = vadd.f32 0.0, %v2737
    %v2739 = vpop.f32.mrb[0].mxu0
    %v2740 = vadd.f32 0.0, %v2739
    %v2741 = vpop.f32.mrb[0].mxu0
    %v2742 = vpop.f32.mrb[0].mxu0
    %2743 = vdwg.mxu0
    %v2744 = vadd.f32 %v2657, %v2697
    %v2745 = vadd.f32 %v2658, %v2699
    %v2746 = vadd.f32 %v2659, %v2738
    %v2747 = vadd.f32 %v2660, %v2740
    %v2748 = vxor.u32 %v2744, 2147483648
    %v2749 = vxor.u32 %v2745, 2147483648
    %v2750 = vmul.f32 %v2748, 1.442695
    %v2751 = vpow.pop %v2750
    %v2752 = vmul.f32 %v2749, 1.442695
    %v2753 = vpow.pop %v2752
    %v2754 = vadd.f32 %v2751, 1.0
    %v2755 = vadd.f32 %v2753, 1.0
    %v2756 = vrcp.pop %v2754
    %v2757 = vmul.f32 1.0, %v2756
    %v2758 = vrcp.pop %v2755
    %v2759 = vmul.f32 1.0, %v2758
    %v2760 = vtanh.pop %v2746
    %v2761 = vxor.u32 %v2747, 2147483648
    %v2762 = vmul.f32 %v2761, 1.442695
    %v2763 = vpow.pop %v2762
    %v2764 = vadd.f32 %v2763, 1.0
    %v2765 = vrcp.pop %v2764
    %v2766 = vmul.f32 1.0, %v2765
    %v2767 = vmul.f32 %v2759, %v2654
    %v2768 = vmul.f32 %v2757, %v2760
    %v2769 = vadd.f32 %v2767, %v2768
    %v2770 = vtanh.pop %v2769
    %v2771 = vmul.f32 %v2766, %v2770
    %v2772 = vld [vmem:[%s1242] sm:$0xff]
    %v2773 = vld [vmem:[%s1242 + $0x8] sm:$0xff]
    %v2774 = vld [vmem:[%s1242 + $0x10] sm:$0xff]
    %v2775 = vld [vmem:[%s1242 + $0x18] sm:$0xff]
    %v2776 = vpack.c.bf16 %v2771, %v2771
    %2777 = vmatprep.subr.bf16.mxu0 %v2139
    %2778 = vmatpush1.bf16.msra.mxu0 %v2138
    %2779 = vmatprep.subr.bf16.mxu0 %v2143
    %2780 = vmatpush1.bf16.msra.mxu0 %v2142
    %2781 = vmatprep.subr.bf16.mxu0 %v2147
    %2782 = vmatpush1.bf16.msra.mxu0 %v2146
    %2783 = vmatprep.subr.bf16.mxu0 %v2151
    %2784 = vmatpush1.bf16.msra.mxu0 %v2150
    %2785 = vmatprep.subr.bf16.mxu0 %v2155
    %2786 = vmatpush1.bf16.msra.mxu0 %v2154
    %2787 = vmatprep.subr.bf16.mxu0 %v2159
    %2788 = vmatpush1.bf16.msra.mxu0 %v2158
    %2789 = vmatprep.subr.bf16.mxu0 %v2163
    %2790 = vmatpush1.bf16.msra.mxu0 %v2162
    %2791 = vmatprep.subr.bf16.mxu0 %v2167
    %2792 = vmatpush1.bf16.msra.mxu0 %v2166
    %2793 = vmatprep.subr.bf16.mxu0 0
    %2794 = vmatpush1.bf16.msra.mxu0 0
    %2795 = vmatprep.subr.bf16.mxu0 0
    %2796 = vmatpush1.bf16.msra.mxu0 0
    %2797 = vmatprep.subr.bf16.mxu0 0
    %2798 = vmatpush1.bf16.msra.mxu0 0
    %2799 = vmatprep.subr.bf16.mxu0 0
    %2800 = vmatpush1.bf16.msra.mxu0 0
    %2801 = vmatprep.subr.bf16.mxu0 0
    %2802 = vmatpush1.bf16.msra.mxu0 0
    %2803 = vmatprep.subr.bf16.mxu0 0
    %2804 = vmatpush1.bf16.msra.mxu0 0
    %2805 = vmatprep.subr.bf16.mxu0 0
    %2806 = vmatpush1.bf16.msra.mxu0 0
    %2807 = vmatprep.subr.bf16.mxu0 0
    %2808 = vmatpush1.bf16.msra.mxu0 0
    %2809 = vmatprep.mubr.bf16.mxu0 0
    %2810 = vmatmul.mubr.bf16.gmra.mrb[0].mxu0 %v2776
    %v2811 = vpop.f32.mrb[0].mxu0
    %v2812 = vadd.f32 0.0, %v2811
    %v2813 = vpop.f32.mrb[0].mxu0
    %v2814 = vadd.f32 0.0, %v2813
    %v2815 = vpop.f32.mrb[0].mxu0
    %v2816 = vpop.f32.mrb[0].mxu0
    %2817 = vdwg.mxu0
    %2818 = vmatprep.subr.bf16.mxu0 %v2141
    %2819 = vmatpush1.bf16.msra.mxu0 %v2140
    %2820 = vmatprep.subr.bf16.mxu0 %v2145
    %2821 = vmatpush1.bf16.msra.mxu0 %v2144
    %2822 = vmatprep.subr.bf16.mxu0 %v2149
    %2823 = vmatpush1.bf16.msra.mxu0 %v2148
    %2824 = vmatprep.subr.bf16.mxu0 %v2153
    %2825 = vmatpush1.bf16.msra.mxu0 %v2152
    %2826 = vmatprep.subr.bf16.mxu0 %v2157
    %2827 = vmatpush1.bf16.msra.mxu0 %v2156
    %2828 = vmatprep.subr.bf16.mxu0 %v2161
    %2829 = vmatpush1.bf16.msra.mxu0 %v2160
    %2830 = vmatprep.subr.bf16.mxu0 %v2165
    %2831 = vmatpush1.bf16.msra.mxu0 %v2164
    %2832 = vmatprep.subr.bf16.mxu0 %v2169
    %2833 = vmatpush1.bf16.msra.mxu0 %v2168
    %2834 = vmatprep.subr.bf16.mxu0 0
    %2835 = vmatpush1.bf16.msra.mxu0 0
    %2836 = vmatprep.subr.bf16.mxu0 0
    %2837 = vmatpush1.bf16.msra.mxu0 0
    %2838 = vmatprep.subr.bf16.mxu0 0
    %2839 = vmatpush1.bf16.msra.mxu0 0
    %2840 = vmatprep.subr.bf16.mxu0 0
    %2841 = vmatpush1.bf16.msra.mxu0 0
    %2842 = vmatprep.subr.bf16.mxu0 0
    %2843 = vmatpush1.bf16.msra.mxu0 0
    %2844 = vmatprep.subr.bf16.mxu0 0
    %2845 = vmatpush1.bf16.msra.mxu0 0
    %2846 = vmatprep.subr.bf16.mxu0 0
    %2847 = vmatpush1.bf16.msra.mxu0 0
    %2848 = vmatprep.subr.bf16.mxu0 0
    %2849 = vmatpush1.bf16.msra.mxu0 0
    %2850 = vmatprep.mubr.bf16.mxu0 0
    %2851 = vmatmul.mubr.bf16.gmra.mrb[0].mxu0 %v2776
    %v2852 = vpop.f32.mrb[0].mxu0
    %v2853 = vadd.f32 0.0, %v2852
    %v2854 = vpop.f32.mrb[0].mxu0
    %v2855 = vadd.f32 0.0, %v2854
    %v2856 = vpop.f32.mrb[0].mxu0
    %v2857 = vpop.f32.mrb[0].mxu0
    %2858 = vdwg.mxu0
    %v2859 = vadd.f32 %v2772, %v2812
    %v2860 = vadd.f32 %v2773, %v2814
    %v2861 = vadd.f32 %v2774, %v2853
    %v2862 = vadd.f32 %v2775, %v2855
    %v2863 = vxor.u32 %v2859, 2147483648
    %v2864 = vxor.u32 %v2860, 2147483648
    %v2865 = vmul.f32 %v2863, 1.442695
    %v2866 = vpow.pop %v2865
    %v2867 = vmul.f32 %v2864, 1.442695
    %v2868 = vpow.pop %v2867
    %v2869 = vadd.f32 %v2866, 1.0
    %v2870 = vadd.f32 %v2868, 1.0
    %v2871 = vrcp.pop %v2869
    %v2872 = vmul.f32 1.0, %v2871
    %v2873 = vrcp.pop %v2870
    %v2874 = vmul.f32 1.0, %v2873
    %v2875 = vtanh.pop %v2861
    %v2876 = vxor.u32 %v2862, 2147483648
    %v2877 = vmul.f32 %v2876, 1.442695
    %v2878 = vpow.pop %v2877
    %v2879 = vadd.f32 %v2878, 1.0
    %v2880 = vrcp.pop %v2879
    %v2881 = vmul.f32 1.0, %v2880
    %v2882 = vmul.f32 %v2874, %v2769
    %v2883 = vmul.f32 %v2872, %v2875
    %v2884 = vadd.f32 %v2882, %v2883
    %v2885 = vtanh.pop %v2884
    %v2886 = vmul.f32 %v2881, %v2885
    %v2887 = vld [vmem:[%s1362] sm:$0xff]
    %v2888 = vld [vmem:[%s1362 + $0x8] sm:$0xff]
    %v2889 = vld [vmem:[%s1362 + $0x10] sm:$0xff]
    %v2890 = vld [vmem:[%s1362 + $0x18] sm:$0xff]
    %v2891 = vpack.c.bf16 %v2886, %v2886
    %2892 = vmatprep.subr.bf16.mxu0 %v2139
    %2893 = vmatpush1.bf16.msra.mxu0 %v2138
    %2894 = vmatprep.subr.bf16.mxu0 %v2143
    %2895 = vmatpush1.bf16.msra.mxu0 %v2142
    %2896 = vmatprep.subr.bf16.mxu0 %v2147
    %2897 = vmatpush1.bf16.msra.mxu0 %v2146
    %2898 = vmatprep.subr.bf16.mxu0 %v2151
    %2899 = vmatpush1.bf16.msra.mxu0 %v2150
    %2900 = vmatprep.subr.bf16.mxu0 %v2155
    %2901 = vmatpush1.bf16.msra.mxu0 %v2154
    %2902 = vmatprep.subr.bf16.mxu0 %v2159
    %2903 = vmatpush1.bf16.msra.mxu0 %v2158
    %2904 = vmatprep.subr.bf16.mxu0 %v2163
    %2905 = vmatpush1.bf16.msra.mxu0 %v2162
    %2906 = vmatprep.subr.bf16.mxu0 %v2167
    %2907 = vmatpush1.bf16.msra.mxu0 %v2166
    %2908 = vmatprep.subr.bf16.mxu0 0
    %2909 = vmatpush1.bf16.msra.mxu0 0
    %2910 = vmatprep.subr.bf16.mxu0 0
    %2911 = vmatpush1.bf16.msra.mxu0 0
    %2912 = vmatprep.subr.bf16.mxu0 0
    %2913 = vmatpush1.bf16.msra.mxu0 0
    %2914 = vmatprep.subr.bf16.mxu0 0
    %2915 = vmatpush1.bf16.msra.mxu0 0
    %2916 = vmatprep.subr.bf16.mxu0 0
    %2917 = vmatpush1.bf16.msra.mxu0 0
    %2918 = vmatprep.subr.bf16.mxu0 0
    %2919 = vmatpush1.bf16.msra.mxu0 0
    %2920 = vmatprep.subr.bf16.mxu0 0
    %2921 = vmatpush1.bf16.msra.mxu0 0
    %2922 = vmatprep.subr.bf16.mxu0 0
    %2923 = vmatpush1.bf16.msra.mxu0 0
    %2924 = vmatprep.mubr.bf16.mxu0 0
    %2925 = vmatmul.mubr.bf16.gmra.mrb[0].mxu0 %v2891
    %v2926 = vpop.f32.mrb[0].mxu0
    %v2927 = vadd.f32 0.0, %v2926
    %v2928 = vpop.f32.mrb[0].mxu0
    %v2929 = vadd.f32 0.0, %v2928
    %v2930 = vpop.f32.mrb[0].mxu0
    %v2931 = vpop.f32.mrb[0].mxu0
    %2932 = vdwg.mxu0
    %2933 = vmatprep.subr.bf16.mxu0 %v2141
    %2934 = vmatpush1.bf16.msra.mxu0 %v2140
    %2935 = vmatprep.subr.bf16.mxu0 %v2145
    %2936 = vmatpush1.bf16.msra.mxu0 %v2144
    %2937 = vmatprep.subr.bf16.mxu0 %v2149
    %2938 = vmatpush1.bf16.msra.mxu0 %v2148
    %2939 = vmatprep.subr.bf16.mxu0 %v2153
    %2940 = vmatpush1.bf16.msra.mxu0 %v2152
    %2941 = vmatprep.subr.bf16.mxu0 %v2157
    %2942 = vmatpush1.bf16.msra.mxu0 %v2156
    %2943 = vmatprep.subr.bf16.mxu0 %v2161
    %2944 = vmatpush1.bf16.msra.mxu0 %v2160
    %2945 = vmatprep.subr.bf16.mxu0 %v2165
    %2946 = vmatpush1.bf16.msra.mxu0 %v2164
    %2947 = vmatprep.subr.bf16.mxu0 %v2169
    %2948 = vmatpush1.bf16.msra.mxu0 %v2168
    %2949 = vmatprep.subr.bf16.mxu0 0
    %2950 = vmatpush1.bf16.msra.mxu0 0
    %2951 = vmatprep.subr.bf16.mxu0 0
    %2952 = vmatpush1.bf16.msra.mxu0 0
    %2953 = vmatprep.subr.bf16.mxu0 0
    %2954 = vmatpush1.bf16.msra.mxu0 0
    %2955 = vmatprep.subr.bf16.mxu0 0
    %2956 = vmatpush1.bf16.msra.mxu0 0
    %2957 = vmatprep.subr.bf16.mxu0 0
    %2958 = vmatpush1.bf16.msra.mxu0 0
    %2959 = vmatprep.subr.bf16.mxu0 0
    %2960 = vmatpush1.bf16.msra.mxu0 0
    %2961 = vmatprep.subr.bf16.mxu0 0
    %2962 = vmatpush1.bf16.msra.mxu0 0
    %2963 = vmatprep.subr.bf16.mxu0 0
    %2964 = vmatpush1.bf16.msra.mxu0 0
    %2965 = vmatprep.mubr.bf16.mxu0 0
    %2966 = vmatmul.mubr.bf16.gmra.mrb[0].mxu0 %v2891
    %v2967 = vpop.f32.mrb[0].mxu0
    %v2968 = vadd.f32 0.0, %v2967
    %v2969 = vpop.f32.mrb[0].mxu0
    %v2970 = vadd.f32 0.0, %v2969
    %v2971 = vpop.f32.mrb[0].mxu0
    %v2972 = vpop.f32.mrb[0].mxu0
    %2973 = vdwg.mxu0
    %v2974 = vadd.f32 %v2887, %v2927
    %v2975 = vadd.f32 %v2888, %v2929
    %v2976 = vadd.f32 %v2889, %v2968
    %v2977 = vadd.f32 %v2890, %v2970
    %v2978 = vxor.u32 %v2974, 2147483648
    %v2979 = vxor.u32 %v2975, 2147483648
    %v2980 = vmul.f32 %v2978, 1.442695
    %v2981 = vpow.pop %v2980
    %v2982 = vmul.f32 %v2979, 1.442695
    %v2983 = vpow.pop %v2982
    %v2984 = vadd.f32 %v2981, 1.0
    %v2985 = vadd.f32 %v2983, 1.0
    %v2986 = vrcp.pop %v2984
    %v2987 = vmul.f32 1.0, %v2986
    %v2988 = vrcp.pop %v2985
    %v2989 = vmul.f32 1.0, %v2988
    %v2990 = vtanh.pop %v2976
    %v2991 = vxor.u32 %v2977, 2147483648
    %v2992 = vmul.f32 %v2991, 1.442695
    %v2993 = vpow.pop %v2992
    %v2994 = vadd.f32 %v2993, 1.0
    %v2995 = vrcp.pop %v2994
    %v2996 = vmul.f32 1.0, %v2995
    %v2997 = vmul.f32 %v2989, %v2884
    %v2998 = vmul.f32 %v2987, %v2990
    %v2999 = vadd.f32 %v2997, %v2998
    %v3000 = vtanh.pop %v2999
    %v3001 = vmul.f32 %v2996, %v3000
    %v3002 = vld [vmem:[%s1482] sm:$0xff]
    %v3003 = vld [vmem:[%s1482 + $0x8] sm:$0xff]
    %v3004 = vld [vmem:[%s1482 + $0x10] sm:$0xff]
    %v3005 = vld [vmem:[%s1482 + $0x18] sm:$0xff]
    %v3006 = vpack.c.bf16 %v3001, %v3001
    %3007 = vmatprep.subr.bf16.mxu0 %v2139
    %3008 = vmatpush1.bf16.msra.mxu0 %v2138
    %3009 = vmatprep.subr.bf16.mxu0 %v2143
    %3010 = vmatpush1.bf16.msra.mxu0 %v2142
    %3011 = vmatprep.subr.bf16.mxu0 %v2147
    %3012 = vmatpush1.bf16.msra.mxu0 %v2146
    %3013 = vmatprep.subr.bf16.mxu0 %v2151
    %3014 = vmatpush1.bf16.msra.mxu0 %v2150
    %3015 = vmatprep.subr.bf16.mxu0 %v2155
    %3016 = vmatpush1.bf16.msra.mxu0 %v2154
    %3017 = vmatprep.subr.bf16.mxu0 %v2159
    %3018 = vmatpush1.bf16.msra.mxu0 %v2158
    %3019 = vmatprep.subr.bf16.mxu0 %v2163
    %3020 = vmatpush1.bf16.msra.mxu0 %v2162
    %3021 = vmatprep.subr.bf16.mxu0 %v2167
    %3022 = vmatpush1.bf16.msra.mxu0 %v2166
    %3023 = vmatprep.subr.bf16.mxu0 0
    %3024 = vmatpush1.bf16.msra.mxu0 0
    %3025 = vmatprep.subr.bf16.mxu0 0
    %3026 = vmatpush1.bf16.msra.mxu0 0
    %3027 = vmatprep.subr.bf16.mxu0 0
    %3028 = vmatpush1.bf16.msra.mxu0 0
    %3029 = vmatprep.subr.bf16.mxu0 0
    %3030 = vmatpush1.bf16.msra.mxu0 0
    %3031 = vmatprep.subr.bf16.mxu0 0
    %3032 = vmatpush1.bf16.msra.mxu0 0
    %3033 = vmatprep.subr.bf16.mxu0 0
    %3034 = vmatpush1.bf16.msra.mxu0 0
    %3035 = vmatprep.subr.bf16.mxu0 0
    %3036 = vmatpush1.bf16.msra.mxu0 0
    %3037 = vmatprep.subr.bf16.mxu0 0
    %3038 = vmatpush1.bf16.msra.mxu0 0
    %3039 = vmatprep.mubr.bf16.mxu0 0
    %3040 = vmatmul.mubr.bf16.gmra.mrb[0].mxu0 %v3006
    %v3041 = vpop.f32.mrb[0].mxu0
    %v3042 = vadd.f32 0.0, %v3041
    %v3043 = vpop.f32.mrb[0].mxu0
    %v3044 = vadd.f32 0.0, %v3043
    %v3045 = vpop.f32.mrb[0].mxu0
    %v3046 = vpop.f32.mrb[0].mxu0
    %3047 = vdwg.mxu0
    %3048 = vmatprep.subr.bf16.mxu0 %v2141
    %3049 = vmatpush1.bf16.msra.mxu0 %v2140
    %3050 = vmatprep.subr.bf16.mxu0 %v2145
    %3051 = vmatpush1.bf16.msra.mxu0 %v2144
    %3052 = vmatprep.subr.bf16.mxu0 %v2149
    %3053 = vmatpush1.bf16.msra.mxu0 %v2148
    %3054 = vmatprep.subr.bf16.mxu0 %v2153
    %3055 = vmatpush1.bf16.msra.mxu0 %v2152
    %3056 = vmatprep.subr.bf16.mxu0 %v2157
    %3057 = vmatpush1.bf16.msra.mxu0 %v2156
    %3058 = vmatprep.subr.bf16.mxu0 %v2161
    %3059 = vmatpush1.bf16.msra.mxu0 %v2160
    %3060 = vmatprep.subr.bf16.mxu0 %v2165
    %3061 = vmatpush1.bf16.msra.mxu0 %v2164
    %3062 = vmatprep.subr.bf16.mxu0 %v2169
    %3063 = vmatpush1.bf16.msra.mxu0 %v2168
    %3064 = vmatprep.subr.bf16.mxu0 0
    %3065 = vmatpush1.bf16.msra.mxu0 0
    %3066 = vmatprep.subr.bf16.mxu0 0
    %3067 = vmatpush1.bf16.msra.mxu0 0
    %3068 = vmatprep.subr.bf16.mxu0 0
    %3069 = vmatpush1.bf16.msra.mxu0 0
    %3070 = vmatprep.subr.bf16.mxu0 0
    %3071 = vmatpush1.bf16.msra.mxu0 0
    %3072 = vmatprep.subr.bf16.mxu0 0
    %3073 = vmatpush1.bf16.msra.mxu0 0
    %3074 = vmatprep.subr.bf16.mxu0 0
    %3075 = vmatpush1.bf16.msra.mxu0 0
    %3076 = vmatprep.subr.bf16.mxu0 0
    %3077 = vmatpush1.bf16.msra.mxu0 0
    %3078 = vmatprep.subr.bf16.mxu0 0
    %3079 = vmatpush1.bf16.msra.mxu0 0
    %3080 = vmatprep.mubr.bf16.mxu0 0
    %3081 = vmatmul.mubr.bf16.gmra.mrb[0].mxu0 %v3006
    %v3082 = vpop.f32.mrb[0].mxu0
    %v3083 = vadd.f32 0.0, %v3082
    %v3084 = vpop.f32.mrb[0].mxu0
    %v3085 = vadd.f32 0.0, %v3084
    %v3086 = vpop.f32.mrb[0].mxu0
    %v3087 = vpop.f32.mrb[0].mxu0
    %3088 = vdwg.mxu0
    %v3089 = vadd.f32 %v3002, %v3042
    %v3090 = vadd.f32 %v3003, %v3044
    %v3091 = vadd.f32 %v3004, %v3083
    %v3092 = vadd.f32 %v3005, %v3085
    %v3093 = vxor.u32 %v3089, 2147483648
    %v3094 = vxor.u32 %v3090, 2147483648
    %v3095 = vmul.f32 %v3093, 1.442695
    %v3096 = vpow.pop %v3095
    %v3097 = vmul.f32 %v3094, 1.442695
    %v3098 = vpow.pop %v3097
    %v3099 = vadd.f32 %v3096, 1.0
    %v3100 = vadd.f32 %v3098, 1.0
    %v3101 = vrcp.pop %v3099
    %v3102 = vmul.f32 1.0, %v3101
    %v3103 = vrcp.pop %v3100
    %v3104 = vmul.f32 1.0, %v3103
    %v3105 = vtanh.pop %v3091
    %v3106 = vxor.u32 %v3092, 2147483648
    %v3107 = vmul.f32 %v3106, 1.442695
    %v3108 = vpow.pop %v3107
    %v3109 = vadd.f32 %v3108, 1.0
    %v3110 = vrcp.pop %v3109
    %v3111 = vmul.f32 1.0, %v3110
    %v3112 = vmul.f32 %v3104, %v2999
    %v3113 = vmul.f32 %v3102, %v3105
    %v3114 = vadd.f32 %v3112, %v3113
    %v3115 = vtanh.pop %v3114
    %v3116 = vmul.f32 %v3111, %v3115
    %s3117 = scalar_lea.vmem [#allocation23], 8
    %3118 = vst [vmem:[%s3117] sm:$0xff] %v3116
    %s3119 = scalar_lea.vmem [#allocation25], 8
    %3120 = vst [vmem:[%s3119] sm:$0xff] %v3114
    %v3121 = vmax.f32 %v3116, 0.0
    %v3122 = vpack.c.bf16 %v3121, %v3121
    %v3123 = vld [vmem:[#allocation16] sm:$0xf]
    %v3124 = vld [vmem:[#allocation16 + $0x4] sm:$0xf]
    %v3125 = vld [vmem:[#allocation16 + $0x8] sm:$0xf]
    %v3126 = vld [vmem:[#allocation16 + $0xc] sm:$0xf]
    %v3127 = vld [vmem:[#allocation16 + $0x10] sm:$0xf]
    %v3128 = vld [vmem:[#allocation16 + $0x14] sm:$0xf]
    %v3129 = vld [vmem:[#allocation16 + $0x18] sm:$0xf]
    %v3130 = vld [vmem:[#allocation16 + $0x1c] sm:$0xf]
    %v3131 = vld [vmem:[#allocation16 + $0x20] sm:$0xf]
    %v3132 = vld [vmem:[#allocation16 + $0x24] sm:$0xf]
    %v3133 = vld [vmem:[#allocation16 + $0x28] sm:$0xf]
    %v3134 = vld [vmem:[#allocation16 + $0x2c] sm:$0xf]
    %v3135 = vld [vmem:[#allocation16 + $0x30] sm:$0xf]
    %v3136 = vld [vmem:[#allocation16 + $0x34] sm:$0xf]
    %v3137 = vld [vmem:[#allocation16 + $0x38] sm:$0xf]
    %v3138 = vld [vmem:[#allocation16 + $0x3c] sm:$0xf]
    %v3139 = vld [vmem:[#allocation18] sm:$0x1]
    %v3141 = vlaneseq
    %v3142 = vshrl.u32 %v3141, 7
    %v3143 = vsub.s32 0, %v3142
    %v3144 = vrot.slane %v3139, %v3143
    %v3162 = vunpack.c.l.b16 %v3123
    %v3163 = vunpack.c.l.b16 %v3124
    %v3164 = vunpack.c.l.b16 %v3125
    %v3165 = vunpack.c.l.b16 %v3126
    %v3166 = vunpack.c.l.b16 %v3127
    %v3167 = vunpack.c.l.b16 %v3128
    %v3168 = vunpack.c.l.b16 %v3129
    %v3169 = vunpack.c.l.b16 %v3130
    %v3170 = vunpack.c.l.b16 %v3131
    %v3171 = vunpack.c.l.b16 %v3132
    %v3172 = vunpack.c.l.b16 %v3133
    %v3173 = vunpack.c.l.b16 %v3134
    %v3174 = vunpack.c.l.b16 %v3135
    %v3175 = vunpack.c.l.b16 %v3136
    %v3176 = vunpack.c.l.b16 %v3137
    %v3177 = vunpack.c.l.b16 %v3138
    %v3178 = vpack.c.b16 %v3163, %v3162
    %v3179 = vpack.c.b16 %v3165, %v3164
    %v3180 = vpack.c.b16 %v3167, %v3166
    %v3181 = vpack.c.b16 %v3169, %v3168
    %v3182 = vpack.c.b16 %v3171, %v3170
    %v3183 = vpack.c.b16 %v3173, %v3172
    %v3184 = vpack.c.b16 %v3175, %v3174
    %v3185 = vpack.c.b16 %v3177, %v3176
    %3194 = vmatprep.subr.bf16.mxu0 0
    %3195 = vmatpush1.bf16.msra.mxu0 %v3178
    %3196 = vmatprep.subr.bf16.mxu0 0
    %3197 = vmatpush1.bf16.msra.mxu0 %v3179
    %3198 = vmatprep.subr.bf16.mxu0 0
    %3199 = vmatpush1.bf16.msra.mxu0 %v3180
    %3200 = vmatprep.subr.bf16.mxu0 0
    %3201 = vmatpush1.bf16.msra.mxu0 %v3181
    %3202 = vmatprep.subr.bf16.mxu0 0
    %3203 = vmatpush1.bf16.msra.mxu0 %v3182
    %3204 = vmatprep.subr.bf16.mxu0 0
    %3205 = vmatpush1.bf16.msra.mxu0 %v3183
    %3206 = vmatprep.subr.bf16.mxu0 0
    %3207 = vmatpush1.bf16.msra.mxu0 %v3184
    %3208 = vmatprep.subr.bf16.mxu0 0
    %3209 = vmatpush1.bf16.msra.mxu0 %v3185
    %3210 = vmatprep.subr.bf16.mxu0 0
    %3211 = vmatpush1.bf16.msra.mxu0 0
    %3212 = vmatprep.subr.bf16.mxu0 0
    %3213 = vmatpush1.bf16.msra.mxu0 0
    %3214 = vmatprep.subr.bf16.mxu0 0
    %3215 = vmatpush1.bf16.msra.mxu0 0
    %3216 = vmatprep.subr.bf16.mxu0 0
    %3217 = vmatpush1.bf16.msra.mxu0 0
    %3218 = vmatprep.subr.bf16.mxu0 0
    %3219 = vmatpush1.bf16.msra.mxu0 0
    %3220 = vmatprep.subr.bf16.mxu0 0
    %3221 = vmatpush1.bf16.msra.mxu0 0
    %3222 = vmatprep.subr.bf16.mxu0 0
    %3223 = vmatpush1.bf16.msra.mxu0 0
    %3224 = vmatprep.subr.bf16.mxu0 0
    %3225 = vmatpush1.bf16.msra.mxu0 0
    %3226 = vmatprep.mubr.bf16.mxu0 0
    %3227 = vmatmul.mubr.bf16.gmra.mrb[0].mxu0 %v3122
    %v3228 = vpop.f32.mrb[0].mxu0
    %v3229 = vadd.f32 %v3144, %v3228
    %v3230 = vpop.f32.mrb[0].mxu0
    %v3231 = vpop.f32.mrb[0].mxu0
    %v3232 = vpop.f32.mrb[0].mxu0
    %3233 = vdwg.mxu0
    %v3234 = vmax.f32 %v3229, 0.0
    %v3235 = vpack.c.bf16 %v3234, %v3234
    %v3236 = vld [vmem:[#allocation19] sm:$0xf]
    %v3237 = vld [vmem:[#allocation19 + $0x4] sm:$0xf]
    %v3238 = vld [vmem:[#allocation19 + $0x8] sm:$0xf]
    %v3239 = vld [vmem:[#allocation19 + $0xc] sm:$0xf]
    %v3240 = vld [vmem:[#allocation19 + $0x10] sm:$0xf]
    %v3241 = vld [vmem:[#allocation19 + $0x14] sm:$0xf]
    %v3242 = vld [vmem:[#allocation19 + $0x18] sm:$0xf]
    %v3243 = vld [vmem:[#allocation19 + $0x1c] sm:$0xf]
    %v3244 = vld [vmem:[#allocation19 + $0x20] sm:$0xf]
    %v3245 = vld [vmem:[#allocation19 + $0x24] sm:$0xf]
    %v3246 = vld [vmem:[#allocation19 + $0x28] sm:$0xf]
    %v3247 = vld [vmem:[#allocation19 + $0x2c] sm:$0xf]
    %v3248 = vld [vmem:[#allocation19 + $0x30] sm:$0xf]
    %v3249 = vld [vmem:[#allocation19 + $0x34] sm:$0xf]
    %v3250 = vld [vmem:[#allocation19 + $0x38] sm:$0xf]
    %v3251 = vld [vmem:[#allocation19 + $0x3c] sm:$0xf]
    %v3252 = vld [vmem:[#allocation21] sm:$0x1]
    %v3254 = vlaneseq
    %v3255 = vshrl.u32 %v3254, 7
    %v3256 = vsub.s32 0, %v3255
    %v3257 = vrot.slane %v3252, %v3256
    %v3275 = vunpack.c.l.b16 %v3236
    %v3276 = vunpack.c.l.b16 %v3237
    %v3277 = vunpack.c.l.b16 %v3238
    %v3278 = vunpack.c.l.b16 %v3239
    %v3279 = vunpack.c.l.b16 %v3240
    %v3280 = vunpack.c.l.b16 %v3241
    %v3281 = vunpack.c.l.b16 %v3242
    %v3282 = vunpack.c.l.b16 %v3243
    %v3283 = vunpack.c.l.b16 %v3244
    %v3284 = vunpack.c.l.b16 %v3245
    %v3285 = vunpack.c.l.b16 %v3246
    %v3286 = vunpack.c.l.b16 %v3247
    %v3287 = vunpack.c.l.b16 %v3248
    %v3288 = vunpack.c.l.b16 %v3249
    %v3289 = vunpack.c.l.b16 %v3250
    %v3290 = vunpack.c.l.b16 %v3251
    %v3291 = vpack.c.b16 %v3276, %v3275
    %v3292 = vpack.c.b16 %v3278, %v3277
    %v3293 = vpack.c.b16 %v3280, %v3279
    %v3294 = vpack.c.b16 %v3282, %v3281
    %v3295 = vpack.c.b16 %v3284, %v3283
    %v3296 = vpack.c.b16 %v3286, %v3285
    %v3297 = vpack.c.b16 %v3288, %v3287
    %v3298 = vpack.c.b16 %v3290, %v3289
    %3307 = vmatprep.subr.bf16.mxu0 0
    %3308 = vmatpush1.bf16.msra.mxu0 %v3291
    %3309 = vmatprep.subr.bf16.mxu0 0
    %3310 = vmatpush1.bf16.msra.mxu0 %v3292
    %3311 = vmatprep.subr.bf16.mxu0 0
    %3312 = vmatpush1.bf16.msra.mxu0 %v3293
    %3313 = vmatprep.subr.bf16.mxu0 0
    %3314 = vmatpush1.bf16.msra.mxu0 %v3294
    %3315 = vmatprep.subr.bf16.mxu0 0
    %3316 = vmatpush1.bf16.msra.mxu0 %v3295
    %3317 = vmatprep.subr.bf16.mxu0 0
    %3318 = vmatpush1.bf16.msra.mxu0 %v3296
    %3319 = vmatprep.subr.bf16.mxu0 0
    %3320 = vmatpush1.bf16.msra.mxu0 %v3297
    %3321 = vmatprep.subr.bf16.mxu0 0
    %3322 = vmatpush1.bf16.msra.mxu0 %v3298
    %3323 = vmatprep.subr.bf16.mxu0 0
    %3324 = vmatpush1.bf16.msra.mxu0 0
    %3325 = vmatprep.subr.bf16.mxu0 0
    %3326 = vmatpush1.bf16.msra.mxu0 0
    %3327 = vmatprep.subr.bf16.mxu0 0
    %3328 = vmatpush1.bf16.msra.mxu0 0
    %3329 = vmatprep.subr.bf16.mxu0 0
    %3330 = vmatpush1.bf16.msra.mxu0 0
    %3331 = vmatprep.subr.bf16.mxu0 0
    %3332 = vmatpush1.bf16.msra.mxu0 0
    %3333 = vmatprep.subr.bf16.mxu0 0
    %3334 = vmatpush1.bf16.msra.mxu0 0
    %3335 = vmatprep.subr.bf16.mxu0 0
    %3336 = vmatpush1.bf16.msra.mxu0 0
    %3337 = vmatprep.subr.bf16.mxu0 0
    %3338 = vmatpush1.bf16.msra.mxu0 0
    %3339 = vmatprep.mubr.bf16.mxu0 0
    %3340 = vmatmul.mubr.bf16.gmra.mrb[0].mxu0 %v3235
    %v3341 = vpop.f32.mrb[0].mxu0
    %v3342 = vadd.f32 %v3257, %v3341
    %v3343 = vpop.f32.mrb[0].mxu0
    %v3344 = vpop.f32.mrb[0].mxu0
    %v3345 = vpop.f32.mrb[0].mxu0
    %3346 = vdwg.mxu0
    %3347 = vst [vmem:[#allocation22] sm:$0xff] %v3342
    // Predicated region
    $region90: #{tpu_custom_call.1} parent=1 // pred_check
      _
    $region91: #{tpu_custom_call.1} parent=1 // pred_check_branch
      %3349 = sbr.rel (0) target = $region93
    $region92: #{tpu_custom_call.1} parent=1 // pred_region
      %s3351 = ssub.s32 128, 128
      %3352 = vsyncadd [#allocation6], %s3351
      %s3354 = sshll.u32 [#allocation22], 4
      %s3355 = int_to_ptr.vmem [resolvable:$true] %s3354
      %3357 = dma.vmem_to_hbm [thread:$0]  %s3355, 128, %s11, [#allocation6]
    $region93: #{tpu_custom_call.1} parent=1 // pred_fallthru
      _
    // Predicated region
    $region94: #{tpu_custom_call.1} parent=1 // pred_check
      _
    $region95: #{tpu_custom_call.1} parent=1 // pred_check_branch
      %3359 = sbr.rel (0) target = $region97
    $region96: #{tpu_custom_call.1} parent=1 // pred_region
      %s3361 = ssub.s32 256, 256
      %3362 = vsyncadd [#allocation24], %s3361
      %s3363 = sshll.u32 [#allocation23], 4
      %s3364 = int_to_ptr.vmem [resolvable:$true] %s3363
      %3369 = dma.vmem_to_hbm [thread:$0]  %s3364, 256, %s12, [#allocation24], 128, 128, 8
    $region97: #{tpu_custom_call.1} parent=1 // pred_fallthru
      _
    // Predicated region
    $region98: #{tpu_custom_call.1} parent=1 // pred_check
      _
    $region99: #{tpu_custom_call.1} parent=1 // pred_check_branch
      %3371 = sbr.rel (0) target = $region101
    $region100: #{tpu_custom_call.1} parent=1 // pred_region
      %s3373 = ssub.s32 256, 256
      %3374 = vsyncadd [#allocation24], %s3373
      %s3375 = sshll.u32 [#allocation25], 4
      %s3376 = int_to_ptr.vmem [resolvable:$true] %s3375
      %3381 = dma.vmem_to_hbm [thread:$0]  %s3376, 256, %s13, [#allocation24], 128, 128, 8
    $region101: #{tpu_custom_call.1} parent=1 // pred_fallthru
      _
    // Predicated region
    $region102: #{tpu_custom_call.1} parent=1 // pred_check
      _
    $region103: #{tpu_custom_call.1} parent=1 // pred_check_branch
      %3383 = sbr.rel (0) target = $region105
    $region104: #{tpu_custom_call.1} parent=1 // pred_region
      %3384 = dma.done [#allocation6], 128
    $region105: #{tpu_custom_call.1} parent=1 // pred_fallthru
      _
    // Predicated region
    $region106: #{tpu_custom_call.1} parent=1 // pred_check
      _
    $region107: #{tpu_custom_call.1} parent=1 // pred_check_branch
      %3386 = sbr.rel (0) target = $region109
    $region108: #{tpu_custom_call.1} parent=1 // pred_region
      %3387 = dma.done [#allocation24], 256
    $region109: #{tpu_custom_call.1} parent=1 // pred_fallthru
      _
    // Predicated region
    $region110: #{tpu_custom_call.1} parent=1 // pred_check
      _
    $region111: #{tpu_custom_call.1} parent=1 // pred_check_branch
      %3389 = sbr.rel (0) target = $region113
    $region112: #{tpu_custom_call.1} parent=1 // pred_region
      %3390 = dma.done [#allocation24], 256
    $region113: #{tpu_custom_call.1} parent=1 // pred_fallthru
      _
    %3391 = vsyncpa [#allocation5], 1
    %3392 = vsyncpa [#allocation8], 1
    %3393 = vsyncpa [#allocation11], 1
    %3394 = vsyncpa [#allocation14], 1
    %3395 = vsyncpa [#allocation17], 1
    %3396 = vsyncpa [#allocation20], 1
    %3397 = vsyncpa [#allocation6], 1
    %3398 = vsyncpa [#allocation24], 1

</llo_original>
